<compile_context>
chip_gen: v6e
topology: v6e:2x2x1
jax: 0.10.0
libtpu: 0.0.40
codegen_flags: <defaults>
</compile_context>

<pallas_src>
import functools

import jax
import jax.numpy as jnp
from jax import lax
from jax.experimental import pallas as pl
from jax.experimental.pallas import tpu as pltpu

EPS = 1e-5
C_PAD = 128                            # lane-dense channel padding -> unmasked (TM, 128) stores
DEFAULT_TM = 1024                      # default row tile (sweepable 1024-2048); VMEM-capped below
TILE_VMEM_BUDGET = 24 * 1024 * 1024    # budget for double-buffered tiles (safe on v7x 64 MiB/TC)
VMEM_LIMIT_BYTES = 48 * 1024 * 1024    # scoped VMEM limit (<= ~48 MiB so v7x never overcommits)
STASH_K_THRESHOLD = 2 * C_PAD          # K >= threshold -> stash y1 instead of re-reading patches


def _cdiv(a, b):
    return -(-a // b)


def _round_up(x, m):
    return ((x + m - 1) // m) * m


# --------------------------------------------------------------------------- kernels
def _stats1_kernel(patches_ref, w1_ref, sum_ref, sq_ref):
    """Per-split (8, C_PAD) partial sum / sum^2 of y1 = patches @ W1."""
    i = pl.program_id(1)

    @pl.when(i == 0)
    def _():
        sum_ref[...] = jnp.zeros_like(sum_ref)
        sq_ref[...] = jnp.zeros_like(sq_ref)

    y1 = jnp.dot(patches_ref[...], w1_ref[...], preferred_element_type=jnp.float32)
    # Zero-padded patch rows give y1 == 0 exactly (conv bias dropped), so they add nothing
    # to either moment.  (If biases are ever reintroduced, mask padded rows here too.)
    sum_ref[...] += y1.reshape(-1, 8, C_PAD).sum(axis=0)
    sq_ref[...] += (y1 * y1).reshape(-1, 8, C_PAD).sum(axis=0)


def _stats1_stash_kernel(patches_ref, w1_ref, y1_ref, sum_ref, sq_ref):
    """Same as _stats1_kernel but also stashes y1 (compute dtype) for passes 2-3."""
    i = pl.program_id(1)

    @pl.when(i == 0)
    def _():
        sum_ref[...] = jnp.zeros_like(sum_ref)
        sq_ref[...] = jnp.zeros_like(sq_ref)

    y1 = jnp.dot(patches_ref[...], w1_ref[...], preferred_element_type=jnp.float32)
    y1_ref[...] = y1.astype(y1_ref.dtype)
    sum_ref[...] += y1.reshape(-1, 8, C_PAD).sum(axis=0)
    sq_ref[...] += (y1 * y1).reshape(-1, 8, C_PAD).sum(axis=0)


def _relu_bn1(y1, bn):
    """relu(y1 * scale1 + shift1) with BN rows packed as bn[0]=scale1, bn[1]=shift1."""
    return jnp.maximum(y1 * bn[0:1, :] + bn[1:2, :], 0.0)


def _stats2_recompute_kernel(patches_ref, w1_ref, bn1_ref, w2_ref, sum_ref, sq_ref):
    """Per-split partial moments of y2 = relu(bn1(patches @ W1)) @ W2 (y1 recomputed)."""
    i = pl.program_id(1)

    @pl.when(i == 0)
    def _():
        sum_ref[...] = jnp.zeros_like(sum_ref)
        sq_ref[...] = jnp.zeros_like(sq_ref)

    y1 = jnp.dot(patches_ref[...], w1_ref[...], preferred_element_type=jnp.float32)
    y1r = _relu_bn1(y1, bn1_ref[...])
    y2 = jnp.dot(y1r.astype(w2_ref.dtype), w2_ref[...], preferred_element_type=jnp.float32)
    # No padded-row mask here: each of the (m_pad - M) padded rows contributes exactly
    # relu(shift1) @ W2, which the wrapper subtracts analytically from the moments.
    sum_ref[...] += y2.reshape(-1, 8, C_PAD).sum(axis=0)
    sq_ref[...] += (y2 * y2).reshape(-1, 8, C_PAD).sum(axis=0)


def _stats2_stash_kernel(y1_ref, bn1_ref, w2_ref, sum_ref, sq_ref):
    """Per-split partial moments of y2 using the stashed y1 (large-K path)."""
    i = pl.program_id(1)

    @pl.when(i == 0)
    def _():
        sum_ref[...] = jnp.zeros_like(sum_ref)
        sq_ref[...] = jnp.zeros_like(sq_ref)

    y1 = y1_ref[...].astype(jnp.float32)
    y1r = _relu_bn1(y1, bn1_ref[...])
    y2 = jnp.dot(y1r.astype(w2_ref.dtype), w2_ref[...], preferred_element_type=jnp.float32)
    sum_ref[...] += y2.reshape(-1, 8, C_PAD).sum(axis=0)
    sq_ref[...] += (y2 * y2).reshape(-1, 8, C_PAD).sum(axis=0)


def _final_recompute_kernel(patches_ref, w1_ref, bn_ref, w2_ref, out_ref):
    """out = relu(bn1(conv1)) * sigmoid(bn2(conv1x1(relu(bn1(conv1))))), y1 recomputed."""
    y1 = jnp.dot(patches_ref[...], w1_ref[...], preferred_element_type=jnp.float32)
    y1r = _relu_bn1(y1, bn_ref[...])
    y2 = jnp.dot(y1r.astype(w2_ref.dtype), w2_ref[...], preferred_element_type=jnp.float32)
    attn = jax.nn.sigmoid(y2 * bn_ref[2:3, :] + bn_ref[3:4, :])
    out_ref[...] = (y1r * attn).astype(out_ref.dtype)


def _final_stash_kernel(y1_ref, bn_ref, w2_ref, out_ref):
    """Final gate using the stashed y1 (large-K path)."""
    y1 = y1_ref[...].astype(jnp.float32)
    y1r = _relu_bn1(y1, bn_ref[...])
    y2 = jnp.dot(y1r.astype(w2_ref.dtype), w2_ref[...], preferred_element_type=jnp.float32)
    attn = jax.nn.sigmoid(y2 * bn_ref[2:3, :] + bn_ref[3:4, :])
    out_ref[...] = (y1r * attn).astype(out_ref.dtype)


# --------------------------------------------------------------------------- wrapper helpers
def _im2col_nhwc(x, kh, kw, pad, dtype):
    """x: (N, Cin, H, W) -> (N*Ho*Wo, kh*kw*Cin) patches in `dtype`, K ordered (i, j, cin)."""
    N, Cin, H, W = x.shape
    xh = jnp.transpose(x, (0, 2, 3, 1)).astype(dtype)       # cast BEFORE inflating: halves traffic
    xp = jnp.pad(xh, ((0, 0), (pad, pad), (pad, pad), (0, 0)))
    Ho, Wo = H + 2 * pad - kh + 1, W + 2 * pad - kw + 1
    cols = [xp[:, i:i + Ho, j:j + Wo, :] for i in range(kh) for j in range(kw)]
    patches = jnp.concatenate(cols, axis=-1)                 # (N, Ho, Wo, kh*kw*Cin)
    # TODO(synk): fuse this im2col into the kernels via halo DMA of NHWC row tiles so the
    # kh*kw-inflated patch matrix is never materialized / re-read from HBM.
    return patches.reshape(N * Ho * Wo, kh * kw * Cin), Ho, Wo


def _pick_tm(m_total, k_dim, compute_dtype, requested):
    """Largest multiple-of-8 row tile keeping double-buffered tiles inside TILE_VMEM_BUDGET."""
    dsz = jnp.dtype(compute_dtype).itemsize
    # 2x patch tile (in) + 2x (y1/out) tile + ~4 f32 (TM, C_PAD) in-kernel temporaries.
    bytes_per_row = 2 * k_dim * dsz + 4 * C_PAD * dsz + 16 * C_PAD
    fixed = (k_dim * C_PAD + C_PAD * C_PAD + 16 * C_PAD) * dsz
    cap = max(8, (TILE_VMEM_BUDGET - fixed) // bytes_per_row)
    tm = min(requested, cap, _round_up(m_total, 8))
    return max(8, (tm // 8) * 8)


# --------------------------------------------------------------------------- forward
@functools.partial(jax.jit, static_argnames=("kernel_size", "padding", "compute_dtype",
                                              "tm", "out_layout"))
def conv2d_attn(x, params, *, kernel_size, padding, compute_dtype=jnp.bfloat16,
                tm=None, out_layout="NCHW"):
    """PyTorch-equivalent Conv2dAttn forward.  x: (N, Cin, H, W) -> (N, Cout, Ho, Wo)."""
    assert out_layout in ("NCHW", "NHWC")
    N, Cin, H, W = x.shape
    kh = kw = kernel_size
    w1, b1, g1, be1, w2, b2, g2, be2 = params
    del b1, b2   # conv biases cancel exactly through training-mode BatchNorm
    Cout = w1.shape[0]
    assert Cout <= C_PAD

    patches, Ho, Wo = _im2col_nhwc(x, kh, kw, padding, compute_dtype)
    M, K = patches.shape

    # ---- static tiling config: shape- and VMEM-aware, v7x-safe -------------------------
    tm = _pick_tm(M, K, compute_dtype, DEFAULT_TM if tm is None else tm)
    m_tiles = _cdiv(M, tm)
    n_splits = 2 if m_tiles >= 2 else 1          # v7x: one split per TensorCore
    tiles_per_split = _cdiv(m_tiles, n_splits)
    m_pad = n_splits * tiles_per_split * tm
    use_stash = K >= STASH_K_THRESHOLD           # large K: stash y1, don't re-read patches

    patches = jnp.pad(patches, ((0, m_pad - M), (0, 0)))

    # ---- channel-padded (lane-dense) weights / BN parameters ---------------------------
    w1_mat = jnp.zeros((K, C_PAD), compute_dtype).at[:, :Cout].set(
        jnp.transpose(w1, (2, 3, 1, 0)).reshape(K, Cout).astype(compute_dtype))
    w2_mat = jnp.zeros((C_PAD, C_PAD), compute_dtype).at[:Cout, :Cout].set(
        w2.reshape(Cout, Cout).T.astype(compute_dtype))
    pad_row = lambda v: jnp.zeros((1, C_PAD), jnp.float32).at[0, :Cout].set(
        v.astype(jnp.float32))
    g1p, be1p, g2p, be2p = pad_row(g1), pad_row(be1), pad_row(g2), pad_row(be2)

    def bn_affine(sum_row, sq_row, gamma, beta):
        # TODO(synk): E[x^2]-mean^2 in f32 is cancellation-prone when |mean| >> std at very
        # large M; switch to shifted / compensated accumulation if BN stats ever drift.
        mean = sum_row / M
        var = jnp.maximum(sq_row / M - mean * mean, 0.0)   # biased (training-mode) variance
        scale = gamma * lax.rsqrt(var + EPS)
        return scale, beta - mean * scale

    # ---- grid / block specs -------------------------------------------------------------
    grid_stats = (n_splits, tiles_per_split)
    grid_final = (n_splits * tiles_per_split,)

    patch_stats_spec = pl.BlockSpec((tm, K), lambda c, i: (c * tiles_per_split + i, 0))
    y1_stats_spec = pl.BlockSpec((tm, C_PAD), lambda c, i: (c * tiles_per_split + i, 0))
    w1_stats_spec = pl.BlockSpec((K, C_PAD), lambda c, i: (0, 0))
    w2_stats_spec = pl.BlockSpec((C_PAD, C_PAD), lambda c, i: (0, 0))
    bn1_stats_spec = pl.BlockSpec((2, C_PAD), lambda c, i: (0, 0))
    stats_out_spec = pl.BlockSpec((8, C_PAD), lambda c, i: (c, 0))
    stats_out_shape = jax.ShapeDtypeStruct((n_splits * 8, C_PAD), jnp.float32)

    stats_params = pltpu.CompilerParams(
        dimension_semantics=("parallel", "arbitrary"), vmem_limit_bytes=VMEM_LIMIT_BYTES)
    final_params = pltpu.CompilerParams(
        dimension_semantics=("parallel",), vmem_limit_bytes=VMEM_LIMIT_BYTES)

    # ---- pass 1: batch statistics of the 3x3 conv (optionally stashing y1) --------------
    y1_stash = None
    if use_stash:
        y1_stash, sum1_raw, sq1_raw = pl.pallas_call(
            _stats1_stash_kernel, grid=grid_stats,
            in_specs=[patch_stats_spec, w1_stats_spec],
            out_specs=(y1_stats_spec, stats_out_spec, stats_out_spec),
            out_shape=(jax.ShapeDtypeStruct((m_pad, C_PAD), compute_dtype),
                       stats_out_shape, stats_out_shape),
            compiler_params=stats_params,
        )(patches, w1_mat)
    else:
        sum1_raw, sq1_raw = pl.pallas_call(
            _stats1_kernel, grid=grid_stats,
            in_specs=[patch_stats_spec, w1_stats_spec],
            out_specs=(stats_out_spec, stats_out_spec),
            out_shape=(stats_out_shape, stats_out_shape),
            compiler_params=stats_params,
        )(patches, w1_mat)
    scale1, shift1 = bn_affine(sum1_raw.sum(0, keepdims=True),
                               sq1_raw.sum(0, keepdims=True), g1p, be1p)
    bn1 = jnp.concatenate([scale1, shift1], axis=0)          # (2, C_PAD)

    # ---- pass 2: batch statistics of the 1x1 attention conv -----------------------------
    if use_stash:
        sum2_raw, sq2_raw = pl.pallas_call(
            _stats2_stash_kernel, grid=grid_stats,
            in_specs=[y1_stats_spec, bn1_stats_spec, w2_stats_spec],
            out_specs=(stats_out_spec, stats_out_spec),
            out_shape=(stats_out_shape, stats_out_shape),
            compiler_params=stats_params,
        )(y1_stash, bn1, w2_mat)
    else:
        sum2_raw, sq2_raw = pl.pallas_call(
            _stats2_recompute_kernel, grid=grid_stats,
            in_specs=[patch_stats_spec, w1_stats_spec, bn1_stats_spec, w2_stats_spec],
            out_specs=(stats_out_spec, stats_out_spec),
            out_shape=(stats_out_shape, stats_out_shape),
            compiler_params=stats_params,
        )(patches, w1_mat, bn1, w2_mat)
    sum2 = sum2_raw.sum(0, keepdims=True)
    sq2 = sq2_raw.sum(0, keepdims=True)
    n_pad_rows = m_pad - M
    if n_pad_rows:
        # Padded rows (zero patches / zero stashed y1) each contribute relu(shift1) @ W2 to
        # the pass-2 moments; subtract analytically instead of masking every tile.
        y2_pad = jnp.dot(jnp.maximum(shift1, 0.0).astype(compute_dtype), w2_mat,
                         preferred_element_type=jnp.float32)
        sum2 = sum2 - n_pad_rows * y2_pad
        sq2 = sq2 - n_pad_rows * (y2_pad * y2_pad)
    scale2, shift2 = bn_affine(sum2, sq2, g2p, be2p)
    bn_all = jnp.concatenate([scale1, shift1, scale2, shift2], axis=0)   # (4, C_PAD)

    # ---- pass 3: apply BN/ReLU/1x1/BN/sigmoid gate, tiled & megacore-parallel -----------
    dsz = jnp.dtype(compute_dtype).itemsize
    k_read = C_PAD if use_stash else K
    cost = pl.CostEstimate(
        flops=2 * m_pad * C_PAD * ((0 if use_stash else K) + C_PAD),
        transcendentals=m_pad * C_PAD,
        bytes_accessed=(m_pad * k_read * dsz + m_pad * C_PAD * dsz
                        + (K + C_PAD) * C_PAD * dsz + 4 * C_PAD * 4))
    out_spec = pl.BlockSpec((tm, C_PAD), lambda i: (i, 0))
    bn_final_spec = pl.BlockSpec((4, C_PAD), lambda i: (0, 0))
    out_shape = jax.ShapeDtypeStruct((m_pad, C_PAD), compute_dtype)   # bf16 writeback by default
    if use_stash:
        out_flat = pl.pallas_call(
            _final_stash_kernel, grid=grid_final,
            in_specs=[pl.BlockSpec((tm, C_PAD), lambda i: (i, 0)),
                      bn_final_spec,
                      pl.BlockSpec((C_PAD, C_PAD), lambda i: (0, 0))],
            out_specs=out_spec, out_shape=out_shape,
            compiler_params=final_params, cost_estimate=cost,
        )(y1_stash, bn_all, w2_mat)
    else:
        out_flat = pl.pallas_call(
            _final_recompute_kernel, grid=grid_final,
            in_specs=[pl.BlockSpec((tm, K), lambda i: (i, 0)),
                      pl.BlockSpec((K, C_PAD), lambda i: (0, 0)),
                      bn_final_spec,
                      pl.BlockSpec((C_PAD, C_PAD), lambda i: (0, 0))],
            out_specs=out_spec, out_shape=out_shape,
            compiler_params=final_params, cost_estimate=cost,
        )(patches, w1_mat, bn_all, w2_mat)

    out_nhwc = out_flat[:M, :Cout].reshape(N, Ho, Wo, Cout)
    if out_layout == "NHWC":                      # consumer-permitting: skip the NCHW transpose
        return out_nhwc.astype(jnp.float32)
    return out_nhwc.transpose(0, 3, 1, 2).astype(jnp.float32)


# --------------------------------------------------------------------------- reference
def _reference_forward(x, params, kernel_size, padding):
    """Pure-JAX reference mirroring the PyTorch module (training-mode BN, with biases)."""
    w1, b1, g1, be1, w2, b2, g2, be2 = params

    def bn(y, g, b):
        m = jnp.mean(y, axis=(0, 2, 3), keepdims=True)
        v = jnp.mean((y - m) ** 2, axis=(0, 2, 3), keepdims=True)
        return (y - m) * lax.rsqrt(v + EPS) * g[None, :, None, None] + b[None, :, None, None]

    y1 = lax.conv_general_dilated(x, w1, (1, 1), [(padding, padding)] * 2,
                                  dimension_numbers=("NCHW", "OIHW", "NCHW"))
    y1 = y1 + b1[None, :, None, None]
    y1 = jnp.maximum(bn(y1, g1, be1), 0.0)
    y2 = lax.conv_general_dilated(y1, w2, (1, 1), [(0, 0)] * 2,
                                  dimension_numbers=("NCHW", "OIHW", "NCHW"))
    y2 = y2 + b2[None, :, None, None]
    attn = jax.nn.sigmoid(bn(y2, g2, be2))
    return y1 * attn


if __name__ == "__main__":
    def make_params(key, cin, cout, k):
        ks = jax.random.split(key, 8)
        w1 = 0.1 * jax.random.normal(ks[0], (cout, cin, k, k), jnp.float32)
        b1 = 0.1 * jax.random.normal(ks[1], (cout,), jnp.float32)
        g1 = 1.0 + 0.1 * jax.random.normal(ks[2], (cout,), jnp.float32)
        be1 = 0.1 * jax.random.normal(ks[3], (cout,), jnp.float32)
        w2 = 0.1 * jax.random.normal(ks[4], (cout, cout, 1, 1), jnp.float32)
        b2 = 0.1 * jax.random.normal(ks[5], (cout,), jnp.float32)
        g2 = 1.0 + 0.1 * jax.random.normal(ks[6], (cout,), jnp.float32)
        be2 = 0.1 * jax.random.normal(ks[7], (cout,), jnp.float32)
        return (w1, b1, g1, be1, w2, b2, g2, be2)

    key = jax.random.PRNGKey(0)
    k1, k2, k3, k4 = jax.random.split(key, 4)

    # --- case 1: module-sized example (recompute path, auto TM, no row padding) ----------
    N, Cin, Cout, H, W = 2, 4, 8, 16, 16
    params = make_params(k1, Cin, Cout, 3)
    x = jax.random.normal(k2, (N, Cin, H, W), jnp.float32)
    ref = _reference_forward(x, params, 3, 1)

    out_f32 = jax.block_until_ready(
        conv2d_attn(x, params, kernel_size=3, padding=1, compute_dtype=jnp.float32))
    assert out_f32.shape == (N, Cout, H, W)
    assert jnp.allclose(out_f32, ref, atol=2e-4, rtol=2e-4), "f32 recompute path mismatch"

    out_bf16 = jax.block_until_ready(
        conv2d_attn(x, params, kernel_size=3, padding=1, compute_dtype=jnp.bfloat16))
    assert out_bf16.shape == (N, Cout, H, W)
    assert float(jnp.max(jnp.abs(out_bf16 - ref))) < 0.15, "bf16 recompute path diverged"

    # --- case 2: wide-Cin example (stash path, 2-way split, padded-row correction) -------
    N2, Cin2, Cout2, H2, W2 = 2, 32, 16, 12, 12
    params2 = make_params(k3, Cin2, Cout2, 3)
    x2 = jax.random.normal(k4, (N2, Cin2, H2, W2), jnp.float32)
    ref2 = _reference_forward(x2, params2, 3, 1)
    out2 = jax.block_until_ready(
        conv2d_attn(x2, params2, kernel_size=3, padding=1,
                    compute_dtype=jnp.float32, tm=128))
    assert out2.shape == (N2, Cout2, H2, W2)
    assert jnp.allclose(out2, ref2, atol=2e-4, rtol=2e-4), "f32 stash path mismatch"

    print("KERNEL_OK")
</pallas_src>

<mosaic_0001>
module attributes {stable_mosaic.version = 11 : i64} {
  func.func @_stats1_kernel(%arg0: i32, %arg1: i32, %arg2: memref<512x36xf32, #tpu.memory_space<vmem>>, %arg3: memref<36x128xf32, #tpu.memory_space<vmem>>, %arg4: memref<8x128xf32, #tpu.memory_space<vmem>>, %arg5: memref<8x128xf32, #tpu.memory_space<vmem>>) attributes {dimension_semantics = [#tpu.dimension_semantics<parallel>, #tpu.dimension_semantics<arbitrary>], iteration_bounds = array<i64: 1, 1>, scalar_prefetch = 0 : i64, scratch_operands = 0 : i64, tpu.core_type = #tpu.core_type<tc>, window_params = [{transform_indices = @transform_0, window_bounds = array<i64: 512, 36>}, {pipeline_mode = #tpu.pipeline_mode<synchronous>, transform_indices = @transform_1, window_bounds = array<i64: 36, 128>}, {transform_indices = @transform_2, window_bounds = array<i64: 8, 128>}, {transform_indices = @transform_3, window_bounds = array<i64: 8, 128>}]} {
    %c0_i32 = arith.constant 0 : i32
    %0 = arith.cmpi eq, %arg1, %c0_i32 : i32
    %1 = arith.extui %0 : i1 to i32
    %c0_i32_0 = arith.constant 0 : i32
    %2 = arith.cmpi ne, %1, %c0_i32_0 : i32
    scf.if %2 {
      %cst_14 = arith.constant 0.000000e+00 : f32
      %17 = vector.broadcast %cst_14 : f32 to vector<8x128xf32>
      %c0_15 = arith.constant 0 : index
      %c0_16 = arith.constant 0 : index
      %18 = vector.load %arg4[%c0_15, %c0_16] : memref<8x128xf32, #tpu.memory_space<vmem>>, vector<8x128xf32>
      tpu.vector_store %arg4[%c0_15, %c0_16], %17 {strides = array<i32>} : memref<8x128xf32, #tpu.memory_space<vmem>>, vector<8x128xf32>,
      %cst_17 = arith.constant 0.000000e+00 : f32
      %19 = vector.broadcast %cst_17 : f32 to vector<8x128xf32>
      %c0_18 = arith.constant 0 : index
      %c0_19 = arith.constant 0 : index
      %20 = vector.load %arg5[%c0_18, %c0_19] : memref<8x128xf32, #tpu.memory_space<vmem>>, vector<8x128xf32>
      tpu.vector_store %arg5[%c0_18, %c0_19], %19 {strides = array<i32>} : memref<8x128xf32, #tpu.memory_space<vmem>>, vector<8x128xf32>,
    } else {
    }
    %c0 = arith.constant 0 : index
    %c0_1 = arith.constant 0 : index
    %3 = vector.load %arg2[%c0, %c0_1] : memref<512x36xf32, #tpu.memory_space<vmem>>, vector<512x36xf32>
    %c0_2 = arith.constant 0 : index
    %c0_3 = arith.constant 0 : index
    %4 = vector.load %arg3[%c0_2, %c0_3] : memref<36x128xf32, #tpu.memory_space<vmem>>, vector<36x128xf32>
    %cst = arith.constant dense<0.000000e+00> : vector<512x128xf32>
    %5 = tpu.matmul %3, %4, %cst {dimension_numbers = #tpu.dot_dimension_numbers<[1], [0], [0], [1], [0, 0, 1, 1], [], []>} : vector<512x36xf32>, vector<36x128xf32>, vector<512x128xf32> -> vector<512x128xf32>
    %c0_4 = arith.constant 0 : index
    %c0_5 = arith.constant 0 : index
    %6 = vector.load %arg4[%c0_4, %c0_5] : memref<8x128xf32, #tpu.memory_space<vmem>>, vector<8x128xf32>
    %7 = vector.shape_cast %5 : vector<512x128xf32> to vector<64x8x128xf32>
    %cst_6 = arith.constant dense<0.000000e+00> : vector<8x128xf32>
    %8 = vector.multi_reduction <add>, %7, %cst_6 [0] : vector<64x8x128xf32> to vector<8x128xf32>
    %9 = arith.addf %6, %8 : vector<8x128xf32>
    %c0_7 = arith.constant 0 : index
    %c0_8 = arith.constant 0 : index
    %10 = vector.load %arg4[%c0_7, %c0_8] : memref<8x128xf32, #tpu.memory_space<vmem>>, vector<8x128xf32>
    tpu.vector_store %arg4[%c0_7, %c0_8], %9 {strides = array<i32>} : memref<8x128xf32, #tpu.memory_space<vmem>>, vector<8x128xf32>,
    %c0_9 = arith.constant 0 : index
    %c0_10 = arith.constant 0 : index
    %11 = vector.load %arg5[%c0_9, %c0_10] : memref<8x128xf32, #tpu.memory_space<vmem>>, vector<8x128xf32>
    %12 = arith.mulf %5, %5 : vector<512x128xf32>
    %13 = vector.shape_cast %12 : vector<512x128xf32> to vector<64x8x128xf32>
    %cst_11 = arith.constant dense<0.000000e+00> : vector<8x128xf32>
    %14 = vector.multi_reduction <add>, %13, %cst_11 [0] : vector<64x8x128xf32> to vector<8x128xf32>
    %15 = arith.addf %11, %14 : vector<8x128xf32>
    %c0_12 = arith.constant 0 : index
    %c0_13 = arith.constant 0 : index
    %16 = vector.load %arg5[%c0_12, %c0_13] : memref<8x128xf32, #tpu.memory_space<vmem>>, vector<8x128xf32>
    tpu.vector_store %arg5[%c0_12, %c0_13], %15 {strides = array<i32>} : memref<8x128xf32, #tpu.memory_space<vmem>>, vector<8x128xf32>,
    return
  }
  func.func @transform_0(%arg0: i32, %arg1: i32) -> (i32, i32) {
    %c1_i32 = arith.constant 1 : i32
    %0 = arith.muli %arg0, %c1_i32 : i32
    %1 = arith.addi %0, %arg1 : i32
    %c0_i32 = arith.constant 0 : i32
    %c0_i32_0 = arith.constant 0 : i32
    return %1, %c0_i32 : i32, i32
  }
  func.func @transform_1(%arg0: i32, %arg1: i32) -> (i32, i32) {
    %c0_i32 = arith.constant 0 : i32
    %c0_i32_0 = arith.constant 0 : i32
    %c0_i32_1 = arith.constant 0 : i32
    return %c0_i32, %c0_i32_0 : i32, i32
  }
  func.func @transform_2(%arg0: i32, %arg1: i32) -> (i32, i32) {
    %c0_i32 = arith.constant 0 : i32
    %c0_i32_0 = arith.constant 0 : i32
    return %arg0, %c0_i32 : i32, i32
  }
  func.func @transform_3(%arg0: i32, %arg1: i32) -> (i32, i32) {
    %c0_i32 = arith.constant 0 : i32
    %c0_i32_0 = arith.constant 0 : i32
    return %arg0, %c0_i32 : i32, i32
  }
}

module attributes {stable_mosaic.version = 11 : i64} {
  func.func @_stats2_recompute_kernel(%arg0: i32, %arg1: i32, %arg2: memref<512x36xf32, #tpu.memory_space<vmem>>, %arg3: memref<36x128xf32, #tpu.memory_space<vmem>>, %arg4: memref<2x128xf32, #tpu.memory_space<vmem>>, %arg5: memref<128x128xf32, #tpu.memory_space<vmem>>, %arg6: memref<8x128xf32, #tpu.memory_space<vmem>>, %arg7: memref<8x128xf32, #tpu.memory_space<vmem>>) attributes {dimension_semantics = [#tpu.dimension_semantics<parallel>, #tpu.dimension_semantics<arbitrary>], iteration_bounds = array<i64: 1, 1>, scalar_prefetch = 0 : i64, scratch_operands = 0 : i64, tpu.core_type = #tpu.core_type<tc>, window_params = [{transform_indices = @transform_0, window_bounds = array<i64: 512, 36>}, {pipeline_mode = #tpu.pipeline_mode<synchronous>, transform_indices = @transform_1, window_bounds = array<i64: 36, 128>}, {pipeline_mode = #tpu.pipeline_mode<synchronous>, transform_indices = @transform_2, window_bounds = array<i64: 2, 128>}, {pipeline_mode = #tpu.pipeline_mode<synchronous>, transform_indices = @transform_3, window_bounds = array<i64: 128, 128>}, {transform_indices = @transform_4, window_bounds = array<i64: 8, 128>}, {transform_indices = @transform_5, window_bounds = array<i64: 8, 128>}]} {
    %c0_i32 = arith.constant 0 : i32
    %0 = arith.cmpi eq, %arg1, %c0_i32 : i32
    %1 = arith.extui %0 : i1 to i32
    %c0_i32_0 = arith.constant 0 : i32
    %2 = arith.cmpi ne, %1, %c0_i32_0 : i32
    scf.if %2 {
      %cst_20 = arith.constant 0.000000e+00 : f32
      %28 = vector.broadcast %cst_20 : f32 to vector<8x128xf32>
      %c0_21 = arith.constant 0 : index
      %c0_22 = arith.constant 0 : index
      %29 = vector.load %arg6[%c0_21, %c0_22] : memref<8x128xf32, #tpu.memory_space<vmem>>, vector<8x128xf32>
      tpu.vector_store %arg6[%c0_21, %c0_22], %28 {strides = array<i32>} : memref<8x128xf32, #tpu.memory_space<vmem>>, vector<8x128xf32>,
      %cst_23 = arith.constant 0.000000e+00 : f32
      %30 = vector.broadcast %cst_23 : f32 to vector<8x128xf32>
      %c0_24 = arith.constant 0 : index
      %c0_25 = arith.constant 0 : index
      %31 = vector.load %arg7[%c0_24, %c0_25] : memref<8x128xf32, #tpu.memory_space<vmem>>, vector<8x128xf32>
      tpu.vector_store %arg7[%c0_24, %c0_25], %30 {strides = array<i32>} : memref<8x128xf32, #tpu.memory_space<vmem>>, vector<8x128xf32>,
    } else {
    }
    %c0 = arith.constant 0 : index
    %c0_1 = arith.constant 0 : index
    %3 = vector.load %arg2[%c0, %c0_1] : memref<512x36xf32, #tpu.memory_space<vmem>>, vector<512x36xf32>
    %c0_2 = arith.constant 0 : index
    %c0_3 = arith.constant 0 : index
    %4 = vector.load %arg3[%c0_2, %c0_3] : memref<36x128xf32, #tpu.memory_space<vmem>>, vector<36x128xf32>
    %cst = arith.constant dense<0.000000e+00> : vector<512x128xf32>
    %5 = tpu.matmul %3, %4, %cst {dimension_numbers = #tpu.dot_dimension_numbers<[1], [0], [0], [1], [0, 0, 1, 1], [], []>} : vector<512x36xf32>, vector<36x128xf32>, vector<512x128xf32> -> vector<512x128xf32>
    %c0_4 = arith.constant 0 : index
    %c0_5 = arith.constant 0 : index
    %6 = vector.load %arg4[%c0_4, %c0_5] : memref<2x128xf32, #tpu.memory_space<vmem>>, vector<2x128xf32>
    %7 = vector.extract_strided_slice %6 {offsets = [0, 0], sizes = [1, 128], strides = [1, 1]} : vector<2x128xf32> to vector<1x128xf32>
    %8 = vector.broadcast %7 : vector<1x128xf32> to vector<512x128xf32>
    %9 = arith.mulf %5, %8 : vector<512x128xf32>
    %10 = vector.extract_strided_slice %6 {offsets = [1, 0], sizes = [1, 128], strides = [1, 1]} : vector<2x128xf32> to vector<1x128xf32>
    %11 = vector.broadcast %10 : vector<1x128xf32> to vector<512x128xf32>
    %12 = arith.addf %9, %11 : vector<512x128xf32>
    %cst_6 = arith.constant 0.000000e+00 : f32
    %13 = vector.broadcast %cst_6 : f32 to vector<512x128xf32>
    %14 = arith.maximumf %12, %13 : vector<512x128xf32>
    %c0_7 = arith.constant 0 : index
    %c0_8 = arith.constant 0 : index
    %15 = vector.load %arg5[%c0_7, %c0_8] : memref<128x128xf32, #tpu.memory_space<vmem>>, vector<128x128xf32>
    %cst_9 = arith.constant dense<0.000000e+00> : vector<512x128xf32>
    %16 = tpu.matmul %14, %15, %cst_9 {dimension_numbers = #tpu.dot_dimension_numbers<[1], [0], [0], [1], [0, 0, 1, 1], [], []>} : vector<512x128xf32>, vector<128x128xf32>, vector<512x128xf32> -> vector<512x128xf32>
    %c0_10 = arith.constant 0 : index
    %c0_11 = arith.constant 0 : index
    %17 = vector.load %arg6[%c0_10, %c0_11] : memref<8x128xf32, #tpu.memory_space<vmem>>, vector<8x128xf32>
    %18 = vector.shape_cast %16 : vector<512x128xf32> to vector<64x8x128xf32>
    %cst_12 = arith.constant dense<0.000000e+00> : vector<8x128xf32>
    %19 = vector.multi_reduction <add>, %18, %cst_12 [0] : vector<64x8x128xf32> to vector<8x128xf32>
    %20 = arith.addf %17, %19 : vector<8x128xf32>
    %c0_13 = arith.constant 0 : index
    %c0_14 = arith.constant 0 : index
    %21 = vector.load %arg6[%c0_13, %c0_14] : memref<8x128xf32, #tpu.memory_space<vmem>>, vector<8x128xf32>
    tpu.vector_store %arg6[%c0_13, %c0_14], %20 {strides = array<i32>} : memref<8x128xf32, #tpu.memory_space<vmem>>, vector<8x128xf32>,
    %c0_15 = arith.constant 0 : index
    %c0_16 = arith.constant 0 : index
    %22 = vector.load %arg7[%c0_15, %c0_16] : memref<8x128xf32, #tpu.memory_space<vmem>>, vector<8x128xf32>
    %23 = arith.mulf %16, %16 : vector<512x128xf32>
    %24 = vector.shape_cast %23 : vector<512x128xf32> to vector<64x8x128xf32>
    %cst_17 = arith.constant dense<0.000000e+00> : vector<8x128xf32>
    %25 = vector.multi_reduction <add>, %24, %cst_17 [0] : vector<64x8x128xf32> to vector<8x128xf32>
    %26 = arith.addf %22, %25 : vector<8x128xf32>
    %c0_18 = arith.constant 0 : index
    %c0_19 = arith.constant 0 : index
    %27 = vector.load %arg7[%c0_18, %c0_19] : memref<8x128xf32, #tpu.memory_space<vmem>>, vector<8x128xf32>
    tpu.vector_store %arg7[%c0_18, %c0_19], %26 {strides = array<i32>} : memref<8x128xf32, #tpu.memory_space<vmem>>, vector<8x128xf32>,
    return
  }
  func.func @transform_0(%arg0: i32, %arg1: i32) -> (i32, i32) {
    %c1_i32 = arith.constant 1 : i32
    %0 = arith.muli %arg0, %c1_i32 : i32
    %1 = arith.addi %0, %arg1 : i32
    %c0_i32 = arith.constant 0 : i32
    %c0_i32_0 = arith.constant 0 : i32
    return %1, %c0_i32 : i32, i32
  }
  func.func @transform_1(%arg0: i32, %arg1: i32) -> (i32, i32) {
    %c0_i32 = arith.constant 0 : i32
    %c0_i32_0 = arith.constant 0 : i32
    %c0_i32_1 = arith.constant 0 : i32
    return %c0_i32, %c0_i32_0 : i32, i32
  }
  func.func @transform_2(%arg0: i32, %arg1: i32) -> (i32, i32) {
    %c0_i32 = arith.constant 0 : i32
    %c0_i32_0 = arith.constant 0 : i32
    %c0_i32_1 = arith.constant 0 : i32
    return %c0_i32, %c0_i32_0 : i32, i32
  }
  func.func @transform_3(%arg0: i32, %arg1: i32) -> (i32, i32) {
    %c0_i32 = arith.constant 0 : i32
    %c0_i32_0 = arith.constant 0 : i32
    %c0_i32_1 = arith.constant 0 : i32
    return %c0_i32, %c0_i32_0 : i32, i32
  }
  func.func @transform_4(%arg0: i32, %arg1: i32) -> (i32, i32) {
    %c0_i32 = arith.constant 0 : i32
    %c0_i32_0 = arith.constant 0 : i32
    return %arg0, %c0_i32 : i32, i32
  }
  func.func @transform_5(%arg0: i32, %arg1: i32) -> (i32, i32) {
    %c0_i32 = arith.constant 0 : i32
    %c0_i32_0 = arith.constant 0 : i32
    return %arg0, %c0_i32 : i32, i32
  }
}

module attributes {stable_mosaic.version = 11 : i64} {
  func.func @_final_recompute_kernel(%arg0: i32, %arg1: memref<512x36xf32, #tpu.memory_space<vmem>>, %arg2: memref<36x128xf32, #tpu.memory_space<vmem>>, %arg3: memref<4x128xf32, #tpu.memory_space<vmem>>, %arg4: memref<128x128xf32, #tpu.memory_space<vmem>>, %arg5: memref<512x128xf32, #tpu.memory_space<vmem>>) attributes {dimension_semantics = [#tpu.dimension_semantics<parallel>], iteration_bounds = array<i64: 1>, scalar_prefetch = 0 : i64, scratch_operands = 0 : i64, tpu.core_type = #tpu.core_type<tc>, window_params = [{transform_indices = @transform_0, window_bounds = array<i64: 512, 36>}, {pipeline_mode = #tpu.pipeline_mode<synchronous>, transform_indices = @transform_1, window_bounds = array<i64: 36, 128>}, {pipeline_mode = #tpu.pipeline_mode<synchronous>, transform_indices = @transform_2, window_bounds = array<i64: 4, 128>}, {pipeline_mode = #tpu.pipeline_mode<synchronous>, transform_indices = @transform_3, window_bounds = array<i64: 128, 128>}, {transform_indices = @transform_4, window_bounds = array<i64: 512, 128>}]} {
    %c0 = arith.constant 0 : index
    %c0_0 = arith.constant 0 : index
    %0 = vector.load %arg1[%c0, %c0_0] : memref<512x36xf32, #tpu.memory_space<vmem>>, vector<512x36xf32>
    %c0_1 = arith.constant 0 : index
    %c0_2 = arith.constant 0 : index
    %1 = vector.load %arg2[%c0_1, %c0_2] : memref<36x128xf32, #tpu.memory_space<vmem>>, vector<36x128xf32>
    %cst = arith.constant dense<0.000000e+00> : vector<512x128xf32>
    %2 = tpu.matmul %0, %1, %cst {dimension_numbers = #tpu.dot_dimension_numbers<[1], [0], [0], [1], [0, 0, 1, 1], [], []>} : vector<512x36xf32>, vector<36x128xf32>, vector<512x128xf32> -> vector<512x128xf32>
    %c0_3 = arith.constant 0 : index
    %c0_4 = arith.constant 0 : index
    %3 = vector.load %arg3[%c0_3, %c0_4] : memref<4x128xf32, #tpu.memory_space<vmem>>, vector<4x128xf32>
    %4 = vector.extract_strided_slice %3 {offsets = [0, 0], sizes = [1, 128], strides = [1, 1]} : vector<4x128xf32> to vector<1x128xf32>
    %5 = vector.broadcast %4 : vector<1x128xf32> to vector<512x128xf32>
    %6 = arith.mulf %2, %5 : vector<512x128xf32>
    %7 = vector.extract_strided_slice %3 {offsets = [1, 0], sizes = [1, 128], strides = [1, 1]} : vector<4x128xf32> to vector<1x128xf32>
    %8 = vector.broadcast %7 : vector<1x128xf32> to vector<512x128xf32>
    %9 = arith.addf %6, %8 : vector<512x128xf32>
    %cst_5 = arith.constant 0.000000e+00 : f32
    %10 = vector.broadcast %cst_5 : f32 to vector<512x128xf32>
    %11 = arith.maximumf %9, %10 : vector<512x128xf32>
    %c0_6 = arith.constant 0 : index
    %c0_7 = arith.constant 0 : index
    %12 = vector.load %arg4[%c0_6, %c0_7] : memref<128x128xf32, #tpu.memory_space<vmem>>, vector<128x128xf32>
    %cst_8 = arith.constant dense<0.000000e+00> : vector<512x128xf32>
    %13 = tpu.matmul %11, %12, %cst_8 {dimension_numbers = #tpu.dot_dimension_numbers<[1], [0], [0], [1], [0, 0, 1, 1], [], []>} : vector<512x128xf32>, vector<128x128xf32>, vector<512x128xf32> -> vector<512x128xf32>
    %c2 = arith.constant 2 : index
    %c0_9 = arith.constant 0 : index
    %14 = vector.load %arg3[%c2, %c0_9] : memref<4x128xf32, #tpu.memory_space<vmem>>, vector<1x128xf32>
    %15 = vector.broadcast %14 : vector<1x128xf32> to vector<512x128xf32>
    %16 = arith.mulf %13, %15 : vector<512x128xf32>
    %c3 = arith.constant 3 : index
    %c0_10 = arith.constant 0 : index
    %17 = vector.load %arg3[%c3, %c0_10] : memref<4x128xf32, #tpu.memory_space<vmem>>, vector<1x128xf32>
    %18 = vector.broadcast %17 : vector<1x128xf32> to vector<512x128xf32>
    %19 = arith.addf %16, %18 : vector<512x128xf32>
    %20 = arith.negf %19 : vector<512x128xf32>
    %21 = math.exp %20 : vector<512x128xf32>
    %cst_11 = arith.constant 1.000000e+00 : f32
    %22 = vector.broadcast %cst_11 : f32 to vector<512x128xf32>
    %23 = arith.addf %22, %21 : vector<512x128xf32>
    %24 = arith.divf %22, %23 : vector<512x128xf32>
    %25 = arith.mulf %11, %24 : vector<512x128xf32>
    %c0_12 = arith.constant 0 : index
    %c0_13 = arith.constant 0 : index
    %26 = vector.load %arg5[%c0_12, %c0_13] : memref<512x128xf32, #tpu.memory_space<vmem>>, vector<512x128xf32>
    tpu.vector_store %arg5[%c0_12, %c0_13], %25 {strides = array<i32>} : memref<512x128xf32, #tpu.memory_space<vmem>>, vector<512x128xf32>,
    return
  }
  func.func @transform_0(%arg0: i32) -> (i32, i32) {
    %c0_i32 = arith.constant 0 : i32
    %c0_i32_0 = arith.constant 0 : i32
    return %arg0, %c0_i32 : i32, i32
  }
  func.func @transform_1(%arg0: i32) -> (i32, i32) {
    %c0_i32 = arith.constant 0 : i32
    %c0_i32_0 = arith.constant 0 : i32
    %c0_i32_1 = arith.constant 0 : i32
    return %c0_i32, %c0_i32_0 : i32, i32
  }
  func.func @transform_2(%arg0: i32) -> (i32, i32) {
    %c0_i32 = arith.constant 0 : i32
    %c0_i32_0 = arith.constant 0 : i32
    %c0_i32_1 = arith.constant 0 : i32
    return %c0_i32, %c0_i32_0 : i32, i32
  }
  func.func @transform_3(%arg0: i32) -> (i32, i32) {
    %c0_i32 = arith.constant 0 : i32
    %c0_i32_0 = arith.constant 0 : i32
    %c0_i32_1 = arith.constant 0 : i32
    return %c0_i32, %c0_i32_0 : i32, i32
  }
  func.func @transform_4(%arg0: i32) -> (i32, i32) {
    %c0_i32 = arith.constant 0 : i32
    %c0_i32_0 = arith.constant 0 : i32
    return %arg0, %c0_i32 : i32, i32
  }
}

</mosaic_0001>

<llo_original>
// kernel: conv2d_attn.3
$region0: #{conv2d_attn.3}
  #allocation0 [shape = 'u32[]', space=smem, size = 0x4, offset = 0x4, fixed_abs, tag = 'smem constant byte address 0x4 - core index']
  #allocation1 [shape = 'u32[144,128]{1,0:T(1,128)}', space=vmem, size = 0x12000, scoped, tag = 'internal scratch']
  %s0 = inlined_call_operand.vmem [shape: f32[512,36], index: 0, kind: input, shape index: {}]
  %s1 = inlined_call_operand.vmem [shape: f32[36,128], index: 1, kind: input, shape index: {}]
  %s2 = inlined_call_operand.vmem [shape: f32[8,128], index: 2, kind: output, shape index: {0}]
  %s3 = inlined_call_operand.vmem [shape: f32[8,128], index: 3, kind: output, shape index: {1}]
  %4 = xla_tuple %s2, %s3
  %s5 = sld [smem:[#allocation0]]
  $region30: #{conv2d_attn.3} parent=0
    _
  %s7 = ssub.s32 1, %s5
  %s8 = scalar_select 0, %s7, %s5
  // Predicated region
  $region2: #{conv2d_attn.3} parent=0 // pred_check
    _
  $region3: #{conv2d_attn.3} parent=0 // pred_check_branch
    %10 = sbr.rel (0) target = $region5
  $region4: #{conv2d_attn.3} parent=0 // pred_region
    %s11 = sadd.s32 0, 0
    %s12 = smul.u32 64, %s11
    %p13 = scmp.lt.s32.totalorder %s12, 63
    %s14 = scalar_select %p13, %s12, 63
    %s15 = smul.addr %s14, 8
    %s16 = scalar_lea.vmem %s0, %s15
    %s17 = sadd.s32 0, 0
    %s18 = smul.u32 64, %s17
  $region5: #{conv2d_attn.3} parent=0 // pred_fallthru
    _
  // Predicated region
  $region6: #{conv2d_attn.3} parent=0 // pred_check
    _
  $region7: #{conv2d_attn.3} parent=0 // pred_check_branch
    %20 = sbr.rel (0) target = $region9
  $region8: #{conv2d_attn.3} parent=0 // pred_region
    _
  $region9: #{conv2d_attn.3} parent=0 // pred_fallthru
    _
  %s21 = sadd.s32 0, 0
  %s22 = smul.u32 64, %s21
  %p23 = scmp.lt.s32.totalorder %s22, 63
  %s24 = scalar_select %p23, %s22, 63
  %s25 = smul.addr %s24, 8
  %s26 = scalar_lea.vmem %s0, %s25
  %s27 = sadd.s32 0, 0
  %s28 = smul.u32 64, %s27
  %p29 = scmp.lt.s32.totalorder %s28, 63
  %s30 = scalar_select %p29, %s28, 63
  %s31 = smul.addr %s30, 8
  %s32 = scalar_lea.vmem %s0, %s31
  %s33 = sadd.s32 0, 0
  %s34 = smul.u32 64, %s33
  %p35 = scmp.eq.s32.totalorder 0, 0
  // Predicated region
  $region10: #{conv2d_attn.3} parent=0 // pred_check
    %p36 = pneg %p35
  $region11: #{conv2d_attn.3} parent=0 // pred_check_branch
    %38 = sbr.rel (%p36) target = $region13
  $region12: #{conv2d_attn.3} parent=0 // pred_region
    %39 = vst [vmem:[%s2] sm:$0xff] 0.0
    %40 = vst [vmem:[%s3] sm:$0xff] 0.0
  $region13: #{conv2d_attn.3} parent=0 // pred_fallthru
    _
  %v41 = vld [vmem:[%s32] sm:$0xff]
  %v42 = vld [vmem:[%s32 + $0x8] sm:$0xff]
  %v43 = vld [vmem:[%s32 + $0x10] sm:$0xff]
  %v44 = vld [vmem:[%s32 + $0x18] sm:$0xff]
  %v45 = vld [vmem:[%s32 + $0x20] sm:$0xff]
  %v46 = vld [vmem:[%s32 + $0x28] sm:$0xff]
  %v47 = vld [vmem:[%s32 + $0x30] sm:$0xff]
  %v48 = vld [vmem:[%s32 + $0x38] sm:$0xff]
  %v49 = vld [vmem:[%s32 + $0x40] sm:$0xff]
  %v50 = vld [vmem:[%s32 + $0x48] sm:$0xff]
  %v51 = vld [vmem:[%s32 + $0x50] sm:$0xff]
  %v52 = vld [vmem:[%s32 + $0x58] sm:$0xff]
  %v53 = vld [vmem:[%s32 + $0x60] sm:$0xff]
  %v54 = vld [vmem:[%s32 + $0x68] sm:$0xff]
  %v55 = vld [vmem:[%s32 + $0x70] sm:$0xff]
  %v56 = vld [vmem:[%s32 + $0x78] sm:$0xff]
  %v57 = vld [vmem:[%s32 + $0x80] sm:$0xff]
  %v58 = vld [vmem:[%s32 + $0x88] sm:$0xff]
  %v59 = vld [vmem:[%s32 + $0x90] sm:$0xff]
  %v60 = vld [vmem:[%s32 + $0x98] sm:$0xff]
  %v61 = vld [vmem:[%s32 + $0xa0] sm:$0xff]
  %v62 = vld [vmem:[%s32 + $0xa8] sm:$0xff]
  %v63 = vld [vmem:[%s32 + $0xb0] sm:$0xff]
  %v64 = vld [vmem:[%s32 + $0xb8] sm:$0xff]
  %v65 = vld [vmem:[%s32 + $0xc0] sm:$0xff]
  %v66 = vld [vmem:[%s32 + $0xc8] sm:$0xff]
  %v67 = vld [vmem:[%s32 + $0xd0] sm:$0xff]
  %v68 = vld [vmem:[%s32 + $0xd8] sm:$0xff]
  %v69 = vld [vmem:[%s32 + $0xe0] sm:$0xff]
  %v70 = vld [vmem:[%s32 + $0xe8] sm:$0xff]
  %v71 = vld [vmem:[%s32 + $0xf0] sm:$0xff]
  %v72 = vld [vmem:[%s32 + $0xf8] sm:$0xff]
  %v73 = vld [vmem:[%s32 + $0x100] sm:$0xff]
  %v74 = vld [vmem:[%s32 + $0x108] sm:$0xff]
  %v75 = vld [vmem:[%s32 + $0x110] sm:$0xff]
  %v76 = vld [vmem:[%s32 + $0x118] sm:$0xff]
  %v77 = vld [vmem:[%s32 + $0x120] sm:$0xff]
  %v78 = vld [vmem:[%s32 + $0x128] sm:$0xff]
  %v79 = vld [vmem:[%s32 + $0x130] sm:$0xff]
  %v80 = vld [vmem:[%s32 + $0x138] sm:$0xff]
  %v81 = vld [vmem:[%s32 + $0x140] sm:$0xff]
  %v82 = vld [vmem:[%s32 + $0x148] sm:$0xff]
  %v83 = vld [vmem:[%s32 + $0x150] sm:$0xff]
  %v84 = vld [vmem:[%s32 + $0x158] sm:$0xff]
  %v85 = vld [vmem:[%s32 + $0x160] sm:$0xff]
  %v86 = vld [vmem:[%s32 + $0x168] sm:$0xff]
  %v87 = vld [vmem:[%s32 + $0x170] sm:$0xff]
  %v88 = vld [vmem:[%s32 + $0x178] sm:$0xff]
  %v89 = vld [vmem:[%s32 + $0x180] sm:$0xff]
  %v90 = vld [vmem:[%s32 + $0x188] sm:$0xff]
  %v91 = vld [vmem:[%s32 + $0x190] sm:$0xff]
  %v92 = vld [vmem:[%s32 + $0x198] sm:$0xff]
  %v93 = vld [vmem:[%s32 + $0x1a0] sm:$0xff]
  %v94 = vld [vmem:[%s32 + $0x1a8] sm:$0xff]
  %v95 = vld [vmem:[%s32 + $0x1b0] sm:$0xff]
  %v96 = vld [vmem:[%s32 + $0x1b8] sm:$0xff]
  %v97 = vld [vmem:[%s32 + $0x1c0] sm:$0xff]
  %v98 = vld [vmem:[%s32 + $0x1c8] sm:$0xff]
  %v99 = vld [vmem:[%s32 + $0x1d0] sm:$0xff]
  %v100 = vld [vmem:[%s32 + $0x1d8] sm:$0xff]
  %v101 = vld [vmem:[%s32 + $0x1e0] sm:$0xff]
  %v102 = vld [vmem:[%s32 + $0x1e8] sm:$0xff]
  %v103 = vld [vmem:[%s32 + $0x1f0] sm:$0xff]
  %v104 = vld [vmem:[%s32 + $0x1f8] sm:$0xff]
  %v105 = vld [vmem:[%s1] sm:$0xff]
  %v106 = vld [vmem:[%s1 + $0x8] sm:$0xff]
  %v107 = vld [vmem:[%s1 + $0x10] sm:$0xff]
  %v108 = vld [vmem:[%s1 + $0x18] sm:$0xff]
  %v109 = vld [vmem:[%s1 + $0x20] sm:$0xf]
  %vm110 = vcmask 293888
  %v112 = vsel %vm110, %v41, 0
  %v115 = vsel %vm110, %v42, 0
  %v118 = vsel %vm110, %v43, 0
  %v121 = vsel %vm110, %v44, 0
  %v124 = vsel %vm110, %v45, 0
  %v127 = vsel %vm110, %v46, 0
  %v130 = vsel %vm110, %v47, 0
  %v133 = vsel %vm110, %v48, 0
  %v136 = vsel %vm110, %v49, 0
  %v139 = vsel %vm110, %v50, 0
  %v142 = vsel %vm110, %v51, 0
  %v145 = vsel %vm110, %v52, 0
  %v148 = vsel %vm110, %v53, 0
  %v151 = vsel %vm110, %v54, 0
  %v154 = vsel %vm110, %v55, 0
  %v157 = vsel %vm110, %v56, 0
  %v160 = vsel %vm110, %v57, 0
  %v163 = vsel %vm110, %v58, 0
  %v166 = vsel %vm110, %v59, 0
  %v169 = vsel %vm110, %v60, 0
  %v172 = vsel %vm110, %v61, 0
  %v175 = vsel %vm110, %v62, 0
  %v178 = vsel %vm110, %v63, 0
  %v181 = vsel %vm110, %v64, 0
  %v184 = vsel %vm110, %v65, 0
  %v187 = vsel %vm110, %v66, 0
  %v190 = vsel %vm110, %v67, 0
  %v193 = vsel %vm110, %v68, 0
  %v196 = vsel %vm110, %v69, 0
  %v199 = vsel %vm110, %v70, 0
  %v202 = vsel %vm110, %v71, 0
  %v205 = vsel %vm110, %v72, 0
  %v208 = vsel %vm110, %v73, 0
  %v211 = vsel %vm110, %v74, 0
  %v214 = vsel %vm110, %v75, 0
  %v217 = vsel %vm110, %v76, 0
  %v220 = vsel %vm110, %v77, 0
  %v223 = vsel %vm110, %v78, 0
  %v226 = vsel %vm110, %v79, 0
  %v229 = vsel %vm110, %v80, 0
  %v232 = vsel %vm110, %v81, 0
  %v235 = vsel %vm110, %v82, 0
  %v238 = vsel %vm110, %v83, 0
  %v241 = vsel %vm110, %v84, 0
  %v244 = vsel %vm110, %v85, 0
  %v247 = vsel %vm110, %v86, 0
  %v250 = vsel %vm110, %v87, 0
  %v253 = vsel %vm110, %v88, 0
  %v256 = vsel %vm110, %v89, 0
  %v259 = vsel %vm110, %v90, 0
  %v262 = vsel %vm110, %v91, 0
  %v265 = vsel %vm110, %v92, 0
  %v268 = vsel %vm110, %v93, 0
  %v271 = vsel %vm110, %v94, 0
  %v274 = vsel %vm110, %v95, 0
  %v277 = vsel %vm110, %v96, 0
  %v280 = vsel %vm110, %v97, 0
  %v283 = vsel %vm110, %v98, 0
  %v286 = vsel %vm110, %v99, 0
  %v289 = vsel %vm110, %v100, 0
  %v292 = vsel %vm110, %v101, 0
  %v295 = vsel %vm110, %v102, 0
  %v298 = vsel %vm110, %v103, 0
  %v301 = vsel %vm110, %v104, 0
  %vm303 = vcmask 1043456
  %v305 = vsel %vm303, %v109, 0
  %307 = vmatprep.subr.mxu0 0.0
  %308 = vmatpush1.msra.mxu0 0.0
  %309 = vmatprep.subr.mxu0 0.0
  %310 = vmatpush1.msra.mxu0 0.0
  %311 = vmatprep.subr.mxu0 0.0
  %312 = vmatpush1.msra.mxu0 0.0
  %313 = vmatprep.subr.mxu0 0.0
  %314 = vmatpush1.msra.mxu0 0.0
  %315 = vmatprep.subr.mxu0 0.0
  %316 = vmatpush1.msra.mxu0 0.0
  %317 = vmatprep.subr.mxu0 0.0
  %318 = vmatpush1.msra.mxu0 0.0
  %319 = vmatprep.subr.mxu0 0.0
  %320 = vmatpush1.msra.mxu0 0.0
  %321 = vmatprep.subr.mxu0 0.0
  %322 = vmatpush1.msra.mxu0 0.0
  %323 = vmatprep.subr.mxu0 0.0
  %324 = vmatpush1.msra.mxu0 0.0
  %325 = vmatprep.subr.mxu0 0.0
  %326 = vmatpush1.msra.mxu0 0.0
  %327 = vmatprep.subr.mxu0 0.0
  %328 = vmatpush1.msra.mxu0 0.0
  %329 = vmatprep.subr.mxu0 0.0
  %330 = vmatpush1.msra.mxu0 %v305
  %331 = vmatprep.subr.mxu0 0.0
  %332 = vmatpush1.msra.mxu0 %v108
  %333 = vmatprep.subr.mxu0 0.0
  %334 = vmatpush1.msra.mxu0 %v107
  %335 = vmatprep.subr.mxu0 0.0
  %336 = vmatpush1.msra.mxu0 %v106
  %337 = vmatprep.subr.mxu0 0.0
  %338 = vmatpush1.msra.mxu0 %v105
  %339 = vmatprep.subr.mxu0 0.0
  %340 = vmatpush2.msra.mxu0 0.0
  %341 = vmatprep.subr.mxu0 0.0
  %342 = vmatpush2.msra.mxu0 0.0
  %343 = vmatprep.subr.mxu0 0.0
  %344 = vmatpush2.msra.mxu0 0.0
  %345 = vmatprep.subr.mxu0 0.0
  %346 = vmatpush2.msra.mxu0 0.0
  %347 = vmatprep.subr.mxu0 0.0
  %348 = vmatpush2.msra.mxu0 0.0
  %349 = vmatprep.subr.mxu0 0.0
  %350 = vmatpush2.msra.mxu0 0.0
  %351 = vmatprep.subr.mxu0 0.0
  %352 = vmatpush2.msra.mxu0 0.0
  %353 = vmatprep.subr.mxu0 0.0
  %354 = vmatpush2.msra.mxu0 0.0
  %355 = vmatprep.subr.mxu0 0.0
  %356 = vmatpush2.msra.mxu0 0.0
  %357 = vmatprep.subr.mxu0 0.0
  %358 = vmatpush2.msra.mxu0 0.0
  %359 = vmatprep.subr.mxu0 0.0
  %360 = vmatpush2.msra.mxu0 0.0
  %361 = vmatprep.subr.mxu0 0.0
  %362 = vmatpush2.msra.mxu0 0.0
  %363 = vmatprep.subr.mxu0 0.0
  %364 = vmatpush2.msra.mxu0 0.0
  %365 = vmatprep.subr.mxu0 0.0
  %366 = vmatpush2.msra.mxu0 0.0
  %367 = vmatprep.subr.mxu0 0.0
  %368 = vmatpush2.msra.mxu0 0.0
  %369 = vmatprep.subr.mxu0 0.0
  %370 = vmatpush2.msra.mxu0 0.0
  %371 = vmatprep.mubr.f32.mxu0 0.0
  %372 = vmatmul.mubr.f32.gmra.mxu0 %v112
  %v373 = vpop.f32.mrf.mxu0
  %v374 = vadd.f32 0.0, %v373
  %v375 = vpop.f32.mrf.mxu0
  %376 = vmatprep.mubr.f32.mxu0 0.0
  %377 = vmatmul.mubr.f32.gmra.mxu0 %v115
  %v378 = vpop.f32.mrf.mxu0
  %v379 = vadd.f32 0.0, %v378
  %v380 = vpop.f32.mrf.mxu0
  %381 = vmatprep.mubr.f32.mxu0 0.0
  %382 = vmatmul.mubr.f32.gmra.mxu0 %v118
  %v383 = vpop.f32.mrf.mxu0
  %v384 = vadd.f32 0.0, %v383
  %v385 = vpop.f32.mrf.mxu0
  %386 = vmatprep.mubr.f32.mxu0 0.0
  %387 = vmatmul.mubr.f32.gmra.mxu0 %v121
  %v388 = vpop.f32.mrf.mxu0
  %v389 = vadd.f32 0.0, %v388
  %v390 = vpop.f32.mrf.mxu0
  %391 = vmatprep.mubr.f32.mxu0 0.0
  %392 = vmatmul.mubr.f32.gmra.mxu0 %v124
  %v393 = vpop.f32.mrf.mxu0
  %v394 = vadd.f32 0.0, %v393
  %v395 = vpop.f32.mrf.mxu0
  %396 = vmatprep.mubr.f32.mxu0 0.0
  %397 = vmatmul.mubr.f32.gmra.mxu0 %v127
  %v398 = vpop.f32.mrf.mxu0
  %v399 = vadd.f32 0.0, %v398
  %v400 = vpop.f32.mrf.mxu0
  %401 = vmatprep.mubr.f32.mxu0 0.0
  %402 = vmatmul.mubr.f32.gmra.mxu0 %v130
  %v403 = vpop.f32.mrf.mxu0
  %v404 = vadd.f32 0.0, %v403
  %v405 = vpop.f32.mrf.mxu0
  %406 = vmatprep.mubr.f32.mxu0 0.0
  %407 = vmatmul.mubr.f32.gmra.mxu0 %v133
  %v408 = vpop.f32.mrf.mxu0
  %v409 = vadd.f32 0.0, %v408
  %v410 = vpop.f32.mrf.mxu0
  %411 = vmatprep.mubr.f32.mxu0 0.0
  %412 = vmatmul.mubr.f32.gmra.mxu0 %v136
  %v413 = vpop.f32.mrf.mxu0
  %v414 = vadd.f32 0.0, %v413
  %v415 = vpop.f32.mrf.mxu0
  %416 = vmatprep.mubr.f32.mxu0 0.0
  %417 = vmatmul.mubr.f32.gmra.mxu0 %v139
  %v418 = vpop.f32.mrf.mxu0
  %v419 = vadd.f32 0.0, %v418
  %v420 = vpop.f32.mrf.mxu0
  %421 = vmatprep.mubr.f32.mxu0 0.0
  %422 = vmatmul.mubr.f32.gmra.mxu0 %v142
  %v423 = vpop.f32.mrf.mxu0
  %v424 = vadd.f32 0.0, %v423
  %v425 = vpop.f32.mrf.mxu0
  %426 = vmatprep.mubr.f32.mxu0 0.0
  %427 = vmatmul.mubr.f32.gmra.mxu0 %v145
  %v428 = vpop.f32.mrf.mxu0
  %v429 = vadd.f32 0.0, %v428
  %v430 = vpop.f32.mrf.mxu0
  %431 = vmatprep.mubr.f32.mxu0 0.0
  %432 = vmatmul.mubr.f32.gmra.mxu0 %v148
  %v433 = vpop.f32.mrf.mxu0
  %v434 = vadd.f32 0.0, %v433
  %v435 = vpop.f32.mrf.mxu0
  %436 = vmatprep.mubr.f32.mxu0 0.0
  %437 = vmatmul.mubr.f32.gmra.mxu0 %v151
  %v438 = vpop.f32.mrf.mxu0
  %v439 = vadd.f32 0.0, %v438
  %v440 = vpop.f32.mrf.mxu0
  %441 = vmatprep.mubr.f32.mxu0 0.0
  %442 = vmatmul.mubr.f32.gmra.mxu0 %v154
  %v443 = vpop.f32.mrf.mxu0
  %v444 = vadd.f32 0.0, %v443
  %v445 = vpop.f32.mrf.mxu0
  %446 = vmatprep.mubr.f32.mxu0 0.0
  %447 = vmatmul.mubr.f32.gmra.mxu0 %v157
  %v448 = vpop.f32.mrf.mxu0
  %v449 = vadd.f32 0.0, %v448
  %v450 = vpop.f32.mrf.mxu0
  %451 = vmatprep.mubr.f32.mxu0 0.0
  %452 = vmatmul.mubr.f32.gmra.mxu0 %v160
  %v453 = vpop.f32.mrf.mxu0
  %v454 = vadd.f32 0.0, %v453
  %v455 = vpop.f32.mrf.mxu0
  %456 = vmatprep.mubr.f32.mxu0 0.0
  %457 = vmatmul.mubr.f32.gmra.mxu0 %v163
  %v458 = vpop.f32.mrf.mxu0
  %v459 = vadd.f32 0.0, %v458
  %v460 = vpop.f32.mrf.mxu0
  %461 = vmatprep.mubr.f32.mxu0 0.0
  %462 = vmatmul.mubr.f32.gmra.mxu0 %v166
  %v463 = vpop.f32.mrf.mxu0
  %v464 = vadd.f32 0.0, %v463
  %v465 = vpop.f32.mrf.mxu0
  %466 = vmatprep.mubr.f32.mxu0 0.0
  %467 = vmatmul.mubr.f32.gmra.mxu0 %v169
  %v468 = vpop.f32.mrf.mxu0
  %v469 = vadd.f32 0.0, %v468
  %v470 = vpop.f32.mrf.mxu0
  %471 = vmatprep.mubr.f32.mxu0 0.0
  %472 = vmatmul.mubr.f32.gmra.mxu0 %v172
  %v473 = vpop.f32.mrf.mxu0
  %v474 = vadd.f32 0.0, %v473
  %v475 = vpop.f32.mrf.mxu0
  %476 = vmatprep.mubr.f32.mxu0 0.0
  %477 = vmatmul.mubr.f32.gmra.mxu0 %v175
  %v478 = vpop.f32.mrf.mxu0
  %v479 = vadd.f32 0.0, %v478
  %v480 = vpop.f32.mrf.mxu0
  %481 = vmatprep.mubr.f32.mxu0 0.0
  %482 = vmatmul.mubr.f32.gmra.mxu0 %v178
  %v483 = vpop.f32.mrf.mxu0
  %v484 = vadd.f32 0.0, %v483
  %v485 = vpop.f32.mrf.mxu0
  %486 = vmatprep.mubr.f32.mxu0 0.0
  %487 = vmatmul.mubr.f32.gmra.mxu0 %v181
  %v488 = vpop.f32.mrf.mxu0
  %v489 = vadd.f32 0.0, %v488
  %v490 = vpop.f32.mrf.mxu0
  %491 = vmatprep.mubr.f32.mxu0 0.0
  %492 = vmatmul.mubr.f32.gmra.mxu0 %v184
  %v493 = vpop.f32.mrf.mxu0
  %v494 = vadd.f32 0.0, %v493
  %v495 = vpop.f32.mrf.mxu0
  %496 = vmatprep.mubr.f32.mxu0 0.0
  %497 = vmatmul.mubr.f32.gmra.mxu0 %v187
  %v498 = vpop.f32.mrf.mxu0
  %v499 = vadd.f32 0.0, %v498
  %v500 = vpop.f32.mrf.mxu0
  %501 = vmatprep.mubr.f32.mxu0 0.0
  %502 = vmatmul.mubr.f32.gmra.mxu0 %v190
  %v503 = vpop.f32.mrf.mxu0
  %v504 = vadd.f32 0.0, %v503
  %v505 = vpop.f32.mrf.mxu0
  %506 = vmatprep.mubr.f32.mxu0 0.0
  %507 = vmatmul.mubr.f32.gmra.mxu0 %v193
  %v508 = vpop.f32.mrf.mxu0
  %v509 = vadd.f32 0.0, %v508
  %v510 = vpop.f32.mrf.mxu0
  %511 = vmatprep.mubr.f32.mxu0 0.0
  %512 = vmatmul.mubr.f32.gmra.mxu0 %v196
  %v513 = vpop.f32.mrf.mxu0
  %v514 = vadd.f32 0.0, %v513
  %v515 = vpop.f32.mrf.mxu0
  %516 = vmatprep.mubr.f32.mxu0 0.0
  %517 = vmatmul.mubr.f32.gmra.mxu0 %v199
  %v518 = vpop.f32.mrf.mxu0
  %v519 = vadd.f32 0.0, %v518
  %v520 = vpop.f32.mrf.mxu0
  %521 = vmatprep.mubr.f32.mxu0 0.0
  %522 = vmatmul.mubr.f32.gmra.mxu0 %v202
  %v523 = vpop.f32.mrf.mxu0
  %v524 = vadd.f32 0.0, %v523
  %v525 = vpop.f32.mrf.mxu0
  %526 = vmatprep.mubr.f32.mxu0 0.0
  %527 = vmatmul.mubr.f32.gmra.mxu0 %v205
  %v528 = vpop.f32.mrf.mxu0
  %v529 = vadd.f32 0.0, %v528
  %v530 = vpop.f32.mrf.mxu0
  %531 = vmatprep.mubr.f32.mxu0 0.0
  %532 = vmatmul.mubr.f32.gmra.mxu0 %v208
  %v533 = vpop.f32.mrf.mxu0
  %v534 = vadd.f32 0.0, %v533
  %v535 = vpop.f32.mrf.mxu0
  %536 = vmatprep.mubr.f32.mxu0 0.0
  %537 = vmatmul.mubr.f32.gmra.mxu0 %v211
  %v538 = vpop.f32.mrf.mxu0
  %v539 = vadd.f32 0.0, %v538
  %v540 = vpop.f32.mrf.mxu0
  %541 = vmatprep.mubr.f32.mxu0 0.0
  %542 = vmatmul.mubr.f32.gmra.mxu0 %v214
  %v543 = vpop.f32.mrf.mxu0
  %v544 = vadd.f32 0.0, %v543
  %v545 = vpop.f32.mrf.mxu0
  %546 = vmatprep.mubr.f32.mxu0 0.0
  %547 = vmatmul.mubr.f32.gmra.mxu0 %v217
  %v548 = vpop.f32.mrf.mxu0
  %v549 = vadd.f32 0.0, %v548
  %v550 = vpop.f32.mrf.mxu0
  %551 = vmatprep.mubr.f32.mxu0 0.0
  %552 = vmatmul.mubr.f32.gmra.mxu0 %v220
  %v553 = vpop.f32.mrf.mxu0
  %v554 = vadd.f32 0.0, %v553
  %v555 = vpop.f32.mrf.mxu0
  %556 = vmatprep.mubr.f32.mxu0 0.0
  %557 = vmatmul.mubr.f32.gmra.mxu0 %v223
  %v558 = vpop.f32.mrf.mxu0
  %v559 = vadd.f32 0.0, %v558
  %v560 = vpop.f32.mrf.mxu0
  %561 = vmatprep.mubr.f32.mxu0 0.0
  %562 = vmatmul.mubr.f32.gmra.mxu0 %v226
  %v563 = vpop.f32.mrf.mxu0
  %v564 = vadd.f32 0.0, %v563
  %v565 = vpop.f32.mrf.mxu0
  %566 = vmatprep.mubr.f32.mxu0 0.0
  %567 = vmatmul.mubr.f32.gmra.mxu0 %v229
  %v568 = vpop.f32.mrf.mxu0
  %v569 = vadd.f32 0.0, %v568
  %v570 = vpop.f32.mrf.mxu0
  %571 = vmatprep.mubr.f32.mxu0 0.0
  %572 = vmatmul.mubr.f32.gmra.mxu0 %v232
  %v573 = vpop.f32.mrf.mxu0
  %v574 = vadd.f32 0.0, %v573
  %v575 = vpop.f32.mrf.mxu0
  %576 = vmatprep.mubr.f32.mxu0 0.0
  %577 = vmatmul.mubr.f32.gmra.mxu0 %v235
  %v578 = vpop.f32.mrf.mxu0
  %v579 = vadd.f32 0.0, %v578
  %v580 = vpop.f32.mrf.mxu0
  %581 = vmatprep.mubr.f32.mxu0 0.0
  %582 = vmatmul.mubr.f32.gmra.mxu0 %v238
  %v583 = vpop.f32.mrf.mxu0
  %v584 = vadd.f32 0.0, %v583
  %v585 = vpop.f32.mrf.mxu0
  %586 = vmatprep.mubr.f32.mxu0 0.0
  %587 = vmatmul.mubr.f32.gmra.mxu0 %v241
  %v588 = vpop.f32.mrf.mxu0
  %v589 = vadd.f32 0.0, %v588
  %v590 = vpop.f32.mrf.mxu0
  %591 = vmatprep.mubr.f32.mxu0 0.0
  %592 = vmatmul.mubr.f32.gmra.mxu0 %v244
  %v593 = vpop.f32.mrf.mxu0
  %v594 = vadd.f32 0.0, %v593
  %v595 = vpop.f32.mrf.mxu0
  %596 = vmatprep.mubr.f32.mxu0 0.0
  %597 = vmatmul.mubr.f32.gmra.mxu0 %v247
  %v598 = vpop.f32.mrf.mxu0
  %v599 = vadd.f32 0.0, %v598
  %v600 = vpop.f32.mrf.mxu0
  %601 = vmatprep.mubr.f32.mxu0 0.0
  %602 = vmatmul.mubr.f32.gmra.mxu0 %v250
  %v603 = vpop.f32.mrf.mxu0
  %v604 = vadd.f32 0.0, %v603
  %v605 = vpop.f32.mrf.mxu0
  %606 = vmatprep.mubr.f32.mxu0 0.0
  %607 = vmatmul.mubr.f32.gmra.mxu0 %v253
  %v608 = vpop.f32.mrf.mxu0
  %v609 = vadd.f32 0.0, %v608
  %v610 = vpop.f32.mrf.mxu0
  %611 = vmatprep.mubr.f32.mxu0 0.0
  %612 = vmatmul.mubr.f32.gmra.mxu0 %v256
  %v613 = vpop.f32.mrf.mxu0
  %v614 = vadd.f32 0.0, %v613
  %v615 = vpop.f32.mrf.mxu0
  %616 = vmatprep.mubr.f32.mxu0 0.0
  %617 = vmatmul.mubr.f32.gmra.mxu0 %v259
  %v618 = vpop.f32.mrf.mxu0
  %v619 = vadd.f32 0.0, %v618
  %v620 = vpop.f32.mrf.mxu0
  %621 = vmatprep.mubr.f32.mxu0 0.0
  %622 = vmatmul.mubr.f32.gmra.mxu0 %v262
  %v623 = vpop.f32.mrf.mxu0
  %v624 = vadd.f32 0.0, %v623
  %v625 = vpop.f32.mrf.mxu0
  %626 = vmatprep.mubr.f32.mxu0 0.0
  %627 = vmatmul.mubr.f32.gmra.mxu0 %v265
  %v628 = vpop.f32.mrf.mxu0
  %v629 = vadd.f32 0.0, %v628
  %v630 = vpop.f32.mrf.mxu0
  %631 = vmatprep.mubr.f32.mxu0 0.0
  %632 = vmatmul.mubr.f32.gmra.mxu0 %v268
  %v633 = vpop.f32.mrf.mxu0
  %v634 = vadd.f32 0.0, %v633
  %v635 = vpop.f32.mrf.mxu0
  %636 = vmatprep.mubr.f32.mxu0 0.0
  %637 = vmatmul.mubr.f32.gmra.mxu0 %v271
  %v638 = vpop.f32.mrf.mxu0
  %v639 = vadd.f32 0.0, %v638
  %v640 = vpop.f32.mrf.mxu0
  %641 = vmatprep.mubr.f32.mxu0 0.0
  %642 = vmatmul.mubr.f32.gmra.mxu0 %v274
  %v643 = vpop.f32.mrf.mxu0
  %v644 = vadd.f32 0.0, %v643
  %v645 = vpop.f32.mrf.mxu0
  %646 = vmatprep.mubr.f32.mxu0 0.0
  %647 = vmatmul.mubr.f32.gmra.mxu0 %v277
  %v648 = vpop.f32.mrf.mxu0
  %v649 = vadd.f32 0.0, %v648
  %v650 = vpop.f32.mrf.mxu0
  %651 = vmatprep.mubr.f32.mxu0 0.0
  %652 = vmatmul.mubr.f32.gmra.mxu0 %v280
  %v653 = vpop.f32.mrf.mxu0
  %v654 = vadd.f32 0.0, %v653
  %v655 = vpop.f32.mrf.mxu0
  %656 = vmatprep.mubr.f32.mxu0 0.0
  %657 = vmatmul.mubr.f32.gmra.mxu0 %v283
  %v658 = vpop.f32.mrf.mxu0
  %v659 = vadd.f32 0.0, %v658
  %v660 = vpop.f32.mrf.mxu0
  %661 = vmatprep.mubr.f32.mxu0 0.0
  %662 = vmatmul.mubr.f32.gmra.mxu0 %v286
  %v663 = vpop.f32.mrf.mxu0
  %v664 = vadd.f32 0.0, %v663
  %v665 = vpop.f32.mrf.mxu0
  %666 = vmatprep.mubr.f32.mxu0 0.0
  %667 = vmatmul.mubr.f32.gmra.mxu0 %v289
  %v668 = vpop.f32.mrf.mxu0
  %v669 = vadd.f32 0.0, %v668
  %v670 = vpop.f32.mrf.mxu0
  %671 = vmatprep.mubr.f32.mxu0 0.0
  %672 = vmatmul.mubr.f32.gmra.mxu0 %v292
  %v673 = vpop.f32.mrf.mxu0
  %v674 = vadd.f32 0.0, %v673
  %v675 = vpop.f32.mrf.mxu0
  %676 = vmatprep.mubr.f32.mxu0 0.0
  %677 = vmatmul.mubr.f32.gmra.mxu0 %v295
  %v678 = vpop.f32.mrf.mxu0
  %v679 = vadd.f32 0.0, %v678
  %v680 = vpop.f32.mrf.mxu0
  %681 = vmatprep.mubr.f32.mxu0 0.0
  %682 = vmatmul.mubr.f32.gmra.mxu0 %v298
  %v683 = vpop.f32.mrf.mxu0
  %v684 = vadd.f32 0.0, %v683
  %v685 = vpop.f32.mrf.mxu0
  %686 = vmatprep.mubr.f32.mxu0 0.0
  %687 = vmatmul.mubr.f32.gmra.mxu0 %v301
  %v688 = vpop.f32.mrf.mxu0
  %v689 = vadd.f32 0.0, %v688
  %v690 = vpop.f32.mrf.mxu0
  %691 = vdwg.mxu0
  %v692 = vld [vmem:[%s2] sm:$0xff]
  %v693 = vadd.f32 %v374, %v379
  %v694 = vadd.f32 %v693, %v384
  %v695 = vadd.f32 %v694, %v389
  %v696 = vadd.f32 %v695, %v394
  %v697 = vadd.f32 %v696, %v399
  %v698 = vadd.f32 %v697, %v404
  %v699 = vadd.f32 %v698, %v409
  %v700 = vadd.f32 %v699, %v414
  %v701 = vadd.f32 %v700, %v419
  %v702 = vadd.f32 %v701, %v424
  %v703 = vadd.f32 %v702, %v429
  %v704 = vadd.f32 %v703, %v434
  %v705 = vadd.f32 %v704, %v439
  %v706 = vadd.f32 %v705, %v444
  %v707 = vadd.f32 %v706, %v449
  %v708 = vadd.f32 %v707, %v454
  %v709 = vadd.f32 %v708, %v459
  %v710 = vadd.f32 %v709, %v464
  %v711 = vadd.f32 %v710, %v469
  %v712 = vadd.f32 %v711, %v474
  %v713 = vadd.f32 %v712, %v479
  %v714 = vadd.f32 %v713, %v484
  %v715 = vadd.f32 %v714, %v489
  %v716 = vadd.f32 %v715, %v494
  %v717 = vadd.f32 %v716, %v499
  %v718 = vadd.f32 %v717, %v504
  %v719 = vadd.f32 %v718, %v509
  %v720 = vadd.f32 %v719, %v514
  %v721 = vadd.f32 %v720, %v519
  %v722 = vadd.f32 %v721, %v524
  %v723 = vadd.f32 %v722, %v529
  %v724 = vadd.f32 %v723, %v534
  %v725 = vadd.f32 %v724, %v539
  %v726 = vadd.f32 %v725, %v544
  %v727 = vadd.f32 %v726, %v549
  %v728 = vadd.f32 %v727, %v554
  %v729 = vadd.f32 %v728, %v559
  %v730 = vadd.f32 %v729, %v564
  %v731 = vadd.f32 %v730, %v569
  %v732 = vadd.f32 %v731, %v574
  %v733 = vadd.f32 %v732, %v579
  %v734 = vadd.f32 %v733, %v584
  %v735 = vadd.f32 %v734, %v589
  %v736 = vadd.f32 %v735, %v594
  %v737 = vadd.f32 %v736, %v599
  %v738 = vadd.f32 %v737, %v604
  %v739 = vadd.f32 %v738, %v609
  %v740 = vadd.f32 %v739, %v614
  %v741 = vadd.f32 %v740, %v619
  %v742 = vadd.f32 %v741, %v624
  %v743 = vadd.f32 %v742, %v629
  %v744 = vadd.f32 %v743, %v634
  %v745 = vadd.f32 %v744, %v639
  %v746 = vadd.f32 %v745, %v644
  %v747 = vadd.f32 %v746, %v649
  %v748 = vadd.f32 %v747, %v654
  %v749 = vadd.f32 %v748, %v659
  %v750 = vadd.f32 %v749, %v664
  %v751 = vadd.f32 %v750, %v669
  %v752 = vadd.f32 %v751, %v674
  %v753 = vadd.f32 %v752, %v679
  %v754 = vadd.f32 %v753, %v684
  %v755 = vadd.f32 %v754, %v689
  %v756 = vadd.f32 %v692, %v755
  %757 = vst [vmem:[%s2] sm:$0xff] %v756
  %v758 = vld [vmem:[%s3] sm:$0xff]
  %v759 = vmul.f32 %v374, %v374
  %v760 = vmul.f32 %v379, %v379
  %v761 = vmul.f32 %v384, %v384
  %v762 = vmul.f32 %v389, %v389
  %v763 = vmul.f32 %v394, %v394
  %v764 = vmul.f32 %v399, %v399
  %v765 = vmul.f32 %v404, %v404
  %v766 = vmul.f32 %v409, %v409
  %v767 = vmul.f32 %v414, %v414
  %v768 = vmul.f32 %v419, %v419
  %v769 = vmul.f32 %v424, %v424
  %v770 = vmul.f32 %v429, %v429
  %v771 = vmul.f32 %v434, %v434
  %v772 = vmul.f32 %v439, %v439
  %v773 = vmul.f32 %v444, %v444
  %v774 = vmul.f32 %v449, %v449
  %v775 = vmul.f32 %v454, %v454
  %v776 = vmul.f32 %v459, %v459
  %v777 = vmul.f32 %v464, %v464
  %v778 = vmul.f32 %v469, %v469
  %v779 = vmul.f32 %v474, %v474
  %v780 = vmul.f32 %v479, %v479
  %v781 = vmul.f32 %v484, %v484
  %v782 = vmul.f32 %v489, %v489
  %v783 = vmul.f32 %v494, %v494
  %v784 = vmul.f32 %v499, %v499
  %v785 = vmul.f32 %v504, %v504
  %v786 = vmul.f32 %v509, %v509
  %v787 = vmul.f32 %v514, %v514
  %v788 = vmul.f32 %v519, %v519
  %v789 = vmul.f32 %v524, %v524
  %v790 = vmul.f32 %v529, %v529
  %v791 = vmul.f32 %v534, %v534
  %v792 = vmul.f32 %v539, %v539
  %v793 = vmul.f32 %v544, %v544
  %v794 = vmul.f32 %v549, %v549
  %v795 = vmul.f32 %v554, %v554
  %v796 = vmul.f32 %v559, %v559
  %v797 = vmul.f32 %v564, %v564
  %v798 = vmul.f32 %v569, %v569
  %v799 = vmul.f32 %v574, %v574
  %v800 = vmul.f32 %v579, %v579
  %v801 = vmul.f32 %v584, %v584
  %v802 = vmul.f32 %v589, %v589
  %v803 = vmul.f32 %v594, %v594
  %v804 = vmul.f32 %v599, %v599
  %v805 = vmul.f32 %v604, %v604
  %v806 = vmul.f32 %v609, %v609
  %v807 = vmul.f32 %v614, %v614
  %v808 = vmul.f32 %v619, %v619
  %v809 = vmul.f32 %v624, %v624
  %v810 = vmul.f32 %v629, %v629
  %v811 = vmul.f32 %v634, %v634
  %v812 = vmul.f32 %v639, %v639
  %v813 = vmul.f32 %v644, %v644
  %v814 = vmul.f32 %v649, %v649
  %v815 = vmul.f32 %v654, %v654
  %v816 = vmul.f32 %v659, %v659
  %v817 = vmul.f32 %v664, %v664
  %v818 = vmul.f32 %v669, %v669
  %v819 = vmul.f32 %v674, %v674
  %v820 = vmul.f32 %v679, %v679
  %v821 = vmul.f32 %v684, %v684
  %v822 = vmul.f32 %v689, %v689
  %v823 = vadd.f32 %v759, %v760
  %v824 = vadd.f32 %v823, %v761
  %v825 = vadd.f32 %v824, %v762
  %v826 = vadd.f32 %v825, %v763
  %v827 = vadd.f32 %v826, %v764
  %v828 = vadd.f32 %v827, %v765
  %v829 = vadd.f32 %v828, %v766
  %v830 = vadd.f32 %v829, %v767
  %v831 = vadd.f32 %v830, %v768
  %v832 = vadd.f32 %v831, %v769
  %v833 = vadd.f32 %v832, %v770
  %v834 = vadd.f32 %v833, %v771
  %v835 = vadd.f32 %v834, %v772
  %v836 = vadd.f32 %v835, %v773
  %v837 = vadd.f32 %v836, %v774
  %v838 = vadd.f32 %v837, %v775
  %v839 = vadd.f32 %v838, %v776
  %v840 = vadd.f32 %v839, %v777
  %v841 = vadd.f32 %v840, %v778
  %v842 = vadd.f32 %v841, %v779
  %v843 = vadd.f32 %v842, %v780
  %v844 = vadd.f32 %v843, %v781
  %v845 = vadd.f32 %v844, %v782
  %v846 = vadd.f32 %v845, %v783
  %v847 = vadd.f32 %v846, %v784
  %v848 = vadd.f32 %v847, %v785
  %v849 = vadd.f32 %v848, %v786
  %v850 = vadd.f32 %v849, %v787
  %v851 = vadd.f32 %v850, %v788
  %v852 = vadd.f32 %v851, %v789
  %v853 = vadd.f32 %v852, %v790
  %v854 = vadd.f32 %v853, %v791
  %v855 = vadd.f32 %v854, %v792
  %v856 = vadd.f32 %v855, %v793
  %v857 = vadd.f32 %v856, %v794
  %v858 = vadd.f32 %v857, %v795
  %v859 = vadd.f32 %v858, %v796
  %v860 = vadd.f32 %v859, %v797
  %v861 = vadd.f32 %v860, %v798
  %v862 = vadd.f32 %v861, %v799
  %v863 = vadd.f32 %v862, %v800
  %v864 = vadd.f32 %v863, %v801
  %v865 = vadd.f32 %v864, %v802
  %v866 = vadd.f32 %v865, %v803
  %v867 = vadd.f32 %v866, %v804
  %v868 = vadd.f32 %v867, %v805
  %v869 = vadd.f32 %v868, %v806
  %v870 = vadd.f32 %v869, %v807
  %v871 = vadd.f32 %v870, %v808
  %v872 = vadd.f32 %v871, %v809
  %v873 = vadd.f32 %v872, %v810
  %v874 = vadd.f32 %v873, %v811
  %v875 = vadd.f32 %v874, %v812
  %v876 = vadd.f32 %v875, %v813
  %v877 = vadd.f32 %v876, %v814
  %v878 = vadd.f32 %v877, %v815
  %v879 = vadd.f32 %v878, %v816
  %v880 = vadd.f32 %v879, %v817
  %v881 = vadd.f32 %v880, %v818
  %v882 = vadd.f32 %v881, %v819
  %v883 = vadd.f32 %v882, %v820
  %v884 = vadd.f32 %v883, %v821
  %v885 = vadd.f32 %v884, %v822
  %v886 = vadd.f32 %v758, %v885
  %887 = vst [vmem:[%s3] sm:$0xff] %v886
  // Predicated region
  $region14: #{conv2d_attn.3} parent=0 // pred_check
    _
  $region15: #{conv2d_attn.3} parent=0 // pred_check_branch
    %889 = sbr.rel (0) target = $region17
  $region16: #{conv2d_attn.3} parent=0 // pred_region
    _
  $region17: #{conv2d_attn.3} parent=0 // pred_fallthru
    _
  // Predicated region
  $region18: #{conv2d_attn.3} parent=0 // pred_check
    _
  $region19: #{conv2d_attn.3} parent=0 // pred_check_branch
    %891 = sbr.rel (0) target = $region21
  $region20: #{conv2d_attn.3} parent=0 // pred_region
    _
  $region21: #{conv2d_attn.3} parent=0 // pred_fallthru
    _
  // Predicated region
  $region22: #{conv2d_attn.3} parent=0 // pred_check
    _
  $region23: #{conv2d_attn.3} parent=0 // pred_check_branch
    %893 = sbr.rel (0) target = $region25
  $region24: #{conv2d_attn.3} parent=0 // pred_region
    _
  $region25: #{conv2d_attn.3} parent=0 // pred_fallthru
    _
  // Predicated region
  $region26: #{conv2d_attn.3} parent=0 // pred_check
    _
  $region27: #{conv2d_attn.3} parent=0 // pred_check_branch
    %895 = sbr.rel (0) target = $region29
  $region28: #{conv2d_attn.3} parent=0 // pred_region
    _
  $region29: #{conv2d_attn.3} parent=0 // pred_fallthru
    _

// kernel: conv2d_attn.4
$region0: #{conv2d_attn.4}
  #allocation0 [shape = 'u32[]', space=smem, size = 0x4, offset = 0x4, fixed_abs, tag = 'smem constant byte address 0x4 - core index']
  #allocation1 [shape = 'u32[144,128]{1,0:T(1,128)}', space=vmem, size = 0x12000, scoped, tag = 'internal scratch']
  %s0 = inlined_call_operand.vmem [shape: f32[512,36], index: 0, kind: input, shape index: {}]
  %s1 = inlined_call_operand.vmem [shape: f32[36,128], index: 1, kind: input, shape index: {}]
  %s2 = inlined_call_operand.vmem [shape: f32[2,128], index: 2, kind: input, shape index: {}]
  %s3 = inlined_call_operand.vmem [shape: f32[128,128], index: 3, kind: input, shape index: {}]
  %s4 = inlined_call_operand.vmem [shape: f32[8,128], index: 4, kind: output, shape index: {0}]
  %s5 = inlined_call_operand.vmem [shape: f32[8,128], index: 5, kind: output, shape index: {1}]
  %6 = xla_tuple %s4, %s5
  %s7 = sld [smem:[#allocation0]]
  $region38: #{conv2d_attn.4} parent=0
    _
  %s9 = ssub.s32 1, %s7
  %s10 = scalar_select 0, %s9, %s7
  // Predicated region
  $region2: #{conv2d_attn.4} parent=0 // pred_check
    _
  $region3: #{conv2d_attn.4} parent=0 // pred_check_branch
    %12 = sbr.rel (0) target = $region5
  $region4: #{conv2d_attn.4} parent=0 // pred_region
    %s13 = sadd.s32 0, 0
    %s14 = smul.u32 64, %s13
    %p15 = scmp.lt.s32.totalorder %s14, 63
    %s16 = scalar_select %p15, %s14, 63
    %s17 = smul.addr %s16, 8
    %s18 = scalar_lea.vmem %s0, %s17
    %s19 = sadd.s32 0, 0
    %s20 = smul.u32 64, %s19
  $region5: #{conv2d_attn.4} parent=0 // pred_fallthru
    _
  // Predicated region
  $region6: #{conv2d_attn.4} parent=0 // pred_check
    _
  $region7: #{conv2d_attn.4} parent=0 // pred_check_branch
    %22 = sbr.rel (0) target = $region9
  $region8: #{conv2d_attn.4} parent=0 // pred_region
    _
  $region9: #{conv2d_attn.4} parent=0 // pred_fallthru
    _
  // Predicated region
  $region10: #{conv2d_attn.4} parent=0 // pred_check
    _
  $region11: #{conv2d_attn.4} parent=0 // pred_check_branch
    %24 = sbr.rel (0) target = $region13
  $region12: #{conv2d_attn.4} parent=0 // pred_region
    _
  $region13: #{conv2d_attn.4} parent=0 // pred_fallthru
    _
  // Predicated region
  $region14: #{conv2d_attn.4} parent=0 // pred_check
    _
  $region15: #{conv2d_attn.4} parent=0 // pred_check_branch
    %26 = sbr.rel (0) target = $region17
  $region16: #{conv2d_attn.4} parent=0 // pred_region
    _
  $region17: #{conv2d_attn.4} parent=0 // pred_fallthru
    _
  %s27 = sadd.s32 0, 0
  %s28 = smul.u32 64, %s27
  %p29 = scmp.lt.s32.totalorder %s28, 63
  %s30 = scalar_select %p29, %s28, 63
  %s31 = smul.addr %s30, 8
  %s32 = scalar_lea.vmem %s0, %s31
  %s33 = sadd.s32 0, 0
  %s34 = smul.u32 64, %s33
  %p35 = scmp.lt.s32.totalorder %s34, 63
  %s36 = scalar_select %p35, %s34, 63
  %s37 = smul.addr %s36, 8
  %s38 = scalar_lea.vmem %s0, %s37
  %s39 = sadd.s32 0, 0
  %s40 = smul.u32 64, %s39
  %p41 = scmp.eq.s32.totalorder 0, 0
  // Predicated region
  $region18: #{conv2d_attn.4} parent=0 // pred_check
    %p42 = pneg %p41
  $region19: #{conv2d_attn.4} parent=0 // pred_check_branch
    %44 = sbr.rel (%p42) target = $region21
  $region20: #{conv2d_attn.4} parent=0 // pred_region
    %45 = vst [vmem:[%s4] sm:$0xff] 0.0
    %46 = vst [vmem:[%s5] sm:$0xff] 0.0
  $region21: #{conv2d_attn.4} parent=0 // pred_fallthru
    _
  %v47 = vld [vmem:[%s38] sm:$0xff]
  %v48 = vld [vmem:[%s38 + $0x8] sm:$0xff]
  %v49 = vld [vmem:[%s38 + $0x10] sm:$0xff]
  %v50 = vld [vmem:[%s38 + $0x18] sm:$0xff]
  %v51 = vld [vmem:[%s38 + $0x20] sm:$0xff]
  %v52 = vld [vmem:[%s38 + $0x28] sm:$0xff]
  %v53 = vld [vmem:[%s38 + $0x30] sm:$0xff]
  %v54 = vld [vmem:[%s38 + $0x38] sm:$0xff]
  %v55 = vld [vmem:[%s38 + $0x40] sm:$0xff]
  %v56 = vld [vmem:[%s38 + $0x48] sm:$0xff]
  %v57 = vld [vmem:[%s38 + $0x50] sm:$0xff]
  %v58 = vld [vmem:[%s38 + $0x58] sm:$0xff]
  %v59 = vld [vmem:[%s38 + $0x60] sm:$0xff]
  %v60 = vld [vmem:[%s38 + $0x68] sm:$0xff]
  %v61 = vld [vmem:[%s38 + $0x70] sm:$0xff]
  %v62 = vld [vmem:[%s38 + $0x78] sm:$0xff]
  %v63 = vld [vmem:[%s38 + $0x80] sm:$0xff]
  %v64 = vld [vmem:[%s38 + $0x88] sm:$0xff]
  %v65 = vld [vmem:[%s38 + $0x90] sm:$0xff]
  %v66 = vld [vmem:[%s38 + $0x98] sm:$0xff]
  %v67 = vld [vmem:[%s38 + $0xa0] sm:$0xff]
  %v68 = vld [vmem:[%s38 + $0xa8] sm:$0xff]
  %v69 = vld [vmem:[%s38 + $0xb0] sm:$0xff]
  %v70 = vld [vmem:[%s38 + $0xb8] sm:$0xff]
  %v71 = vld [vmem:[%s38 + $0xc0] sm:$0xff]
  %v72 = vld [vmem:[%s38 + $0xc8] sm:$0xff]
  %v73 = vld [vmem:[%s38 + $0xd0] sm:$0xff]
  %v74 = vld [vmem:[%s38 + $0xd8] sm:$0xff]
  %v75 = vld [vmem:[%s38 + $0xe0] sm:$0xff]
  %v76 = vld [vmem:[%s38 + $0xe8] sm:$0xff]
  %v77 = vld [vmem:[%s38 + $0xf0] sm:$0xff]
  %v78 = vld [vmem:[%s38 + $0xf8] sm:$0xff]
  %v79 = vld [vmem:[%s38 + $0x100] sm:$0xff]
  %v80 = vld [vmem:[%s38 + $0x108] sm:$0xff]
  %v81 = vld [vmem:[%s38 + $0x110] sm:$0xff]
  %v82 = vld [vmem:[%s38 + $0x118] sm:$0xff]
  %v83 = vld [vmem:[%s38 + $0x120] sm:$0xff]
  %v84 = vld [vmem:[%s38 + $0x128] sm:$0xff]
  %v85 = vld [vmem:[%s38 + $0x130] sm:$0xff]
  %v86 = vld [vmem:[%s38 + $0x138] sm:$0xff]
  %v87 = vld [vmem:[%s38 + $0x140] sm:$0xff]
  %v88 = vld [vmem:[%s38 + $0x148] sm:$0xff]
  %v89 = vld [vmem:[%s38 + $0x150] sm:$0xff]
  %v90 = vld [vmem:[%s38 + $0x158] sm:$0xff]
  %v91 = vld [vmem:[%s38 + $0x160] sm:$0xff]
  %v92 = vld [vmem:[%s38 + $0x168] sm:$0xff]
  %v93 = vld [vmem:[%s38 + $0x170] sm:$0xff]
  %v94 = vld [vmem:[%s38 + $0x178] sm:$0xff]
  %v95 = vld [vmem:[%s38 + $0x180] sm:$0xff]
  %v96 = vld [vmem:[%s38 + $0x188] sm:$0xff]
  %v97 = vld [vmem:[%s38 + $0x190] sm:$0xff]
  %v98 = vld [vmem:[%s38 + $0x198] sm:$0xff]
  %v99 = vld [vmem:[%s38 + $0x1a0] sm:$0xff]
  %v100 = vld [vmem:[%s38 + $0x1a8] sm:$0xff]
  %v101 = vld [vmem:[%s38 + $0x1b0] sm:$0xff]
  %v102 = vld [vmem:[%s38 + $0x1b8] sm:$0xff]
  %v103 = vld [vmem:[%s38 + $0x1c0] sm:$0xff]
  %v104 = vld [vmem:[%s38 + $0x1c8] sm:$0xff]
  %v105 = vld [vmem:[%s38 + $0x1d0] sm:$0xff]
  %v106 = vld [vmem:[%s38 + $0x1d8] sm:$0xff]
  %v107 = vld [vmem:[%s38 + $0x1e0] sm:$0xff]
  %v108 = vld [vmem:[%s38 + $0x1e8] sm:$0xff]
  %v109 = vld [vmem:[%s38 + $0x1f0] sm:$0xff]
  %v110 = vld [vmem:[%s38 + $0x1f8] sm:$0xff]
  %v111 = vld [vmem:[%s1] sm:$0xff]
  %v112 = vld [vmem:[%s1 + $0x8] sm:$0xff]
  %v113 = vld [vmem:[%s1 + $0x10] sm:$0xff]
  %v114 = vld [vmem:[%s1 + $0x18] sm:$0xff]
  %v115 = vld [vmem:[%s1 + $0x20] sm:$0xf]
  %vm116 = vcmask 293888
  %v118 = vsel %vm116, %v47, 0
  %v121 = vsel %vm116, %v48, 0
  %v124 = vsel %vm116, %v49, 0
  %v127 = vsel %vm116, %v50, 0
  %v130 = vsel %vm116, %v51, 0
  %v133 = vsel %vm116, %v52, 0
  %v136 = vsel %vm116, %v53, 0
  %v139 = vsel %vm116, %v54, 0
  %v142 = vsel %vm116, %v55, 0
  %v145 = vsel %vm116, %v56, 0
  %v148 = vsel %vm116, %v57, 0
  %v151 = vsel %vm116, %v58, 0
  %v154 = vsel %vm116, %v59, 0
  %v157 = vsel %vm116, %v60, 0
  %v160 = vsel %vm116, %v61, 0
  %v163 = vsel %vm116, %v62, 0
  %v166 = vsel %vm116, %v63, 0
  %v169 = vsel %vm116, %v64, 0
  %v172 = vsel %vm116, %v65, 0
  %v175 = vsel %vm116, %v66, 0
  %v178 = vsel %vm116, %v67, 0
  %v181 = vsel %vm116, %v68, 0
  %v184 = vsel %vm116, %v69, 0
  %v187 = vsel %vm116, %v70, 0
  %v190 = vsel %vm116, %v71, 0
  %v193 = vsel %vm116, %v72, 0
  %v196 = vsel %vm116, %v73, 0
  %v199 = vsel %vm116, %v74, 0
  %v202 = vsel %vm116, %v75, 0
  %v205 = vsel %vm116, %v76, 0
  %v208 = vsel %vm116, %v77, 0
  %v211 = vsel %vm116, %v78, 0
  %v214 = vsel %vm116, %v79, 0
  %v217 = vsel %vm116, %v80, 0
  %v220 = vsel %vm116, %v81, 0
  %v223 = vsel %vm116, %v82, 0
  %v226 = vsel %vm116, %v83, 0
  %v229 = vsel %vm116, %v84, 0
  %v232 = vsel %vm116, %v85, 0
  %v235 = vsel %vm116, %v86, 0
  %v238 = vsel %vm116, %v87, 0
  %v241 = vsel %vm116, %v88, 0
  %v244 = vsel %vm116, %v89, 0
  %v247 = vsel %vm116, %v90, 0
  %v250 = vsel %vm116, %v91, 0
  %v253 = vsel %vm116, %v92, 0
  %v256 = vsel %vm116, %v93, 0
  %v259 = vsel %vm116, %v94, 0
  %v262 = vsel %vm116, %v95, 0
  %v265 = vsel %vm116, %v96, 0
  %v268 = vsel %vm116, %v97, 0
  %v271 = vsel %vm116, %v98, 0
  %v274 = vsel %vm116, %v99, 0
  %v277 = vsel %vm116, %v100, 0
  %v280 = vsel %vm116, %v101, 0
  %v283 = vsel %vm116, %v102, 0
  %v286 = vsel %vm116, %v103, 0
  %v289 = vsel %vm116, %v104, 0
  %v292 = vsel %vm116, %v105, 0
  %v295 = vsel %vm116, %v106, 0
  %v298 = vsel %vm116, %v107, 0
  %v301 = vsel %vm116, %v108, 0
  %v304 = vsel %vm116, %v109, 0
  %v307 = vsel %vm116, %v110, 0
  %vm309 = vcmask 1043456
  %v311 = vsel %vm309, %v115, 0
  %313 = vmatprep.subr.mxu0 0.0
  %314 = vmatpush1.msra.mxu0 0.0
  %315 = vmatprep.subr.mxu0 0.0
  %316 = vmatpush1.msra.mxu0 0.0
  %317 = vmatprep.subr.mxu0 0.0
  %318 = vmatpush1.msra.mxu0 0.0
  %319 = vmatprep.subr.mxu0 0.0
  %320 = vmatpush1.msra.mxu0 0.0
  %321 = vmatprep.subr.mxu0 0.0
  %322 = vmatpush1.msra.mxu0 0.0
  %323 = vmatprep.subr.mxu0 0.0
  %324 = vmatpush1.msra.mxu0 0.0
  %325 = vmatprep.subr.mxu0 0.0
  %326 = vmatpush1.msra.mxu0 0.0
  %327 = vmatprep.subr.mxu0 0.0
  %328 = vmatpush1.msra.mxu0 0.0
  %329 = vmatprep.subr.mxu0 0.0
  %330 = vmatpush1.msra.mxu0 0.0
  %331 = vmatprep.subr.mxu0 0.0
  %332 = vmatpush1.msra.mxu0 0.0
  %333 = vmatprep.subr.mxu0 0.0
  %334 = vmatpush1.msra.mxu0 0.0
  %335 = vmatprep.subr.mxu0 0.0
  %336 = vmatpush1.msra.mxu0 %v311
  %337 = vmatprep.subr.mxu0 0.0
  %338 = vmatpush1.msra.mxu0 %v114
  %339 = vmatprep.subr.mxu0 0.0
  %340 = vmatpush1.msra.mxu0 %v113
  %341 = vmatprep.subr.mxu0 0.0
  %342 = vmatpush1.msra.mxu0 %v112
  %343 = vmatprep.subr.mxu0 0.0
  %344 = vmatpush1.msra.mxu0 %v111
  %345 = vmatprep.subr.mxu0 0.0
  %346 = vmatpush2.msra.mxu0 0.0
  %347 = vmatprep.subr.mxu0 0.0
  %348 = vmatpush2.msra.mxu0 0.0
  %349 = vmatprep.subr.mxu0 0.0
  %350 = vmatpush2.msra.mxu0 0.0
  %351 = vmatprep.subr.mxu0 0.0
  %352 = vmatpush2.msra.mxu0 0.0
  %353 = vmatprep.subr.mxu0 0.0
  %354 = vmatpush2.msra.mxu0 0.0
  %355 = vmatprep.subr.mxu0 0.0
  %356 = vmatpush2.msra.mxu0 0.0
  %357 = vmatprep.subr.mxu0 0.0
  %358 = vmatpush2.msra.mxu0 0.0
  %359 = vmatprep.subr.mxu0 0.0
  %360 = vmatpush2.msra.mxu0 0.0
  %361 = vmatprep.subr.mxu0 0.0
  %362 = vmatpush2.msra.mxu0 0.0
  %363 = vmatprep.subr.mxu0 0.0
  %364 = vmatpush2.msra.mxu0 0.0
  %365 = vmatprep.subr.mxu0 0.0
  %366 = vmatpush2.msra.mxu0 0.0
  %367 = vmatprep.subr.mxu0 0.0
  %368 = vmatpush2.msra.mxu0 0.0
  %369 = vmatprep.subr.mxu0 0.0
  %370 = vmatpush2.msra.mxu0 0.0
  %371 = vmatprep.subr.mxu0 0.0
  %372 = vmatpush2.msra.mxu0 0.0
  %373 = vmatprep.subr.mxu0 0.0
  %374 = vmatpush2.msra.mxu0 0.0
  %375 = vmatprep.subr.mxu0 0.0
  %376 = vmatpush2.msra.mxu0 0.0
  %377 = vmatprep.mubr.f32.mxu0 0.0
  %378 = vmatmul.mubr.f32.gmra.mxu0 %v118
  %v379 = vpop.f32.mrf.mxu0
  %v380 = vadd.f32 0.0, %v379
  %v381 = vpop.f32.mrf.mxu0
  %382 = vmatprep.mubr.f32.mxu0 0.0
  %383 = vmatmul.mubr.f32.gmra.mxu0 %v121
  %v384 = vpop.f32.mrf.mxu0
  %v385 = vadd.f32 0.0, %v384
  %v386 = vpop.f32.mrf.mxu0
  %387 = vmatprep.mubr.f32.mxu0 0.0
  %388 = vmatmul.mubr.f32.gmra.mxu0 %v124
  %v389 = vpop.f32.mrf.mxu0
  %v390 = vadd.f32 0.0, %v389
  %v391 = vpop.f32.mrf.mxu0
  %392 = vmatprep.mubr.f32.mxu0 0.0
  %393 = vmatmul.mubr.f32.gmra.mxu0 %v127
  %v394 = vpop.f32.mrf.mxu0
  %v395 = vadd.f32 0.0, %v394
  %v396 = vpop.f32.mrf.mxu0
  %397 = vmatprep.mubr.f32.mxu0 0.0
  %398 = vmatmul.mubr.f32.gmra.mxu0 %v130
  %v399 = vpop.f32.mrf.mxu0
  %v400 = vadd.f32 0.0, %v399
  %v401 = vpop.f32.mrf.mxu0
  %402 = vmatprep.mubr.f32.mxu0 0.0
  %403 = vmatmul.mubr.f32.gmra.mxu0 %v133
  %v404 = vpop.f32.mrf.mxu0
  %v405 = vadd.f32 0.0, %v404
  %v406 = vpop.f32.mrf.mxu0
  %407 = vmatprep.mubr.f32.mxu0 0.0
  %408 = vmatmul.mubr.f32.gmra.mxu0 %v136
  %v409 = vpop.f32.mrf.mxu0
  %v410 = vadd.f32 0.0, %v409
  %v411 = vpop.f32.mrf.mxu0
  %412 = vmatprep.mubr.f32.mxu0 0.0
  %413 = vmatmul.mubr.f32.gmra.mxu0 %v139
  %v414 = vpop.f32.mrf.mxu0
  %v415 = vadd.f32 0.0, %v414
  %v416 = vpop.f32.mrf.mxu0
  %417 = vmatprep.mubr.f32.mxu0 0.0
  %418 = vmatmul.mubr.f32.gmra.mxu0 %v142
  %v419 = vpop.f32.mrf.mxu0
  %v420 = vadd.f32 0.0, %v419
  %v421 = vpop.f32.mrf.mxu0
  %422 = vmatprep.mubr.f32.mxu0 0.0
  %423 = vmatmul.mubr.f32.gmra.mxu0 %v145
  %v424 = vpop.f32.mrf.mxu0
  %v425 = vadd.f32 0.0, %v424
  %v426 = vpop.f32.mrf.mxu0
  %427 = vmatprep.mubr.f32.mxu0 0.0
  %428 = vmatmul.mubr.f32.gmra.mxu0 %v148
  %v429 = vpop.f32.mrf.mxu0
  %v430 = vadd.f32 0.0, %v429
  %v431 = vpop.f32.mrf.mxu0
  %432 = vmatprep.mubr.f32.mxu0 0.0
  %433 = vmatmul.mubr.f32.gmra.mxu0 %v151
  %v434 = vpop.f32.mrf.mxu0
  %v435 = vadd.f32 0.0, %v434
  %v436 = vpop.f32.mrf.mxu0
  %437 = vmatprep.mubr.f32.mxu0 0.0
  %438 = vmatmul.mubr.f32.gmra.mxu0 %v154
  %v439 = vpop.f32.mrf.mxu0
  %v440 = vadd.f32 0.0, %v439
  %v441 = vpop.f32.mrf.mxu0
  %442 = vmatprep.mubr.f32.mxu0 0.0
  %443 = vmatmul.mubr.f32.gmra.mxu0 %v157
  %v444 = vpop.f32.mrf.mxu0
  %v445 = vadd.f32 0.0, %v444
  %v446 = vpop.f32.mrf.mxu0
  %447 = vmatprep.mubr.f32.mxu0 0.0
  %448 = vmatmul.mubr.f32.gmra.mxu0 %v160
  %v449 = vpop.f32.mrf.mxu0
  %v450 = vadd.f32 0.0, %v449
  %v451 = vpop.f32.mrf.mxu0
  %452 = vmatprep.mubr.f32.mxu0 0.0
  %453 = vmatmul.mubr.f32.gmra.mxu0 %v163
  %v454 = vpop.f32.mrf.mxu0
  %v455 = vadd.f32 0.0, %v454
  %v456 = vpop.f32.mrf.mxu0
  %457 = vmatprep.mubr.f32.mxu0 0.0
  %458 = vmatmul.mubr.f32.gmra.mxu0 %v166
  %v459 = vpop.f32.mrf.mxu0
  %v460 = vadd.f32 0.0, %v459
  %v461 = vpop.f32.mrf.mxu0
  %462 = vmatprep.mubr.f32.mxu0 0.0
  %463 = vmatmul.mubr.f32.gmra.mxu0 %v169
  %v464 = vpop.f32.mrf.mxu0
  %v465 = vadd.f32 0.0, %v464
  %v466 = vpop.f32.mrf.mxu0
  %467 = vmatprep.mubr.f32.mxu0 0.0
  %468 = vmatmul.mubr.f32.gmra.mxu0 %v172
  %v469 = vpop.f32.mrf.mxu0
  %v470 = vadd.f32 0.0, %v469
  %v471 = vpop.f32.mrf.mxu0
  %472 = vmatprep.mubr.f32.mxu0 0.0
  %473 = vmatmul.mubr.f32.gmra.mxu0 %v175
  %v474 = vpop.f32.mrf.mxu0
  %v475 = vadd.f32 0.0, %v474
  %v476 = vpop.f32.mrf.mxu0
  %477 = vmatprep.mubr.f32.mxu0 0.0
  %478 = vmatmul.mubr.f32.gmra.mxu0 %v178
  %v479 = vpop.f32.mrf.mxu0
  %v480 = vadd.f32 0.0, %v479
  %v481 = vpop.f32.mrf.mxu0
  %482 = vmatprep.mubr.f32.mxu0 0.0
  %483 = vmatmul.mubr.f32.gmra.mxu0 %v181
  %v484 = vpop.f32.mrf.mxu0
  %v485 = vadd.f32 0.0, %v484
  %v486 = vpop.f32.mrf.mxu0
  %487 = vmatprep.mubr.f32.mxu0 0.0
  %488 = vmatmul.mubr.f32.gmra.mxu0 %v184
  %v489 = vpop.f32.mrf.mxu0
  %v490 = vadd.f32 0.0, %v489
  %v491 = vpop.f32.mrf.mxu0
  %492 = vmatprep.mubr.f32.mxu0 0.0
  %493 = vmatmul.mubr.f32.gmra.mxu0 %v187
  %v494 = vpop.f32.mrf.mxu0
  %v495 = vadd.f32 0.0, %v494
  %v496 = vpop.f32.mrf.mxu0
  %497 = vmatprep.mubr.f32.mxu0 0.0
  %498 = vmatmul.mubr.f32.gmra.mxu0 %v190
  %v499 = vpop.f32.mrf.mxu0
  %v500 = vadd.f32 0.0, %v499
  %v501 = vpop.f32.mrf.mxu0
  %502 = vmatprep.mubr.f32.mxu0 0.0
  %503 = vmatmul.mubr.f32.gmra.mxu0 %v193
  %v504 = vpop.f32.mrf.mxu0
  %v505 = vadd.f32 0.0, %v504
  %v506 = vpop.f32.mrf.mxu0
  %507 = vmatprep.mubr.f32.mxu0 0.0
  %508 = vmatmul.mubr.f32.gmra.mxu0 %v196
  %v509 = vpop.f32.mrf.mxu0
  %v510 = vadd.f32 0.0, %v509
  %v511 = vpop.f32.mrf.mxu0
  %512 = vmatprep.mubr.f32.mxu0 0.0
  %513 = vmatmul.mubr.f32.gmra.mxu0 %v199
  %v514 = vpop.f32.mrf.mxu0
  %v515 = vadd.f32 0.0, %v514
  %v516 = vpop.f32.mrf.mxu0
  %517 = vmatprep.mubr.f32.mxu0 0.0
  %518 = vmatmul.mubr.f32.gmra.mxu0 %v202
  %v519 = vpop.f32.mrf.mxu0
  %v520 = vadd.f32 0.0, %v519
  %v521 = vpop.f32.mrf.mxu0
  %522 = vmatprep.mubr.f32.mxu0 0.0
  %523 = vmatmul.mubr.f32.gmra.mxu0 %v205
  %v524 = vpop.f32.mrf.mxu0
  %v525 = vadd.f32 0.0, %v524
  %v526 = vpop.f32.mrf.mxu0
  %527 = vmatprep.mubr.f32.mxu0 0.0
  %528 = vmatmul.mubr.f32.gmra.mxu0 %v208
  %v529 = vpop.f32.mrf.mxu0
  %v530 = vadd.f32 0.0, %v529
  %v531 = vpop.f32.mrf.mxu0
  %532 = vmatprep.mubr.f32.mxu0 0.0
  %533 = vmatmul.mubr.f32.gmra.mxu0 %v211
  %v534 = vpop.f32.mrf.mxu0
  %v535 = vadd.f32 0.0, %v534
  %v536 = vpop.f32.mrf.mxu0
  %537 = vmatprep.mubr.f32.mxu0 0.0
  %538 = vmatmul.mubr.f32.gmra.mxu0 %v214
  %v539 = vpop.f32.mrf.mxu0
  %v540 = vadd.f32 0.0, %v539
  %v541 = vpop.f32.mrf.mxu0
  %542 = vmatprep.mubr.f32.mxu0 0.0
  %543 = vmatmul.mubr.f32.gmra.mxu0 %v217
  %v544 = vpop.f32.mrf.mxu0
  %v545 = vadd.f32 0.0, %v544
  %v546 = vpop.f32.mrf.mxu0
  %547 = vmatprep.mubr.f32.mxu0 0.0
  %548 = vmatmul.mubr.f32.gmra.mxu0 %v220
  %v549 = vpop.f32.mrf.mxu0
  %v550 = vadd.f32 0.0, %v549
  %v551 = vpop.f32.mrf.mxu0
  %552 = vmatprep.mubr.f32.mxu0 0.0
  %553 = vmatmul.mubr.f32.gmra.mxu0 %v223
  %v554 = vpop.f32.mrf.mxu0
  %v555 = vadd.f32 0.0, %v554
  %v556 = vpop.f32.mrf.mxu0
  %557 = vmatprep.mubr.f32.mxu0 0.0
  %558 = vmatmul.mubr.f32.gmra.mxu0 %v226
  %v559 = vpop.f32.mrf.mxu0
  %v560 = vadd.f32 0.0, %v559
  %v561 = vpop.f32.mrf.mxu0
  %562 = vmatprep.mubr.f32.mxu0 0.0
  %563 = vmatmul.mubr.f32.gmra.mxu0 %v229
  %v564 = vpop.f32.mrf.mxu0
  %v565 = vadd.f32 0.0, %v564
  %v566 = vpop.f32.mrf.mxu0
  %567 = vmatprep.mubr.f32.mxu0 0.0
  %568 = vmatmul.mubr.f32.gmra.mxu0 %v232
  %v569 = vpop.f32.mrf.mxu0
  %v570 = vadd.f32 0.0, %v569
  %v571 = vpop.f32.mrf.mxu0
  %572 = vmatprep.mubr.f32.mxu0 0.0
  %573 = vmatmul.mubr.f32.gmra.mxu0 %v235
  %v574 = vpop.f32.mrf.mxu0
  %v575 = vadd.f32 0.0, %v574
  %v576 = vpop.f32.mrf.mxu0
  %577 = vmatprep.mubr.f32.mxu0 0.0
  %578 = vmatmul.mubr.f32.gmra.mxu0 %v238
  %v579 = vpop.f32.mrf.mxu0
  %v580 = vadd.f32 0.0, %v579
  %v581 = vpop.f32.mrf.mxu0
  %582 = vmatprep.mubr.f32.mxu0 0.0
  %583 = vmatmul.mubr.f32.gmra.mxu0 %v241
  %v584 = vpop.f32.mrf.mxu0
  %v585 = vadd.f32 0.0, %v584
  %v586 = vpop.f32.mrf.mxu0
  %587 = vmatprep.mubr.f32.mxu0 0.0
  %588 = vmatmul.mubr.f32.gmra.mxu0 %v244
  %v589 = vpop.f32.mrf.mxu0
  %v590 = vadd.f32 0.0, %v589
  %v591 = vpop.f32.mrf.mxu0
  %592 = vmatprep.mubr.f32.mxu0 0.0
  %593 = vmatmul.mubr.f32.gmra.mxu0 %v247
  %v594 = vpop.f32.mrf.mxu0
  %v595 = vadd.f32 0.0, %v594
  %v596 = vpop.f32.mrf.mxu0
  %597 = vmatprep.mubr.f32.mxu0 0.0
  %598 = vmatmul.mubr.f32.gmra.mxu0 %v250
  %v599 = vpop.f32.mrf.mxu0
  %v600 = vadd.f32 0.0, %v599
  %v601 = vpop.f32.mrf.mxu0
  %602 = vmatprep.mubr.f32.mxu0 0.0
  %603 = vmatmul.mubr.f32.gmra.mxu0 %v253
  %v604 = vpop.f32.mrf.mxu0
  %v605 = vadd.f32 0.0, %v604
  %v606 = vpop.f32.mrf.mxu0
  %607 = vmatprep.mubr.f32.mxu0 0.0
  %608 = vmatmul.mubr.f32.gmra.mxu0 %v256
  %v609 = vpop.f32.mrf.mxu0
  %v610 = vadd.f32 0.0, %v609
  %v611 = vpop.f32.mrf.mxu0
  %612 = vmatprep.mubr.f32.mxu0 0.0
  %613 = vmatmul.mubr.f32.gmra.mxu0 %v259
  %v614 = vpop.f32.mrf.mxu0
  %v615 = vadd.f32 0.0, %v614
  %v616 = vpop.f32.mrf.mxu0
  %617 = vmatprep.mubr.f32.mxu0 0.0
  %618 = vmatmul.mubr.f32.gmra.mxu0 %v262
  %v619 = vpop.f32.mrf.mxu0
  %v620 = vadd.f32 0.0, %v619
  %v621 = vpop.f32.mrf.mxu0
  %622 = vmatprep.mubr.f32.mxu0 0.0
  %623 = vmatmul.mubr.f32.gmra.mxu0 %v265
  %v624 = vpop.f32.mrf.mxu0
  %v625 = vadd.f32 0.0, %v624
  %v626 = vpop.f32.mrf.mxu0
  %627 = vmatprep.mubr.f32.mxu0 0.0
  %628 = vmatmul.mubr.f32.gmra.mxu0 %v268
  %v629 = vpop.f32.mrf.mxu0
  %v630 = vadd.f32 0.0, %v629
  %v631 = vpop.f32.mrf.mxu0
  %632 = vmatprep.mubr.f32.mxu0 0.0
  %633 = vmatmul.mubr.f32.gmra.mxu0 %v271
  %v634 = vpop.f32.mrf.mxu0
  %v635 = vadd.f32 0.0, %v634
  %v636 = vpop.f32.mrf.mxu0
  %637 = vmatprep.mubr.f32.mxu0 0.0
  %638 = vmatmul.mubr.f32.gmra.mxu0 %v274
  %v639 = vpop.f32.mrf.mxu0
  %v640 = vadd.f32 0.0, %v639
  %v641 = vpop.f32.mrf.mxu0
  %642 = vmatprep.mubr.f32.mxu0 0.0
  %643 = vmatmul.mubr.f32.gmra.mxu0 %v277
  %v644 = vpop.f32.mrf.mxu0
  %v645 = vadd.f32 0.0, %v644
  %v646 = vpop.f32.mrf.mxu0
  %647 = vmatprep.mubr.f32.mxu0 0.0
  %648 = vmatmul.mubr.f32.gmra.mxu0 %v280
  %v649 = vpop.f32.mrf.mxu0
  %v650 = vadd.f32 0.0, %v649
  %v651 = vpop.f32.mrf.mxu0
  %652 = vmatprep.mubr.f32.mxu0 0.0
  %653 = vmatmul.mubr.f32.gmra.mxu0 %v283
  %v654 = vpop.f32.mrf.mxu0
  %v655 = vadd.f32 0.0, %v654
  %v656 = vpop.f32.mrf.mxu0
  %657 = vmatprep.mubr.f32.mxu0 0.0
  %658 = vmatmul.mubr.f32.gmra.mxu0 %v286
  %v659 = vpop.f32.mrf.mxu0
  %v660 = vadd.f32 0.0, %v659
  %v661 = vpop.f32.mrf.mxu0
  %662 = vmatprep.mubr.f32.mxu0 0.0
  %663 = vmatmul.mubr.f32.gmra.mxu0 %v289
  %v664 = vpop.f32.mrf.mxu0
  %v665 = vadd.f32 0.0, %v664
  %v666 = vpop.f32.mrf.mxu0
  %667 = vmatprep.mubr.f32.mxu0 0.0
  %668 = vmatmul.mubr.f32.gmra.mxu0 %v292
  %v669 = vpop.f32.mrf.mxu0
  %v670 = vadd.f32 0.0, %v669
  %v671 = vpop.f32.mrf.mxu0
  %672 = vmatprep.mubr.f32.mxu0 0.0
  %673 = vmatmul.mubr.f32.gmra.mxu0 %v295
  %v674 = vpop.f32.mrf.mxu0
  %v675 = vadd.f32 0.0, %v674
  %v676 = vpop.f32.mrf.mxu0
  %677 = vmatprep.mubr.f32.mxu0 0.0
  %678 = vmatmul.mubr.f32.gmra.mxu0 %v298
  %v679 = vpop.f32.mrf.mxu0
  %v680 = vadd.f32 0.0, %v679
  %v681 = vpop.f32.mrf.mxu0
  %682 = vmatprep.mubr.f32.mxu0 0.0
  %683 = vmatmul.mubr.f32.gmra.mxu0 %v301
  %v684 = vpop.f32.mrf.mxu0
  %v685 = vadd.f32 0.0, %v684
  %v686 = vpop.f32.mrf.mxu0
  %687 = vmatprep.mubr.f32.mxu0 0.0
  %688 = vmatmul.mubr.f32.gmra.mxu0 %v304
  %v689 = vpop.f32.mrf.mxu0
  %v690 = vadd.f32 0.0, %v689
  %v691 = vpop.f32.mrf.mxu0
  %692 = vmatprep.mubr.f32.mxu0 0.0
  %693 = vmatmul.mubr.f32.gmra.mxu0 %v307
  %v694 = vpop.f32.mrf.mxu0
  %v695 = vadd.f32 0.0, %v694
  %v696 = vpop.f32.mrf.mxu0
  %697 = vdwg.mxu0
  %v698 = vld [vmem:[%s2] sm:$0x3]
  %v699 = vlaneseq
  %v700 = vshrl.u32 %v699, 7
  %v701 = vsub.s32 0, %v700
  %v702 = vrot.slane %v698, %v701
  %v703 = vmul.f32 %v380, %v702
  %v704 = vmul.f32 %v385, %v702
  %v705 = vmul.f32 %v390, %v702
  %v706 = vmul.f32 %v395, %v702
  %v707 = vmul.f32 %v400, %v702
  %v708 = vmul.f32 %v405, %v702
  %v709 = vmul.f32 %v410, %v702
  %v710 = vmul.f32 %v415, %v702
  %v711 = vmul.f32 %v420, %v702
  %v712 = vmul.f32 %v425, %v702
  %v713 = vmul.f32 %v430, %v702
  %v714 = vmul.f32 %v435, %v702
  %v715 = vmul.f32 %v440, %v702
  %v716 = vmul.f32 %v445, %v702
  %v717 = vmul.f32 %v450, %v702
  %v718 = vmul.f32 %v455, %v702
  %v719 = vmul.f32 %v460, %v702
  %v720 = vmul.f32 %v465, %v702
  %v721 = vmul.f32 %v470, %v702
  %v722 = vmul.f32 %v475, %v702
  %v723 = vmul.f32 %v480, %v702
  %v724 = vmul.f32 %v485, %v702
  %v725 = vmul.f32 %v490, %v702
  %v726 = vmul.f32 %v495, %v702
  %v727 = vmul.f32 %v500, %v702
  %v728 = vmul.f32 %v505, %v702
  %v729 = vmul.f32 %v510, %v702
  %v730 = vmul.f32 %v515, %v702
  %v731 = vmul.f32 %v520, %v702
  %v732 = vmul.f32 %v525, %v702
  %v733 = vmul.f32 %v530, %v702
  %v734 = vmul.f32 %v535, %v702
  %v735 = vmul.f32 %v540, %v702
  %v736 = vmul.f32 %v545, %v702
  %v737 = vmul.f32 %v550, %v702
  %v738 = vmul.f32 %v555, %v702
  %v739 = vmul.f32 %v560, %v702
  %v740 = vmul.f32 %v565, %v702
  %v741 = vmul.f32 %v570, %v702
  %v742 = vmul.f32 %v575, %v702
  %v743 = vmul.f32 %v580, %v702
  %v744 = vmul.f32 %v585, %v702
  %v745 = vmul.f32 %v590, %v702
  %v746 = vmul.f32 %v595, %v702
  %v747 = vmul.f32 %v600, %v702
  %v748 = vmul.f32 %v605, %v702
  %v749 = vmul.f32 %v610, %v702
  %v750 = vmul.f32 %v615, %v702
  %v751 = vmul.f32 %v620, %v702
  %v752 = vmul.f32 %v625, %v702
  %v753 = vmul.f32 %v630, %v702
  %v754 = vmul.f32 %v635, %v702
  %v755 = vmul.f32 %v640, %v702
  %v756 = vmul.f32 %v645, %v702
  %v757 = vmul.f32 %v650, %v702
  %v758 = vmul.f32 %v655, %v702
  %v759 = vmul.f32 %v660, %v702
  %v760 = vmul.f32 %v665, %v702
  %v761 = vmul.f32 %v670, %v702
  %v762 = vmul.f32 %v675, %v702
  %v763 = vmul.f32 %v680, %v702
  %v764 = vmul.f32 %v685, %v702
  %v765 = vmul.f32 %v690, %v702
  %v766 = vmul.f32 %v695, %v702
  %v767 = vlaneseq
  %v768 = vshrl.u32 %v767, 7
  %v769 = vsub.s32 1, %v768
  %v770 = vrot.slane %v698, %v769
  %v771 = vadd.f32 %v703, %v770
  %v772 = vadd.f32 %v704, %v770
  %v773 = vadd.f32 %v705, %v770
  %v774 = vadd.f32 %v706, %v770
  %v775 = vadd.f32 %v707, %v770
  %v776 = vadd.f32 %v708, %v770
  %v777 = vadd.f32 %v709, %v770
  %v778 = vadd.f32 %v710, %v770
  %v779 = vadd.f32 %v711, %v770
  %v780 = vadd.f32 %v712, %v770
  %v781 = vadd.f32 %v713, %v770
  %v782 = vadd.f32 %v714, %v770
  %v783 = vadd.f32 %v715, %v770
  %v784 = vadd.f32 %v716, %v770
  %v785 = vadd.f32 %v717, %v770
  %v786 = vadd.f32 %v718, %v770
  %v787 = vadd.f32 %v719, %v770
  %v788 = vadd.f32 %v720, %v770
  %v789 = vadd.f32 %v721, %v770
  %v790 = vadd.f32 %v722, %v770
  %v791 = vadd.f32 %v723, %v770
  %v792 = vadd.f32 %v724, %v770
  %v793 = vadd.f32 %v725, %v770
  %v794 = vadd.f32 %v726, %v770
  %v795 = vadd.f32 %v727, %v770
  %v796 = vadd.f32 %v728, %v770
  %v797 = vadd.f32 %v729, %v770
  %v798 = vadd.f32 %v730, %v770
  %v799 = vadd.f32 %v731, %v770
  %v800 = vadd.f32 %v732, %v770
  %v801 = vadd.f32 %v733, %v770
  %v802 = vadd.f32 %v734, %v770
  %v803 = vadd.f32 %v735, %v770
  %v804 = vadd.f32 %v736, %v770
  %v805 = vadd.f32 %v737, %v770
  %v806 = vadd.f32 %v738, %v770
  %v807 = vadd.f32 %v739, %v770
  %v808 = vadd.f32 %v740, %v770
  %v809 = vadd.f32 %v741, %v770
  %v810 = vadd.f32 %v742, %v770
  %v811 = vadd.f32 %v743, %v770
  %v812 = vadd.f32 %v744, %v770
  %v813 = vadd.f32 %v745, %v770
  %v814 = vadd.f32 %v746, %v770
  %v815 = vadd.f32 %v747, %v770
  %v816 = vadd.f32 %v748, %v770
  %v817 = vadd.f32 %v749, %v770
  %v818 = vadd.f32 %v750, %v770
  %v819 = vadd.f32 %v751, %v770
  %v820 = vadd.f32 %v752, %v770
  %v821 = vadd.f32 %v753, %v770
  %v822 = vadd.f32 %v754, %v770
  %v823 = vadd.f32 %v755, %v770
  %v824 = vadd.f32 %v756, %v770
  %v825 = vadd.f32 %v757, %v770
  %v826 = vadd.f32 %v758, %v770
  %v827 = vadd.f32 %v759, %v770
  %v828 = vadd.f32 %v760, %v770
  %v829 = vadd.f32 %v761, %v770
  %v830 = vadd.f32 %v762, %v770
  %v831 = vadd.f32 %v763, %v770
  %v832 = vadd.f32 %v764, %v770
  %v833 = vadd.f32 %v765, %v770
  %v834 = vadd.f32 %v766, %v770
  %v835 = vmax.f32 %v771, 0.0
  %v836 = vmax.f32 %v772, 0.0
  %v837 = vmax.f32 %v773, 0.0
  %v838 = vmax.f32 %v774, 0.0
  %v839 = vmax.f32 %v775, 0.0
  %v840 = vmax.f32 %v776, 0.0
  %v841 = vmax.f32 %v777, 0.0
  %v842 = vmax.f32 %v778, 0.0
  %v843 = vmax.f32 %v779, 0.0
  %v844 = vmax.f32 %v780, 0.0
  %v845 = vmax.f32 %v781, 0.0
  %v846 = vmax.f32 %v782, 0.0
  %v847 = vmax.f32 %v783, 0.0
  %v848 = vmax.f32 %v784, 0.0
  %v849 = vmax.f32 %v785, 0.0
  %v850 = vmax.f32 %v786, 0.0
  %v851 = vmax.f32 %v787, 0.0
  %v852 = vmax.f32 %v788, 0.0
  %v853 = vmax.f32 %v789, 0.0
  %v854 = vmax.f32 %v790, 0.0
  %v855 = vmax.f32 %v791, 0.0
  %v856 = vmax.f32 %v792, 0.0
  %v857 = vmax.f32 %v793, 0.0
  %v858 = vmax.f32 %v794, 0.0
  %v859 = vmax.f32 %v795, 0.0
  %v860 = vmax.f32 %v796, 0.0
  %v861 = vmax.f32 %v797, 0.0
  %v862 = vmax.f32 %v798, 0.0
  %v863 = vmax.f32 %v799, 0.0
  %v864 = vmax.f32 %v800, 0.0
  %v865 = vmax.f32 %v801, 0.0
  %v866 = vmax.f32 %v802, 0.0
  %v867 = vmax.f32 %v803, 0.0
  %v868 = vmax.f32 %v804, 0.0
  %v869 = vmax.f32 %v805, 0.0
  %v870 = vmax.f32 %v806, 0.0
  %v871 = vmax.f32 %v807, 0.0
  %v872 = vmax.f32 %v808, 0.0
  %v873 = vmax.f32 %v809, 0.0
  %v874 = vmax.f32 %v810, 0.0
  %v875 = vmax.f32 %v811, 0.0
  %v876 = vmax.f32 %v812, 0.0
  %v877 = vmax.f32 %v813, 0.0
  %v878 = vmax.f32 %v814, 0.0
  %v879 = vmax.f32 %v815, 0.0
  %v880 = vmax.f32 %v816, 0.0
  %v881 = vmax.f32 %v817, 0.0
  %v882 = vmax.f32 %v818, 0.0
  %v883 = vmax.f32 %v819, 0.0
  %v884 = vmax.f32 %v820, 0.0
  %v885 = vmax.f32 %v821, 0.0
  %v886 = vmax.f32 %v822, 0.0
  %v887 = vmax.f32 %v823, 0.0
  %v888 = vmax.f32 %v824, 0.0
  %v889 = vmax.f32 %v825, 0.0
  %v890 = vmax.f32 %v826, 0.0
  %v891 = vmax.f32 %v827, 0.0
  %v892 = vmax.f32 %v828, 0.0
  %v893 = vmax.f32 %v829, 0.0
  %v894 = vmax.f32 %v830, 0.0
  %v895 = vmax.f32 %v831, 0.0
  %v896 = vmax.f32 %v832, 0.0
  %v897 = vmax.f32 %v833, 0.0
  %v898 = vmax.f32 %v834, 0.0
  %v899 = vld [vmem:[%s3] sm:$0xff]
  %v900 = vld [vmem:[%s3 + $0x8] sm:$0xff]
  %v901 = vld [vmem:[%s3 + $0x10] sm:$0xff]
  %v902 = vld [vmem:[%s3 + $0x18] sm:$0xff]
  %v903 = vld [vmem:[%s3 + $0x20] sm:$0xff]
  %v904 = vld [vmem:[%s3 + $0x28] sm:$0xff]
  %v905 = vld [vmem:[%s3 + $0x30] sm:$0xff]
  %v906 = vld [vmem:[%s3 + $0x38] sm:$0xff]
  %v907 = vld [vmem:[%s3 + $0x40] sm:$0xff]
  %v908 = vld [vmem:[%s3 + $0x48] sm:$0xff]
  %v909 = vld [vmem:[%s3 + $0x50] sm:$0xff]
  %v910 = vld [vmem:[%s3 + $0x58] sm:$0xff]
  %v911 = vld [vmem:[%s3 + $0x60] sm:$0xff]
  %v912 = vld [vmem:[%s3 + $0x68] sm:$0xff]
  %v913 = vld [vmem:[%s3 + $0x70] sm:$0xff]
  %v914 = vld [vmem:[%s3 + $0x78] sm:$0xff]
  %915 = vmatprep.subr.mxu0 0.0
  %916 = vmatpush1.msra.mxu0 %v914
  %917 = vmatprep.subr.mxu0 0.0
  %918 = vmatpush1.msra.mxu0 %v913
  %919 = vmatprep.subr.mxu0 0.0
  %920 = vmatpush1.msra.mxu0 %v912
  %921 = vmatprep.subr.mxu0 0.0
  %922 = vmatpush1.msra.mxu0 %v911
  %923 = vmatprep.subr.mxu0 0.0
  %924 = vmatpush1.msra.mxu0 %v910
  %925 = vmatprep.subr.mxu0 0.0
  %926 = vmatpush1.msra.mxu0 %v909
  %927 = vmatprep.subr.mxu0 0.0
  %928 = vmatpush1.msra.mxu0 %v908
  %929 = vmatprep.subr.mxu0 0.0
  %930 = vmatpush1.msra.mxu0 %v907
  %931 = vmatprep.subr.mxu0 0.0
  %932 = vmatpush1.msra.mxu0 %v906
  %933 = vmatprep.subr.mxu0 0.0
  %934 = vmatpush1.msra.mxu0 %v905
  %935 = vmatprep.subr.mxu0 0.0
  %936 = vmatpush1.msra.mxu0 %v904
  %937 = vmatprep.subr.mxu0 0.0
  %938 = vmatpush1.msra.mxu0 %v903
  %939 = vmatprep.subr.mxu0 0.0
  %940 = vmatpush1.msra.mxu0 %v902
  %941 = vmatprep.subr.mxu0 0.0
  %942 = vmatpush1.msra.mxu0 %v901
  %943 = vmatprep.subr.mxu0 0.0
  %944 = vmatpush1.msra.mxu0 %v900
  %945 = vmatprep.subr.mxu0 0.0
  %946 = vmatpush1.msra.mxu0 %v899
  %947 = vmatprep.subr.mxu0 0.0
  %948 = vmatpush2.msra.mxu0 0.0
  %949 = vmatprep.subr.mxu0 0.0
  %950 = vmatpush2.msra.mxu0 0.0
  %951 = vmatprep.subr.mxu0 0.0
  %952 = vmatpush2.msra.mxu0 0.0
  %953 = vmatprep.subr.mxu0 0.0
  %954 = vmatpush2.msra.mxu0 0.0
  %955 = vmatprep.subr.mxu0 0.0
  %956 = vmatpush2.msra.mxu0 0.0
  %957 = vmatprep.subr.mxu0 0.0
  %958 = vmatpush2.msra.mxu0 0.0
  %959 = vmatprep.subr.mxu0 0.0
  %960 = vmatpush2.msra.mxu0 0.0
  %961 = vmatprep.subr.mxu0 0.0
  %962 = vmatpush2.msra.mxu0 0.0
  %963 = vmatprep.subr.mxu0 0.0
  %964 = vmatpush2.msra.mxu0 0.0
  %965 = vmatprep.subr.mxu0 0.0
  %966 = vmatpush2.msra.mxu0 0.0
  %967 = vmatprep.subr.mxu0 0.0
  %968 = vmatpush2.msra.mxu0 0.0
  %969 = vmatprep.subr.mxu0 0.0
  %970 = vmatpush2.msra.mxu0 0.0
  %971 = vmatprep.subr.mxu0 0.0
  %972 = vmatpush2.msra.mxu0 0.0
  %973 = vmatprep.subr.mxu0 0.0
  %974 = vmatpush2.msra.mxu0 0.0
  %975 = vmatprep.subr.mxu0 0.0
  %976 = vmatpush2.msra.mxu0 0.0
  %977 = vmatprep.subr.mxu0 0.0
  %978 = vmatpush2.msra.mxu0 0.0
  %979 = vmatprep.mubr.f32.mxu0 0.0
  %980 = vmatmul.mubr.f32.gmra.mxu0 %v835
  %v981 = vpop.f32.mrf.mxu0
  %v982 = vadd.f32 0.0, %v981
  %v983 = vpop.f32.mrf.mxu0
  %984 = vmatprep.mubr.f32.mxu0 0.0
  %985 = vmatmul.mubr.f32.gmra.mxu0 %v836
  %v986 = vpop.f32.mrf.mxu0
  %v987 = vadd.f32 0.0, %v986
  %v988 = vpop.f32.mrf.mxu0
  %989 = vmatprep.mubr.f32.mxu0 0.0
  %990 = vmatmul.mubr.f32.gmra.mxu0 %v837
  %v991 = vpop.f32.mrf.mxu0
  %v992 = vadd.f32 0.0, %v991
  %v993 = vpop.f32.mrf.mxu0
  %994 = vmatprep.mubr.f32.mxu0 0.0
  %995 = vmatmul.mubr.f32.gmra.mxu0 %v838
  %v996 = vpop.f32.mrf.mxu0
  %v997 = vadd.f32 0.0, %v996
  %v998 = vpop.f32.mrf.mxu0
  %999 = vmatprep.mubr.f32.mxu0 0.0
  %1000 = vmatmul.mubr.f32.gmra.mxu0 %v839
  %v1001 = vpop.f32.mrf.mxu0
  %v1002 = vadd.f32 0.0, %v1001
  %v1003 = vpop.f32.mrf.mxu0
  %1004 = vmatprep.mubr.f32.mxu0 0.0
  %1005 = vmatmul.mubr.f32.gmra.mxu0 %v840
  %v1006 = vpop.f32.mrf.mxu0
  %v1007 = vadd.f32 0.0, %v1006
  %v1008 = vpop.f32.mrf.mxu0
  %1009 = vmatprep.mubr.f32.mxu0 0.0
  %1010 = vmatmul.mubr.f32.gmra.mxu0 %v841
  %v1011 = vpop.f32.mrf.mxu0
  %v1012 = vadd.f32 0.0, %v1011
  %v1013 = vpop.f32.mrf.mxu0
  %1014 = vmatprep.mubr.f32.mxu0 0.0
  %1015 = vmatmul.mubr.f32.gmra.mxu0 %v842
  %v1016 = vpop.f32.mrf.mxu0
  %v1017 = vadd.f32 0.0, %v1016
  %v1018 = vpop.f32.mrf.mxu0
  %1019 = vmatprep.mubr.f32.mxu0 0.0
  %1020 = vmatmul.mubr.f32.gmra.mxu0 %v843
  %v1021 = vpop.f32.mrf.mxu0
  %v1022 = vadd.f32 0.0, %v1021
  %v1023 = vpop.f32.mrf.mxu0
  %1024 = vmatprep.mubr.f32.mxu0 0.0
  %1025 = vmatmul.mubr.f32.gmra.mxu0 %v844
  %v1026 = vpop.f32.mrf.mxu0
  %v1027 = vadd.f32 0.0, %v1026
  %v1028 = vpop.f32.mrf.mxu0
  %1029 = vmatprep.mubr.f32.mxu0 0.0
  %1030 = vmatmul.mubr.f32.gmra.mxu0 %v845
  %v1031 = vpop.f32.mrf.mxu0
  %v1032 = vadd.f32 0.0, %v1031
  %v1033 = vpop.f32.mrf.mxu0
  %1034 = vmatprep.mubr.f32.mxu0 0.0
  %1035 = vmatmul.mubr.f32.gmra.mxu0 %v846
  %v1036 = vpop.f32.mrf.mxu0
  %v1037 = vadd.f32 0.0, %v1036
  %v1038 = vpop.f32.mrf.mxu0
  %1039 = vmatprep.mubr.f32.mxu0 0.0
  %1040 = vmatmul.mubr.f32.gmra.mxu0 %v847
  %v1041 = vpop.f32.mrf.mxu0
  %v1042 = vadd.f32 0.0, %v1041
  %v1043 = vpop.f32.mrf.mxu0
  %1044 = vmatprep.mubr.f32.mxu0 0.0
  %1045 = vmatmul.mubr.f32.gmra.mxu0 %v848
  %v1046 = vpop.f32.mrf.mxu0
  %v1047 = vadd.f32 0.0, %v1046
  %v1048 = vpop.f32.mrf.mxu0
  %1049 = vmatprep.mubr.f32.mxu0 0.0
  %1050 = vmatmul.mubr.f32.gmra.mxu0 %v849
  %v1051 = vpop.f32.mrf.mxu0
  %v1052 = vadd.f32 0.0, %v1051
  %v1053 = vpop.f32.mrf.mxu0
  %1054 = vmatprep.mubr.f32.mxu0 0.0
  %1055 = vmatmul.mubr.f32.gmra.mxu0 %v850
  %v1056 = vpop.f32.mrf.mxu0
  %v1057 = vadd.f32 0.0, %v1056
  %v1058 = vpop.f32.mrf.mxu0
  %1059 = vmatprep.mubr.f32.mxu0 0.0
  %1060 = vmatmul.mubr.f32.gmra.mxu0 %v851
  %v1061 = vpop.f32.mrf.mxu0
  %v1062 = vadd.f32 0.0, %v1061
  %v1063 = vpop.f32.mrf.mxu0
  %1064 = vmatprep.mubr.f32.mxu0 0.0
  %1065 = vmatmul.mubr.f32.gmra.mxu0 %v852
  %v1066 = vpop.f32.mrf.mxu0
  %v1067 = vadd.f32 0.0, %v1066
  %v1068 = vpop.f32.mrf.mxu0
  %1069 = vmatprep.mubr.f32.mxu0 0.0
  %1070 = vmatmul.mubr.f32.gmra.mxu0 %v853
  %v1071 = vpop.f32.mrf.mxu0
  %v1072 = vadd.f32 0.0, %v1071
  %v1073 = vpop.f32.mrf.mxu0
  %1074 = vmatprep.mubr.f32.mxu0 0.0
  %1075 = vmatmul.mubr.f32.gmra.mxu0 %v854
  %v1076 = vpop.f32.mrf.mxu0
  %v1077 = vadd.f32 0.0, %v1076
  %v1078 = vpop.f32.mrf.mxu0
  %1079 = vmatprep.mubr.f32.mxu0 0.0
  %1080 = vmatmul.mubr.f32.gmra.mxu0 %v855
  %v1081 = vpop.f32.mrf.mxu0
  %v1082 = vadd.f32 0.0, %v1081
  %v1083 = vpop.f32.mrf.mxu0
  %1084 = vmatprep.mubr.f32.mxu0 0.0
  %1085 = vmatmul.mubr.f32.gmra.mxu0 %v856
  %v1086 = vpop.f32.mrf.mxu0
  %v1087 = vadd.f32 0.0, %v1086
  %v1088 = vpop.f32.mrf.mxu0
  %1089 = vmatprep.mubr.f32.mxu0 0.0
  %1090 = vmatmul.mubr.f32.gmra.mxu0 %v857
  %v1091 = vpop.f32.mrf.mxu0
  %v1092 = vadd.f32 0.0, %v1091
  %v1093 = vpop.f32.mrf.mxu0
  %1094 = vmatprep.mubr.f32.mxu0 0.0
  %1095 = vmatmul.mubr.f32.gmra.mxu0 %v858
  %v1096 = vpop.f32.mrf.mxu0
  %v1097 = vadd.f32 0.0, %v1096
  %v1098 = vpop.f32.mrf.mxu0
  %1099 = vmatprep.mubr.f32.mxu0 0.0
  %1100 = vmatmul.mubr.f32.gmra.mxu0 %v859
  %v1101 = vpop.f32.mrf.mxu0
  %v1102 = vadd.f32 0.0, %v1101
  %v1103 = vpop.f32.mrf.mxu0
  %1104 = vmatprep.mubr.f32.mxu0 0.0
  %1105 = vmatmul.mubr.f32.gmra.mxu0 %v860
  %v1106 = vpop.f32.mrf.mxu0
  %v1107 = vadd.f32 0.0, %v1106
  %v1108 = vpop.f32.mrf.mxu0
  %1109 = vmatprep.mubr.f32.mxu0 0.0
  %1110 = vmatmul.mubr.f32.gmra.mxu0 %v861
  %v1111 = vpop.f32.mrf.mxu0
  %v1112 = vadd.f32 0.0, %v1111
  %v1113 = vpop.f32.mrf.mxu0
  %1114 = vmatprep.mubr.f32.mxu0 0.0
  %1115 = vmatmul.mubr.f32.gmra.mxu0 %v862
  %v1116 = vpop.f32.mrf.mxu0
  %v1117 = vadd.f32 0.0, %v1116
  %v1118 = vpop.f32.mrf.mxu0
  %1119 = vmatprep.mubr.f32.mxu0 0.0
  %1120 = vmatmul.mubr.f32.gmra.mxu0 %v863
  %v1121 = vpop.f32.mrf.mxu0
  %v1122 = vadd.f32 0.0, %v1121
  %v1123 = vpop.f32.mrf.mxu0
  %1124 = vmatprep.mubr.f32.mxu0 0.0
  %1125 = vmatmul.mubr.f32.gmra.mxu0 %v864
  %v1126 = vpop.f32.mrf.mxu0
  %v1127 = vadd.f32 0.0, %v1126
  %v1128 = vpop.f32.mrf.mxu0
  %1129 = vmatprep.mubr.f32.mxu0 0.0
  %1130 = vmatmul.mubr.f32.gmra.mxu0 %v865
  %v1131 = vpop.f32.mrf.mxu0
  %v1132 = vadd.f32 0.0, %v1131
  %v1133 = vpop.f32.mrf.mxu0
  %1134 = vmatprep.mubr.f32.mxu0 0.0
  %1135 = vmatmul.mubr.f32.gmra.mxu0 %v866
  %v1136 = vpop.f32.mrf.mxu0
  %v1137 = vadd.f32 0.0, %v1136
  %v1138 = vpop.f32.mrf.mxu0
  %1139 = vmatprep.mubr.f32.mxu0 0.0
  %1140 = vmatmul.mubr.f32.gmra.mxu0 %v867
  %v1141 = vpop.f32.mrf.mxu0
  %v1142 = vadd.f32 0.0, %v1141
  %v1143 = vpop.f32.mrf.mxu0
  %1144 = vmatprep.mubr.f32.mxu0 0.0
  %1145 = vmatmul.mubr.f32.gmra.mxu0 %v868
  %v1146 = vpop.f32.mrf.mxu0
  %v1147 = vadd.f32 0.0, %v1146
  %v1148 = vpop.f32.mrf.mxu0
  %1149 = vmatprep.mubr.f32.mxu0 0.0
  %1150 = vmatmul.mubr.f32.gmra.mxu0 %v869
  %v1151 = vpop.f32.mrf.mxu0
  %v1152 = vadd.f32 0.0, %v1151
  %v1153 = vpop.f32.mrf.mxu0
  %1154 = vmatprep.mubr.f32.mxu0 0.0
  %1155 = vmatmul.mubr.f32.gmra.mxu0 %v870
  %v1156 = vpop.f32.mrf.mxu0
  %v1157 = vadd.f32 0.0, %v1156
  %v1158 = vpop.f32.mrf.mxu0
  %1159 = vmatprep.mubr.f32.mxu0 0.0
  %1160 = vmatmul.mubr.f32.gmra.mxu0 %v871
  %v1161 = vpop.f32.mrf.mxu0
  %v1162 = vadd.f32 0.0, %v1161
  %v1163 = vpop.f32.mrf.mxu0
  %1164 = vmatprep.mubr.f32.mxu0 0.0
  %1165 = vmatmul.mubr.f32.gmra.mxu0 %v872
  %v1166 = vpop.f32.mrf.mxu0
  %v1167 = vadd.f32 0.0, %v1166
  %v1168 = vpop.f32.mrf.mxu0
  %1169 = vmatprep.mubr.f32.mxu0 0.0
  %1170 = vmatmul.mubr.f32.gmra.mxu0 %v873
  %v1171 = vpop.f32.mrf.mxu0
  %v1172 = vadd.f32 0.0, %v1171
  %v1173 = vpop.f32.mrf.mxu0
  %1174 = vmatprep.mubr.f32.mxu0 0.0
  %1175 = vmatmul.mubr.f32.gmra.mxu0 %v874
  %v1176 = vpop.f32.mrf.mxu0
  %v1177 = vadd.f32 0.0, %v1176
  %v1178 = vpop.f32.mrf.mxu0
  %1179 = vmatprep.mubr.f32.mxu0 0.0
  %1180 = vmatmul.mubr.f32.gmra.mxu0 %v875
  %v1181 = vpop.f32.mrf.mxu0
  %v1182 = vadd.f32 0.0, %v1181
  %v1183 = vpop.f32.mrf.mxu0
  %1184 = vmatprep.mubr.f32.mxu0 0.0
  %1185 = vmatmul.mubr.f32.gmra.mxu0 %v876
  %v1186 = vpop.f32.mrf.mxu0
  %v1187 = vadd.f32 0.0, %v1186
  %v1188 = vpop.f32.mrf.mxu0
  %1189 = vmatprep.mubr.f32.mxu0 0.0
  %1190 = vmatmul.mubr.f32.gmra.mxu0 %v877
  %v1191 = vpop.f32.mrf.mxu0
  %v1192 = vadd.f32 0.0, %v1191
  %v1193 = vpop.f32.mrf.mxu0
  %1194 = vmatprep.mubr.f32.mxu0 0.0
  %1195 = vmatmul.mubr.f32.gmra.mxu0 %v878
  %v1196 = vpop.f32.mrf.mxu0
  %v1197 = vadd.f32 0.0, %v1196
  %v1198 = vpop.f32.mrf.mxu0
  %1199 = vmatprep.mubr.f32.mxu0 0.0
  %1200 = vmatmul.mubr.f32.gmra.mxu0 %v879
  %v1201 = vpop.f32.mrf.mxu0
  %v1202 = vadd.f32 0.0, %v1201
  %v1203 = vpop.f32.mrf.mxu0
  %1204 = vmatprep.mubr.f32.mxu0 0.0
  %1205 = vmatmul.mubr.f32.gmra.mxu0 %v880
  %v1206 = vpop.f32.mrf.mxu0
  %v1207 = vadd.f32 0.0, %v1206
  %v1208 = vpop.f32.mrf.mxu0
  %1209 = vmatprep.mubr.f32.mxu0 0.0
  %1210 = vmatmul.mubr.f32.gmra.mxu0 %v881
  %v1211 = vpop.f32.mrf.mxu0
  %v1212 = vadd.f32 0.0, %v1211
  %v1213 = vpop.f32.mrf.mxu0
  %1214 = vmatprep.mubr.f32.mxu0 0.0
  %1215 = vmatmul.mubr.f32.gmra.mxu0 %v882
  %v1216 = vpop.f32.mrf.mxu0
  %v1217 = vadd.f32 0.0, %v1216
  %v1218 = vpop.f32.mrf.mxu0
  %1219 = vmatprep.mubr.f32.mxu0 0.0
  %1220 = vmatmul.mubr.f32.gmra.mxu0 %v883
  %v1221 = vpop.f32.mrf.mxu0
  %v1222 = vadd.f32 0.0, %v1221
  %v1223 = vpop.f32.mrf.mxu0
  %1224 = vmatprep.mubr.f32.mxu0 0.0
  %1225 = vmatmul.mubr.f32.gmra.mxu0 %v884
  %v1226 = vpop.f32.mrf.mxu0
  %v1227 = vadd.f32 0.0, %v1226
  %v1228 = vpop.f32.mrf.mxu0
  %1229 = vmatprep.mubr.f32.mxu0 0.0
  %1230 = vmatmul.mubr.f32.gmra.mxu0 %v885
  %v1231 = vpop.f32.mrf.mxu0
  %v1232 = vadd.f32 0.0, %v1231
  %v1233 = vpop.f32.mrf.mxu0
  %1234 = vmatprep.mubr.f32.mxu0 0.0
  %1235 = vmatmul.mubr.f32.gmra.mxu0 %v886
  %v1236 = vpop.f32.mrf.mxu0
  %v1237 = vadd.f32 0.0, %v1236
  %v1238 = vpop.f32.mrf.mxu0
  %1239 = vmatprep.mubr.f32.mxu0 0.0
  %1240 = vmatmul.mubr.f32.gmra.mxu0 %v887
  %v1241 = vpop.f32.mrf.mxu0
  %v1242 = vadd.f32 0.0, %v1241
  %v1243 = vpop.f32.mrf.mxu0
  %1244 = vmatprep.mubr.f32.mxu0 0.0
  %1245 = vmatmul.mubr.f32.gmra.mxu0 %v888
  %v1246 = vpop.f32.mrf.mxu0
  %v1247 = vadd.f32 0.0, %v1246
  %v1248 = vpop.f32.mrf.mxu0
  %1249 = vmatprep.mubr.f32.mxu0 0.0
  %1250 = vmatmul.mubr.f32.gmra.mxu0 %v889
  %v1251 = vpop.f32.mrf.mxu0
  %v1252 = vadd.f32 0.0, %v1251
  %v1253 = vpop.f32.mrf.mxu0
  %1254 = vmatprep.mubr.f32.mxu0 0.0
  %1255 = vmatmul.mubr.f32.gmra.mxu0 %v890
  %v1256 = vpop.f32.mrf.mxu0
  %v1257 = vadd.f32 0.0, %v1256
  %v1258 = vpop.f32.mrf.mxu0
  %1259 = vmatprep.mubr.f32.mxu0 0.0
  %1260 = vmatmul.mubr.f32.gmra.mxu0 %v891
  %v1261 = vpop.f32.mrf.mxu0
  %v1262 = vadd.f32 0.0, %v1261
  %v1263 = vpop.f32.mrf.mxu0
  %1264 = vmatprep.mubr.f32.mxu0 0.0
  %1265 = vmatmul.mubr.f32.gmra.mxu0 %v892
  %v1266 = vpop.f32.mrf.mxu0
  %v1267 = vadd.f32 0.0, %v1266
  %v1268 = vpop.f32.mrf.mxu0
  %1269 = vmatprep.mubr.f32.mxu0 0.0
  %1270 = vmatmul.mubr.f32.gmra.mxu0 %v893
  %v1271 = vpop.f32.mrf.mxu0
  %v1272 = vadd.f32 0.0, %v1271
  %v1273 = vpop.f32.mrf.mxu0
  %1274 = vmatprep.mubr.f32.mxu0 0.0
  %1275 = vmatmul.mubr.f32.gmra.mxu0 %v894
  %v1276 = vpop.f32.mrf.mxu0
  %v1277 = vadd.f32 0.0, %v1276
  %v1278 = vpop.f32.mrf.mxu0
  %1279 = vmatprep.mubr.f32.mxu0 0.0
  %1280 = vmatmul.mubr.f32.gmra.mxu0 %v895
  %v1281 = vpop.f32.mrf.mxu0
  %v1282 = vadd.f32 0.0, %v1281
  %v1283 = vpop.f32.mrf.mxu0
  %1284 = vmatprep.mubr.f32.mxu0 0.0
  %1285 = vmatmul.mubr.f32.gmra.mxu0 %v896
  %v1286 = vpop.f32.mrf.mxu0
  %v1287 = vadd.f32 0.0, %v1286
  %v1288 = vpop.f32.mrf.mxu0
  %1289 = vmatprep.mubr.f32.mxu0 0.0
  %1290 = vmatmul.mubr.f32.gmra.mxu0 %v897
  %v1291 = vpop.f32.mrf.mxu0
  %v1292 = vadd.f32 0.0, %v1291
  %v1293 = vpop.f32.mrf.mxu0
  %1294 = vmatprep.mubr.f32.mxu0 0.0
  %1295 = vmatmul.mubr.f32.gmra.mxu0 %v898
  %v1296 = vpop.f32.mrf.mxu0
  %v1297 = vadd.f32 0.0, %v1296
  %v1298 = vpop.f32.mrf.mxu0
  %1299 = vdwg.mxu0
  %v1300 = vld [vmem:[%s4] sm:$0xff]
  %v1301 = vadd.f32 %v982, %v987
  %v1302 = vadd.f32 %v1301, %v992
  %v1303 = vadd.f32 %v1302, %v997
  %v1304 = vadd.f32 %v1303, %v1002
  %v1305 = vadd.f32 %v1304, %v1007
  %v1306 = vadd.f32 %v1305, %v1012
  %v1307 = vadd.f32 %v1306, %v1017
  %v1308 = vadd.f32 %v1307, %v1022
  %v1309 = vadd.f32 %v1308, %v1027
  %v1310 = vadd.f32 %v1309, %v1032
  %v1311 = vadd.f32 %v1310, %v1037
  %v1312 = vadd.f32 %v1311, %v1042
  %v1313 = vadd.f32 %v1312, %v1047
  %v1314 = vadd.f32 %v1313, %v1052
  %v1315 = vadd.f32 %v1314, %v1057
  %v1316 = vadd.f32 %v1315, %v1062
  %v1317 = vadd.f32 %v1316, %v1067
  %v1318 = vadd.f32 %v1317, %v1072
  %v1319 = vadd.f32 %v1318, %v1077
  %v1320 = vadd.f32 %v1319, %v1082
  %v1321 = vadd.f32 %v1320, %v1087
  %v1322 = vadd.f32 %v1321, %v1092
  %v1323 = vadd.f32 %v1322, %v1097
  %v1324 = vadd.f32 %v1323, %v1102
  %v1325 = vadd.f32 %v1324, %v1107
  %v1326 = vadd.f32 %v1325, %v1112
  %v1327 = vadd.f32 %v1326, %v1117
  %v1328 = vadd.f32 %v1327, %v1122
  %v1329 = vadd.f32 %v1328, %v1127
  %v1330 = vadd.f32 %v1329, %v1132
  %v1331 = vadd.f32 %v1330, %v1137
  %v1332 = vadd.f32 %v1331, %v1142
  %v1333 = vadd.f32 %v1332, %v1147
  %v1334 = vadd.f32 %v1333, %v1152
  %v1335 = vadd.f32 %v1334, %v1157
  %v1336 = vadd.f32 %v1335, %v1162
  %v1337 = vadd.f32 %v1336, %v1167
  %v1338 = vadd.f32 %v1337, %v1172
  %v1339 = vadd.f32 %v1338, %v1177
  %v1340 = vadd.f32 %v1339, %v1182
  %v1341 = vadd.f32 %v1340, %v1187
  %v1342 = vadd.f32 %v1341, %v1192
  %v1343 = vadd.f32 %v1342, %v1197
  %v1344 = vadd.f32 %v1343, %v1202
  %v1345 = vadd.f32 %v1344, %v1207
  %v1346 = vadd.f32 %v1345, %v1212
  %v1347 = vadd.f32 %v1346, %v1217
  %v1348 = vadd.f32 %v1347, %v1222
  %v1349 = vadd.f32 %v1348, %v1227
  %v1350 = vadd.f32 %v1349, %v1232
  %v1351 = vadd.f32 %v1350, %v1237
  %v1352 = vadd.f32 %v1351, %v1242
  %v1353 = vadd.f32 %v1352, %v1247
  %v1354 = vadd.f32 %v1353, %v1252
  %v1355 = vadd.f32 %v1354, %v1257
  %v1356 = vadd.f32 %v1355, %v1262
  %v1357 = vadd.f32 %v1356, %v1267
  %v1358 = vadd.f32 %v1357, %v1272
  %v1359 = vadd.f32 %v1358, %v1277
  %v1360 = vadd.f32 %v1359, %v1282
  %v1361 = vadd.f32 %v1360, %v1287
  %v1362 = vadd.f32 %v1361, %v1292
  %v1363 = vadd.f32 %v1362, %v1297
  %v1364 = vadd.f32 %v1300, %v1363
  %1365 = vst [vmem:[%s4] sm:$0xff] %v1364
  %v1366 = vld [vmem:[%s5] sm:$0xff]
  %v1367 = vmul.f32 %v982, %v982
  %v1368 = vmul.f32 %v987, %v987
  %v1369 = vmul.f32 %v992, %v992
  %v1370 = vmul.f32 %v997, %v997
  %v1371 = vmul.f32 %v1002, %v1002
  %v1372 = vmul.f32 %v1007, %v1007
  %v1373 = vmul.f32 %v1012, %v1012
  %v1374 = vmul.f32 %v1017, %v1017
  %v1375 = vmul.f32 %v1022, %v1022
  %v1376 = vmul.f32 %v1027, %v1027
  %v1377 = vmul.f32 %v1032, %v1032
  %v1378 = vmul.f32 %v1037, %v1037
  %v1379 = vmul.f32 %v1042, %v1042
  %v1380 = vmul.f32 %v1047, %v1047
  %v1381 = vmul.f32 %v1052, %v1052
  %v1382 = vmul.f32 %v1057, %v1057
  %v1383 = vmul.f32 %v1062, %v1062
  %v1384 = vmul.f32 %v1067, %v1067
  %v1385 = vmul.f32 %v1072, %v1072
  %v1386 = vmul.f32 %v1077, %v1077
  %v1387 = vmul.f32 %v1082, %v1082
  %v1388 = vmul.f32 %v1087, %v1087
  %v1389 = vmul.f32 %v1092, %v1092
  %v1390 = vmul.f32 %v1097, %v1097
  %v1391 = vmul.f32 %v1102, %v1102
  %v1392 = vmul.f32 %v1107, %v1107
  %v1393 = vmul.f32 %v1112, %v1112
  %v1394 = vmul.f32 %v1117, %v1117
  %v1395 = vmul.f32 %v1122, %v1122
  %v1396 = vmul.f32 %v1127, %v1127
  %v1397 = vmul.f32 %v1132, %v1132
  %v1398 = vmul.f32 %v1137, %v1137
  %v1399 = vmul.f32 %v1142, %v1142
  %v1400 = vmul.f32 %v1147, %v1147
  %v1401 = vmul.f32 %v1152, %v1152
  %v1402 = vmul.f32 %v1157, %v1157
  %v1403 = vmul.f32 %v1162, %v1162
  %v1404 = vmul.f32 %v1167, %v1167
  %v1405 = vmul.f32 %v1172, %v1172
  %v1406 = vmul.f32 %v1177, %v1177
  %v1407 = vmul.f32 %v1182, %v1182
  %v1408 = vmul.f32 %v1187, %v1187
  %v1409 = vmul.f32 %v1192, %v1192
  %v1410 = vmul.f32 %v1197, %v1197
  %v1411 = vmul.f32 %v1202, %v1202
  %v1412 = vmul.f32 %v1207, %v1207
  %v1413 = vmul.f32 %v1212, %v1212
  %v1414 = vmul.f32 %v1217, %v1217
  %v1415 = vmul.f32 %v1222, %v1222
  %v1416 = vmul.f32 %v1227, %v1227
  %v1417 = vmul.f32 %v1232, %v1232
  %v1418 = vmul.f32 %v1237, %v1237
  %v1419 = vmul.f32 %v1242, %v1242
  %v1420 = vmul.f32 %v1247, %v1247
  %v1421 = vmul.f32 %v1252, %v1252
  %v1422 = vmul.f32 %v1257, %v1257
  %v1423 = vmul.f32 %v1262, %v1262
  %v1424 = vmul.f32 %v1267, %v1267
  %v1425 = vmul.f32 %v1272, %v1272
  %v1426 = vmul.f32 %v1277, %v1277
  %v1427 = vmul.f32 %v1282, %v1282
  %v1428 = vmul.f32 %v1287, %v1287
  %v1429 = vmul.f32 %v1292, %v1292
  %v1430 = vmul.f32 %v1297, %v1297
  %v1431 = vadd.f32 %v1367, %v1368
  %v1432 = vadd.f32 %v1431, %v1369
  %v1433 = vadd.f32 %v1432, %v1370
  %v1434 = vadd.f32 %v1433, %v1371
  %v1435 = vadd.f32 %v1434, %v1372
  %v1436 = vadd.f32 %v1435, %v1373
  %v1437 = vadd.f32 %v1436, %v1374
  %v1438 = vadd.f32 %v1437, %v1375
  %v1439 = vadd.f32 %v1438, %v1376
  %v1440 = vadd.f32 %v1439, %v1377
  %v1441 = vadd.f32 %v1440, %v1378
  %v1442 = vadd.f32 %v1441, %v1379
  %v1443 = vadd.f32 %v1442, %v1380
  %v1444 = vadd.f32 %v1443, %v1381
  %v1445 = vadd.f32 %v1444, %v1382
  %v1446 = vadd.f32 %v1445, %v1383
  %v1447 = vadd.f32 %v1446, %v1384
  %v1448 = vadd.f32 %v1447, %v1385
  %v1449 = vadd.f32 %v1448, %v1386
  %v1450 = vadd.f32 %v1449, %v1387
  %v1451 = vadd.f32 %v1450, %v1388
  %v1452 = vadd.f32 %v1451, %v1389
  %v1453 = vadd.f32 %v1452, %v1390
  %v1454 = vadd.f32 %v1453, %v1391
  %v1455 = vadd.f32 %v1454, %v1392
  %v1456 = vadd.f32 %v1455, %v1393
  %v1457 = vadd.f32 %v1456, %v1394
  %v1458 = vadd.f32 %v1457, %v1395
  %v1459 = vadd.f32 %v1458, %v1396
  %v1460 = vadd.f32 %v1459, %v1397
  %v1461 = vadd.f32 %v1460, %v1398
  %v1462 = vadd.f32 %v1461, %v1399
  %v1463 = vadd.f32 %v1462, %v1400
  %v1464 = vadd.f32 %v1463, %v1401
  %v1465 = vadd.f32 %v1464, %v1402
  %v1466 = vadd.f32 %v1465, %v1403
  %v1467 = vadd.f32 %v1466, %v1404
  %v1468 = vadd.f32 %v1467, %v1405
  %v1469 = vadd.f32 %v1468, %v1406
  %v1470 = vadd.f32 %v1469, %v1407
  %v1471 = vadd.f32 %v1470, %v1408
  %v1472 = vadd.f32 %v1471, %v1409
  %v1473 = vadd.f32 %v1472, %v1410
  %v1474 = vadd.f32 %v1473, %v1411
  %v1475 = vadd.f32 %v1474, %v1412
  %v1476 = vadd.f32 %v1475, %v1413
  %v1477 = vadd.f32 %v1476, %v1414
  %v1478 = vadd.f32 %v1477, %v1415
  %v1479 = vadd.f32 %v1478, %v1416
  %v1480 = vadd.f32 %v1479, %v1417
  %v1481 = vadd.f32 %v1480, %v1418
  %v1482 = vadd.f32 %v1481, %v1419
  %v1483 = vadd.f32 %v1482, %v1420
  %v1484 = vadd.f32 %v1483, %v1421
  %v1485 = vadd.f32 %v1484, %v1422
  %v1486 = vadd.f32 %v1485, %v1423
  %v1487 = vadd.f32 %v1486, %v1424
  %v1488 = vadd.f32 %v1487, %v1425
  %v1489 = vadd.f32 %v1488, %v1426
  %v1490 = vadd.f32 %v1489, %v1427
  %v1491 = vadd.f32 %v1490, %v1428
  %v1492 = vadd.f32 %v1491, %v1429
  %v1493 = vadd.f32 %v1492, %v1430
  %v1494 = vadd.f32 %v1366, %v1493
  %1495 = vst [vmem:[%s5] sm:$0xff] %v1494
  // Predicated region
  $region22: #{conv2d_attn.4} parent=0 // pred_check
    _
  $region23: #{conv2d_attn.4} parent=0 // pred_check_branch
    %1497 = sbr.rel (0) target = $region25
  $region24: #{conv2d_attn.4} parent=0 // pred_region
    _
  $region25: #{conv2d_attn.4} parent=0 // pred_fallthru
    _
  // Predicated region
  $region26: #{conv2d_attn.4} parent=0 // pred_check
    _
  $region27: #{conv2d_attn.4} parent=0 // pred_check_branch
    %1499 = sbr.rel (0) target = $region29
  $region28: #{conv2d_attn.4} parent=0 // pred_region
    _
  $region29: #{conv2d_attn.4} parent=0 // pred_fallthru
    _
  // Predicated region
  $region30: #{conv2d_attn.4} parent=0 // pred_check
    _
  $region31: #{conv2d_attn.4} parent=0 // pred_check_branch
    %1501 = sbr.rel (0) target = $region33
  $region32: #{conv2d_attn.4} parent=0 // pred_region
    _
  $region33: #{conv2d_attn.4} parent=0 // pred_fallthru
    _
  // Predicated region
  $region34: #{conv2d_attn.4} parent=0 // pred_check
    _
  $region35: #{conv2d_attn.4} parent=0 // pred_check_branch
    %1503 = sbr.rel (0) target = $region37
  $region36: #{conv2d_attn.4} parent=0 // pred_region
    _
  $region37: #{conv2d_attn.4} parent=0 // pred_fallthru
    _

// kernel: conv2d_attn.5
$region0: #{conv2d_attn.5}
  #allocation0 [shape = 'u32[]', space=smem, size = 0x4, offset = 0x4, fixed_abs, tag = 'smem constant byte address 0x4 - core index']
  #allocation1 [shape = 'u32[144,128]{1,0:T(1,128)}', space=vmem, size = 0x12000, scoped, tag = 'internal scratch']
  %s0 = inlined_call_operand.vmem [shape: f32[512,36], index: 0, kind: input, shape index: {}]
  %s1 = inlined_call_operand.vmem [shape: f32[36,128], index: 1, kind: input, shape index: {}]
  %s2 = inlined_call_operand.vmem [shape: f32[4,128], index: 2, kind: input, shape index: {}]
  %s3 = inlined_call_operand.vmem [shape: f32[128,128], index: 3, kind: input, shape index: {}]
  %s4 = inlined_call_operand.vmem [shape: f32[512,128], index: 4, kind: output, shape index: {}]
  %s5 = sld [smem:[#allocation0]]
  $region26: #{conv2d_attn.5} parent=0
    _
  %s7 = ssub.s32 1, %s5
  %s8 = scalar_select 0, %s7, %s5
  // Predicated region
  $region2: #{conv2d_attn.5} parent=0 // pred_check
    _
  $region3: #{conv2d_attn.5} parent=0 // pred_check_branch
    %10 = sbr.rel (0) target = $region5
  $region4: #{conv2d_attn.5} parent=0 // pred_region
    _
  $region5: #{conv2d_attn.5} parent=0 // pred_fallthru
    _
  // Predicated region
  $region6: #{conv2d_attn.5} parent=0 // pred_check
    _
  $region7: #{conv2d_attn.5} parent=0 // pred_check_branch
    %12 = sbr.rel (0) target = $region9
  $region8: #{conv2d_attn.5} parent=0 // pred_region
    _
  $region9: #{conv2d_attn.5} parent=0 // pred_fallthru
    _
  // Predicated region
  $region10: #{conv2d_attn.5} parent=0 // pred_check
    _
  $region11: #{conv2d_attn.5} parent=0 // pred_check_branch
    %14 = sbr.rel (0) target = $region13
  $region12: #{conv2d_attn.5} parent=0 // pred_region
    _
  $region13: #{conv2d_attn.5} parent=0 // pred_fallthru
    _
  // Predicated region
  $region14: #{conv2d_attn.5} parent=0 // pred_check
    _
  $region15: #{conv2d_attn.5} parent=0 // pred_check_branch
    %16 = sbr.rel (0) target = $region17
  $region16: #{conv2d_attn.5} parent=0 // pred_region
    _
  $region17: #{conv2d_attn.5} parent=0 // pred_fallthru
    _
  %v17 = vld [vmem:[%s0] sm:$0xff]
  %v18 = vld [vmem:[%s0 + $0x8] sm:$0xff]
  %v19 = vld [vmem:[%s0 + $0x10] sm:$0xff]
  %v20 = vld [vmem:[%s0 + $0x18] sm:$0xff]
  %v21 = vld [vmem:[%s0 + $0x20] sm:$0xff]
  %v22 = vld [vmem:[%s0 + $0x28] sm:$0xff]
  %v23 = vld [vmem:[%s0 + $0x30] sm:$0xff]
  %v24 = vld [vmem:[%s0 + $0x38] sm:$0xff]
  %v25 = vld [vmem:[%s0 + $0x40] sm:$0xff]
  %v26 = vld [vmem:[%s0 + $0x48] sm:$0xff]
  %v27 = vld [vmem:[%s0 + $0x50] sm:$0xff]
  %v28 = vld [vmem:[%s0 + $0x58] sm:$0xff]
  %v29 = vld [vmem:[%s0 + $0x60] sm:$0xff]
  %v30 = vld [vmem:[%s0 + $0x68] sm:$0xff]
  %v31 = vld [vmem:[%s0 + $0x70] sm:$0xff]
  %v32 = vld [vmem:[%s0 + $0x78] sm:$0xff]
  %v33 = vld [vmem:[%s0 + $0x80] sm:$0xff]
  %v34 = vld [vmem:[%s0 + $0x88] sm:$0xff]
  %v35 = vld [vmem:[%s0 + $0x90] sm:$0xff]
  %v36 = vld [vmem:[%s0 + $0x98] sm:$0xff]
  %v37 = vld [vmem:[%s0 + $0xa0] sm:$0xff]
  %v38 = vld [vmem:[%s0 + $0xa8] sm:$0xff]
  %v39 = vld [vmem:[%s0 + $0xb0] sm:$0xff]
  %v40 = vld [vmem:[%s0 + $0xb8] sm:$0xff]
  %v41 = vld [vmem:[%s0 + $0xc0] sm:$0xff]
  %v42 = vld [vmem:[%s0 + $0xc8] sm:$0xff]
  %v43 = vld [vmem:[%s0 + $0xd0] sm:$0xff]
  %v44 = vld [vmem:[%s0 + $0xd8] sm:$0xff]
  %v45 = vld [vmem:[%s0 + $0xe0] sm:$0xff]
  %v46 = vld [vmem:[%s0 + $0xe8] sm:$0xff]
  %v47 = vld [vmem:[%s0 + $0xf0] sm:$0xff]
  %v48 = vld [vmem:[%s0 + $0xf8] sm:$0xff]
  %v49 = vld [vmem:[%s0 + $0x100] sm:$0xff]
  %v50 = vld [vmem:[%s0 + $0x108] sm:$0xff]
  %v51 = vld [vmem:[%s0 + $0x110] sm:$0xff]
  %v52 = vld [vmem:[%s0 + $0x118] sm:$0xff]
  %v53 = vld [vmem:[%s0 + $0x120] sm:$0xff]
  %v54 = vld [vmem:[%s0 + $0x128] sm:$0xff]
  %v55 = vld [vmem:[%s0 + $0x130] sm:$0xff]
  %v56 = vld [vmem:[%s0 + $0x138] sm:$0xff]
  %v57 = vld [vmem:[%s0 + $0x140] sm:$0xff]
  %v58 = vld [vmem:[%s0 + $0x148] sm:$0xff]
  %v59 = vld [vmem:[%s0 + $0x150] sm:$0xff]
  %v60 = vld [vmem:[%s0 + $0x158] sm:$0xff]
  %v61 = vld [vmem:[%s0 + $0x160] sm:$0xff]
  %v62 = vld [vmem:[%s0 + $0x168] sm:$0xff]
  %v63 = vld [vmem:[%s0 + $0x170] sm:$0xff]
  %v64 = vld [vmem:[%s0 + $0x178] sm:$0xff]
  %v65 = vld [vmem:[%s0 + $0x180] sm:$0xff]
  %v66 = vld [vmem:[%s0 + $0x188] sm:$0xff]
  %v67 = vld [vmem:[%s0 + $0x190] sm:$0xff]
  %v68 = vld [vmem:[%s0 + $0x198] sm:$0xff]
  %v69 = vld [vmem:[%s0 + $0x1a0] sm:$0xff]
  %v70 = vld [vmem:[%s0 + $0x1a8] sm:$0xff]
  %v71 = vld [vmem:[%s0 + $0x1b0] sm:$0xff]
  %v72 = vld [vmem:[%s0 + $0x1b8] sm:$0xff]
  %v73 = vld [vmem:[%s0 + $0x1c0] sm:$0xff]
  %v74 = vld [vmem:[%s0 + $0x1c8] sm:$0xff]
  %v75 = vld [vmem:[%s0 + $0x1d0] sm:$0xff]
  %v76 = vld [vmem:[%s0 + $0x1d8] sm:$0xff]
  %v77 = vld [vmem:[%s0 + $0x1e0] sm:$0xff]
  %v78 = vld [vmem:[%s0 + $0x1e8] sm:$0xff]
  %v79 = vld [vmem:[%s0 + $0x1f0] sm:$0xff]
  %v80 = vld [vmem:[%s0 + $0x1f8] sm:$0xff]
  %v81 = vld [vmem:[%s1] sm:$0xff]
  %v82 = vld [vmem:[%s1 + $0x8] sm:$0xff]
  %v83 = vld [vmem:[%s1 + $0x10] sm:$0xff]
  %v84 = vld [vmem:[%s1 + $0x18] sm:$0xff]
  %v85 = vld [vmem:[%s1 + $0x20] sm:$0xf]
  %vm86 = vcmask 293888
  %v88 = vsel %vm86, %v17, 0
  %v91 = vsel %vm86, %v18, 0
  %v94 = vsel %vm86, %v19, 0
  %v97 = vsel %vm86, %v20, 0
  %v100 = vsel %vm86, %v21, 0
  %v103 = vsel %vm86, %v22, 0
  %v106 = vsel %vm86, %v23, 0
  %v109 = vsel %vm86, %v24, 0
  %v112 = vsel %vm86, %v25, 0
  %v115 = vsel %vm86, %v26, 0
  %v118 = vsel %vm86, %v27, 0
  %v121 = vsel %vm86, %v28, 0
  %v124 = vsel %vm86, %v29, 0
  %v127 = vsel %vm86, %v30, 0
  %v130 = vsel %vm86, %v31, 0
  %v133 = vsel %vm86, %v32, 0
  %v136 = vsel %vm86, %v33, 0
  %v139 = vsel %vm86, %v34, 0
  %v142 = vsel %vm86, %v35, 0
  %v145 = vsel %vm86, %v36, 0
  %v148 = vsel %vm86, %v37, 0
  %v151 = vsel %vm86, %v38, 0
  %v154 = vsel %vm86, %v39, 0
  %v157 = vsel %vm86, %v40, 0
  %v160 = vsel %vm86, %v41, 0
  %v163 = vsel %vm86, %v42, 0
  %v166 = vsel %vm86, %v43, 0
  %v169 = vsel %vm86, %v44, 0
  %v172 = vsel %vm86, %v45, 0
  %v175 = vsel %vm86, %v46, 0
  %v178 = vsel %vm86, %v47, 0
  %v181 = vsel %vm86, %v48, 0
  %v184 = vsel %vm86, %v49, 0
  %v187 = vsel %vm86, %v50, 0
  %v190 = vsel %vm86, %v51, 0
  %v193 = vsel %vm86, %v52, 0
  %v196 = vsel %vm86, %v53, 0
  %v199 = vsel %vm86, %v54, 0
  %v202 = vsel %vm86, %v55, 0
  %v205 = vsel %vm86, %v56, 0
  %v208 = vsel %vm86, %v57, 0
  %v211 = vsel %vm86, %v58, 0
  %v214 = vsel %vm86, %v59, 0
  %v217 = vsel %vm86, %v60, 0
  %v220 = vsel %vm86, %v61, 0
  %v223 = vsel %vm86, %v62, 0
  %v226 = vsel %vm86, %v63, 0
  %v229 = vsel %vm86, %v64, 0
  %v232 = vsel %vm86, %v65, 0
  %v235 = vsel %vm86, %v66, 0
  %v238 = vsel %vm86, %v67, 0
  %v241 = vsel %vm86, %v68, 0
  %v244 = vsel %vm86, %v69, 0
  %v247 = vsel %vm86, %v70, 0
  %v250 = vsel %vm86, %v71, 0
  %v253 = vsel %vm86, %v72, 0
  %v256 = vsel %vm86, %v73, 0
  %v259 = vsel %vm86, %v74, 0
  %v262 = vsel %vm86, %v75, 0
  %v265 = vsel %vm86, %v76, 0
  %v268 = vsel %vm86, %v77, 0
  %v271 = vsel %vm86, %v78, 0
  %v274 = vsel %vm86, %v79, 0
  %v277 = vsel %vm86, %v80, 0
  %vm279 = vcmask 1043456
  %v281 = vsel %vm279, %v85, 0
  %283 = vmatprep.subr.mxu0 0.0
  %284 = vmatpush1.msra.mxu0 0.0
  %285 = vmatprep.subr.mxu0 0.0
  %286 = vmatpush1.msra.mxu0 0.0
  %287 = vmatprep.subr.mxu0 0.0
  %288 = vmatpush1.msra.mxu0 0.0
  %289 = vmatprep.subr.mxu0 0.0
  %290 = vmatpush1.msra.mxu0 0.0
  %291 = vmatprep.subr.mxu0 0.0
  %292 = vmatpush1.msra.mxu0 0.0
  %293 = vmatprep.subr.mxu0 0.0
  %294 = vmatpush1.msra.mxu0 0.0
  %295 = vmatprep.subr.mxu0 0.0
  %296 = vmatpush1.msra.mxu0 0.0
  %297 = vmatprep.subr.mxu0 0.0
  %298 = vmatpush1.msra.mxu0 0.0
  %299 = vmatprep.subr.mxu0 0.0
  %300 = vmatpush1.msra.mxu0 0.0
  %301 = vmatprep.subr.mxu0 0.0
  %302 = vmatpush1.msra.mxu0 0.0
  %303 = vmatprep.subr.mxu0 0.0
  %304 = vmatpush1.msra.mxu0 0.0
  %305 = vmatprep.subr.mxu0 0.0
  %306 = vmatpush1.msra.mxu0 %v281
  %307 = vmatprep.subr.mxu0 0.0
  %308 = vmatpush1.msra.mxu0 %v84
  %309 = vmatprep.subr.mxu0 0.0
  %310 = vmatpush1.msra.mxu0 %v83
  %311 = vmatprep.subr.mxu0 0.0
  %312 = vmatpush1.msra.mxu0 %v82
  %313 = vmatprep.subr.mxu0 0.0
  %314 = vmatpush1.msra.mxu0 %v81
  %315 = vmatprep.subr.mxu0 0.0
  %316 = vmatpush2.msra.mxu0 0.0
  %317 = vmatprep.subr.mxu0 0.0
  %318 = vmatpush2.msra.mxu0 0.0
  %319 = vmatprep.subr.mxu0 0.0
  %320 = vmatpush2.msra.mxu0 0.0
  %321 = vmatprep.subr.mxu0 0.0
  %322 = vmatpush2.msra.mxu0 0.0
  %323 = vmatprep.subr.mxu0 0.0
  %324 = vmatpush2.msra.mxu0 0.0
  %325 = vmatprep.subr.mxu0 0.0
  %326 = vmatpush2.msra.mxu0 0.0
  %327 = vmatprep.subr.mxu0 0.0
  %328 = vmatpush2.msra.mxu0 0.0
  %329 = vmatprep.subr.mxu0 0.0
  %330 = vmatpush2.msra.mxu0 0.0
  %331 = vmatprep.subr.mxu0 0.0
  %332 = vmatpush2.msra.mxu0 0.0
  %333 = vmatprep.subr.mxu0 0.0
  %334 = vmatpush2.msra.mxu0 0.0
  %335 = vmatprep.subr.mxu0 0.0
  %336 = vmatpush2.msra.mxu0 0.0
  %337 = vmatprep.subr.mxu0 0.0
  %338 = vmatpush2.msra.mxu0 0.0
  %339 = vmatprep.subr.mxu0 0.0
  %340 = vmatpush2.msra.mxu0 0.0
  %341 = vmatprep.subr.mxu0 0.0
  %342 = vmatpush2.msra.mxu0 0.0
  %343 = vmatprep.subr.mxu0 0.0
  %344 = vmatpush2.msra.mxu0 0.0
  %345 = vmatprep.subr.mxu0 0.0
  %346 = vmatpush2.msra.mxu0 0.0
  %347 = vmatprep.mubr.f32.mxu0 0.0
  %348 = vmatmul.mubr.f32.gmra.mxu0 %v88
  %v349 = vpop.f32.mrf.mxu0
  %v350 = vadd.f32 0.0, %v349
  %v351 = vpop.f32.mrf.mxu0
  %352 = vmatprep.mubr.f32.mxu0 0.0
  %353 = vmatmul.mubr.f32.gmra.mxu0 %v91
  %v354 = vpop.f32.mrf.mxu0
  %v355 = vadd.f32 0.0, %v354
  %v356 = vpop.f32.mrf.mxu0
  %357 = vmatprep.mubr.f32.mxu0 0.0
  %358 = vmatmul.mubr.f32.gmra.mxu0 %v94
  %v359 = vpop.f32.mrf.mxu0
  %v360 = vadd.f32 0.0, %v359
  %v361 = vpop.f32.mrf.mxu0
  %362 = vmatprep.mubr.f32.mxu0 0.0
  %363 = vmatmul.mubr.f32.gmra.mxu0 %v97
  %v364 = vpop.f32.mrf.mxu0
  %v365 = vadd.f32 0.0, %v364
  %v366 = vpop.f32.mrf.mxu0
  %367 = vmatprep.mubr.f32.mxu0 0.0
  %368 = vmatmul.mubr.f32.gmra.mxu0 %v100
  %v369 = vpop.f32.mrf.mxu0
  %v370 = vadd.f32 0.0, %v369
  %v371 = vpop.f32.mrf.mxu0
  %372 = vmatprep.mubr.f32.mxu0 0.0
  %373 = vmatmul.mubr.f32.gmra.mxu0 %v103
  %v374 = vpop.f32.mrf.mxu0
  %v375 = vadd.f32 0.0, %v374
  %v376 = vpop.f32.mrf.mxu0
  %377 = vmatprep.mubr.f32.mxu0 0.0
  %378 = vmatmul.mubr.f32.gmra.mxu0 %v106
  %v379 = vpop.f32.mrf.mxu0
  %v380 = vadd.f32 0.0, %v379
  %v381 = vpop.f32.mrf.mxu0
  %382 = vmatprep.mubr.f32.mxu0 0.0
  %383 = vmatmul.mubr.f32.gmra.mxu0 %v109
  %v384 = vpop.f32.mrf.mxu0
  %v385 = vadd.f32 0.0, %v384
  %v386 = vpop.f32.mrf.mxu0
  %387 = vmatprep.mubr.f32.mxu0 0.0
  %388 = vmatmul.mubr.f32.gmra.mxu0 %v112
  %v389 = vpop.f32.mrf.mxu0
  %v390 = vadd.f32 0.0, %v389
  %v391 = vpop.f32.mrf.mxu0
  %392 = vmatprep.mubr.f32.mxu0 0.0
  %393 = vmatmul.mubr.f32.gmra.mxu0 %v115
  %v394 = vpop.f32.mrf.mxu0
  %v395 = vadd.f32 0.0, %v394
  %v396 = vpop.f32.mrf.mxu0
  %397 = vmatprep.mubr.f32.mxu0 0.0
  %398 = vmatmul.mubr.f32.gmra.mxu0 %v118
  %v399 = vpop.f32.mrf.mxu0
  %v400 = vadd.f32 0.0, %v399
  %v401 = vpop.f32.mrf.mxu0
  %402 = vmatprep.mubr.f32.mxu0 0.0
  %403 = vmatmul.mubr.f32.gmra.mxu0 %v121
  %v404 = vpop.f32.mrf.mxu0
  %v405 = vadd.f32 0.0, %v404
  %v406 = vpop.f32.mrf.mxu0
  %407 = vmatprep.mubr.f32.mxu0 0.0
  %408 = vmatmul.mubr.f32.gmra.mxu0 %v124
  %v409 = vpop.f32.mrf.mxu0
  %v410 = vadd.f32 0.0, %v409
  %v411 = vpop.f32.mrf.mxu0
  %412 = vmatprep.mubr.f32.mxu0 0.0
  %413 = vmatmul.mubr.f32.gmra.mxu0 %v127
  %v414 = vpop.f32.mrf.mxu0
  %v415 = vadd.f32 0.0, %v414
  %v416 = vpop.f32.mrf.mxu0
  %417 = vmatprep.mubr.f32.mxu0 0.0
  %418 = vmatmul.mubr.f32.gmra.mxu0 %v130
  %v419 = vpop.f32.mrf.mxu0
  %v420 = vadd.f32 0.0, %v419
  %v421 = vpop.f32.mrf.mxu0
  %422 = vmatprep.mubr.f32.mxu0 0.0
  %423 = vmatmul.mubr.f32.gmra.mxu0 %v133
  %v424 = vpop.f32.mrf.mxu0
  %v425 = vadd.f32 0.0, %v424
  %v426 = vpop.f32.mrf.mxu0
  %427 = vmatprep.mubr.f32.mxu0 0.0
  %428 = vmatmul.mubr.f32.gmra.mxu0 %v136
  %v429 = vpop.f32.mrf.mxu0
  %v430 = vadd.f32 0.0, %v429
  %v431 = vpop.f32.mrf.mxu0
  %432 = vmatprep.mubr.f32.mxu0 0.0
  %433 = vmatmul.mubr.f32.gmra.mxu0 %v139
  %v434 = vpop.f32.mrf.mxu0
  %v435 = vadd.f32 0.0, %v434
  %v436 = vpop.f32.mrf.mxu0
  %437 = vmatprep.mubr.f32.mxu0 0.0
  %438 = vmatmul.mubr.f32.gmra.mxu0 %v142
  %v439 = vpop.f32.mrf.mxu0
  %v440 = vadd.f32 0.0, %v439
  %v441 = vpop.f32.mrf.mxu0
  %442 = vmatprep.mubr.f32.mxu0 0.0
  %443 = vmatmul.mubr.f32.gmra.mxu0 %v145
  %v444 = vpop.f32.mrf.mxu0
  %v445 = vadd.f32 0.0, %v444
  %v446 = vpop.f32.mrf.mxu0
  %447 = vmatprep.mubr.f32.mxu0 0.0
  %448 = vmatmul.mubr.f32.gmra.mxu0 %v148
  %v449 = vpop.f32.mrf.mxu0
  %v450 = vadd.f32 0.0, %v449
  %v451 = vpop.f32.mrf.mxu0
  %452 = vmatprep.mubr.f32.mxu0 0.0
  %453 = vmatmul.mubr.f32.gmra.mxu0 %v151
  %v454 = vpop.f32.mrf.mxu0
  %v455 = vadd.f32 0.0, %v454
  %v456 = vpop.f32.mrf.mxu0
  %457 = vmatprep.mubr.f32.mxu0 0.0
  %458 = vmatmul.mubr.f32.gmra.mxu0 %v154
  %v459 = vpop.f32.mrf.mxu0
  %v460 = vadd.f32 0.0, %v459
  %v461 = vpop.f32.mrf.mxu0
  %462 = vmatprep.mubr.f32.mxu0 0.0
  %463 = vmatmul.mubr.f32.gmra.mxu0 %v157
  %v464 = vpop.f32.mrf.mxu0
  %v465 = vadd.f32 0.0, %v464
  %v466 = vpop.f32.mrf.mxu0
  %467 = vmatprep.mubr.f32.mxu0 0.0
  %468 = vmatmul.mubr.f32.gmra.mxu0 %v160
  %v469 = vpop.f32.mrf.mxu0
  %v470 = vadd.f32 0.0, %v469
  %v471 = vpop.f32.mrf.mxu0
  %472 = vmatprep.mubr.f32.mxu0 0.0
  %473 = vmatmul.mubr.f32.gmra.mxu0 %v163
  %v474 = vpop.f32.mrf.mxu0
  %v475 = vadd.f32 0.0, %v474
  %v476 = vpop.f32.mrf.mxu0
  %477 = vmatprep.mubr.f32.mxu0 0.0
  %478 = vmatmul.mubr.f32.gmra.mxu0 %v166
  %v479 = vpop.f32.mrf.mxu0
  %v480 = vadd.f32 0.0, %v479
  %v481 = vpop.f32.mrf.mxu0
  %482 = vmatprep.mubr.f32.mxu0 0.0
  %483 = vmatmul.mubr.f32.gmra.mxu0 %v169
  %v484 = vpop.f32.mrf.mxu0
  %v485 = vadd.f32 0.0, %v484
  %v486 = vpop.f32.mrf.mxu0
  %487 = vmatprep.mubr.f32.mxu0 0.0
  %488 = vmatmul.mubr.f32.gmra.mxu0 %v172
  %v489 = vpop.f32.mrf.mxu0
  %v490 = vadd.f32 0.0, %v489
  %v491 = vpop.f32.mrf.mxu0
  %492 = vmatprep.mubr.f32.mxu0 0.0
  %493 = vmatmul.mubr.f32.gmra.mxu0 %v175
  %v494 = vpop.f32.mrf.mxu0
  %v495 = vadd.f32 0.0, %v494
  %v496 = vpop.f32.mrf.mxu0
  %497 = vmatprep.mubr.f32.mxu0 0.0
  %498 = vmatmul.mubr.f32.gmra.mxu0 %v178
  %v499 = vpop.f32.mrf.mxu0
  %v500 = vadd.f32 0.0, %v499
  %v501 = vpop.f32.mrf.mxu0
  %502 = vmatprep.mubr.f32.mxu0 0.0
  %503 = vmatmul.mubr.f32.gmra.mxu0 %v181
  %v504 = vpop.f32.mrf.mxu0
  %v505 = vadd.f32 0.0, %v504
  %v506 = vpop.f32.mrf.mxu0
  %507 = vmatprep.mubr.f32.mxu0 0.0
  %508 = vmatmul.mubr.f32.gmra.mxu0 %v184
  %v509 = vpop.f32.mrf.mxu0
  %v510 = vadd.f32 0.0, %v509
  %v511 = vpop.f32.mrf.mxu0
  %512 = vmatprep.mubr.f32.mxu0 0.0
  %513 = vmatmul.mubr.f32.gmra.mxu0 %v187
  %v514 = vpop.f32.mrf.mxu0
  %v515 = vadd.f32 0.0, %v514
  %v516 = vpop.f32.mrf.mxu0
  %517 = vmatprep.mubr.f32.mxu0 0.0
  %518 = vmatmul.mubr.f32.gmra.mxu0 %v190
  %v519 = vpop.f32.mrf.mxu0
  %v520 = vadd.f32 0.0, %v519
  %v521 = vpop.f32.mrf.mxu0
  %522 = vmatprep.mubr.f32.mxu0 0.0
  %523 = vmatmul.mubr.f32.gmra.mxu0 %v193
  %v524 = vpop.f32.mrf.mxu0
  %v525 = vadd.f32 0.0, %v524
  %v526 = vpop.f32.mrf.mxu0
  %527 = vmatprep.mubr.f32.mxu0 0.0
  %528 = vmatmul.mubr.f32.gmra.mxu0 %v196
  %v529 = vpop.f32.mrf.mxu0
  %v530 = vadd.f32 0.0, %v529
  %v531 = vpop.f32.mrf.mxu0
  %532 = vmatprep.mubr.f32.mxu0 0.0
  %533 = vmatmul.mubr.f32.gmra.mxu0 %v199
  %v534 = vpop.f32.mrf.mxu0
  %v535 = vadd.f32 0.0, %v534
  %v536 = vpop.f32.mrf.mxu0
  %537 = vmatprep.mubr.f32.mxu0 0.0
  %538 = vmatmul.mubr.f32.gmra.mxu0 %v202
  %v539 = vpop.f32.mrf.mxu0
  %v540 = vadd.f32 0.0, %v539
  %v541 = vpop.f32.mrf.mxu0
  %542 = vmatprep.mubr.f32.mxu0 0.0
  %543 = vmatmul.mubr.f32.gmra.mxu0 %v205
  %v544 = vpop.f32.mrf.mxu0
  %v545 = vadd.f32 0.0, %v544
  %v546 = vpop.f32.mrf.mxu0
  %547 = vmatprep.mubr.f32.mxu0 0.0
  %548 = vmatmul.mubr.f32.gmra.mxu0 %v208
  %v549 = vpop.f32.mrf.mxu0
  %v550 = vadd.f32 0.0, %v549
  %v551 = vpop.f32.mrf.mxu0
  %552 = vmatprep.mubr.f32.mxu0 0.0
  %553 = vmatmul.mubr.f32.gmra.mxu0 %v211
  %v554 = vpop.f32.mrf.mxu0
  %v555 = vadd.f32 0.0, %v554
  %v556 = vpop.f32.mrf.mxu0
  %557 = vmatprep.mubr.f32.mxu0 0.0
  %558 = vmatmul.mubr.f32.gmra.mxu0 %v214
  %v559 = vpop.f32.mrf.mxu0
  %v560 = vadd.f32 0.0, %v559
  %v561 = vpop.f32.mrf.mxu0
  %562 = vmatprep.mubr.f32.mxu0 0.0
  %563 = vmatmul.mubr.f32.gmra.mxu0 %v217
  %v564 = vpop.f32.mrf.mxu0
  %v565 = vadd.f32 0.0, %v564
  %v566 = vpop.f32.mrf.mxu0
  %567 = vmatprep.mubr.f32.mxu0 0.0
  %568 = vmatmul.mubr.f32.gmra.mxu0 %v220
  %v569 = vpop.f32.mrf.mxu0
  %v570 = vadd.f32 0.0, %v569
  %v571 = vpop.f32.mrf.mxu0
  %572 = vmatprep.mubr.f32.mxu0 0.0
  %573 = vmatmul.mubr.f32.gmra.mxu0 %v223
  %v574 = vpop.f32.mrf.mxu0
  %v575 = vadd.f32 0.0, %v574
  %v576 = vpop.f32.mrf.mxu0
  %577 = vmatprep.mubr.f32.mxu0 0.0
  %578 = vmatmul.mubr.f32.gmra.mxu0 %v226
  %v579 = vpop.f32.mrf.mxu0
  %v580 = vadd.f32 0.0, %v579
  %v581 = vpop.f32.mrf.mxu0
  %582 = vmatprep.mubr.f32.mxu0 0.0
  %583 = vmatmul.mubr.f32.gmra.mxu0 %v229
  %v584 = vpop.f32.mrf.mxu0
  %v585 = vadd.f32 0.0, %v584
  %v586 = vpop.f32.mrf.mxu0
  %587 = vmatprep.mubr.f32.mxu0 0.0
  %588 = vmatmul.mubr.f32.gmra.mxu0 %v232
  %v589 = vpop.f32.mrf.mxu0
  %v590 = vadd.f32 0.0, %v589
  %v591 = vpop.f32.mrf.mxu0
  %592 = vmatprep.mubr.f32.mxu0 0.0
  %593 = vmatmul.mubr.f32.gmra.mxu0 %v235
  %v594 = vpop.f32.mrf.mxu0
  %v595 = vadd.f32 0.0, %v594
  %v596 = vpop.f32.mrf.mxu0
  %597 = vmatprep.mubr.f32.mxu0 0.0
  %598 = vmatmul.mubr.f32.gmra.mxu0 %v238
  %v599 = vpop.f32.mrf.mxu0
  %v600 = vadd.f32 0.0, %v599
  %v601 = vpop.f32.mrf.mxu0
  %602 = vmatprep.mubr.f32.mxu0 0.0
  %603 = vmatmul.mubr.f32.gmra.mxu0 %v241
  %v604 = vpop.f32.mrf.mxu0
  %v605 = vadd.f32 0.0, %v604
  %v606 = vpop.f32.mrf.mxu0
  %607 = vmatprep.mubr.f32.mxu0 0.0
  %608 = vmatmul.mubr.f32.gmra.mxu0 %v244
  %v609 = vpop.f32.mrf.mxu0
  %v610 = vadd.f32 0.0, %v609
  %v611 = vpop.f32.mrf.mxu0
  %612 = vmatprep.mubr.f32.mxu0 0.0
  %613 = vmatmul.mubr.f32.gmra.mxu0 %v247
  %v614 = vpop.f32.mrf.mxu0
  %v615 = vadd.f32 0.0, %v614
  %v616 = vpop.f32.mrf.mxu0
  %617 = vmatprep.mubr.f32.mxu0 0.0
  %618 = vmatmul.mubr.f32.gmra.mxu0 %v250
  %v619 = vpop.f32.mrf.mxu0
  %v620 = vadd.f32 0.0, %v619
  %v621 = vpop.f32.mrf.mxu0
  %622 = vmatprep.mubr.f32.mxu0 0.0
  %623 = vmatmul.mubr.f32.gmra.mxu0 %v253
  %v624 = vpop.f32.mrf.mxu0
  %v625 = vadd.f32 0.0, %v624
  %v626 = vpop.f32.mrf.mxu0
  %627 = vmatprep.mubr.f32.mxu0 0.0
  %628 = vmatmul.mubr.f32.gmra.mxu0 %v256
  %v629 = vpop.f32.mrf.mxu0
  %v630 = vadd.f32 0.0, %v629
  %v631 = vpop.f32.mrf.mxu0
  %632 = vmatprep.mubr.f32.mxu0 0.0
  %633 = vmatmul.mubr.f32.gmra.mxu0 %v259
  %v634 = vpop.f32.mrf.mxu0
  %v635 = vadd.f32 0.0, %v634
  %v636 = vpop.f32.mrf.mxu0
  %637 = vmatprep.mubr.f32.mxu0 0.0
  %638 = vmatmul.mubr.f32.gmra.mxu0 %v262
  %v639 = vpop.f32.mrf.mxu0
  %v640 = vadd.f32 0.0, %v639
  %v641 = vpop.f32.mrf.mxu0
  %642 = vmatprep.mubr.f32.mxu0 0.0
  %643 = vmatmul.mubr.f32.gmra.mxu0 %v265
  %v644 = vpop.f32.mrf.mxu0
  %v645 = vadd.f32 0.0, %v644
  %v646 = vpop.f32.mrf.mxu0
  %647 = vmatprep.mubr.f32.mxu0 0.0
  %648 = vmatmul.mubr.f32.gmra.mxu0 %v268
  %v649 = vpop.f32.mrf.mxu0
  %v650 = vadd.f32 0.0, %v649
  %v651 = vpop.f32.mrf.mxu0
  %652 = vmatprep.mubr.f32.mxu0 0.0
  %653 = vmatmul.mubr.f32.gmra.mxu0 %v271
  %v654 = vpop.f32.mrf.mxu0
  %v655 = vadd.f32 0.0, %v654
  %v656 = vpop.f32.mrf.mxu0
  %657 = vmatprep.mubr.f32.mxu0 0.0
  %658 = vmatmul.mubr.f32.gmra.mxu0 %v274
  %v659 = vpop.f32.mrf.mxu0
  %v660 = vadd.f32 0.0, %v659
  %v661 = vpop.f32.mrf.mxu0
  %662 = vmatprep.mubr.f32.mxu0 0.0
  %663 = vmatmul.mubr.f32.gmra.mxu0 %v277
  %v664 = vpop.f32.mrf.mxu0
  %v665 = vadd.f32 0.0, %v664
  %v666 = vpop.f32.mrf.mxu0
  %667 = vdwg.mxu0
  %v668 = vld [vmem:[%s2] sm:$0xf]
  %v669 = vlaneseq
  %v670 = vshrl.u32 %v669, 7
  %v671 = vsub.s32 0, %v670
  %v672 = vrot.slane %v668, %v671
  %v673 = vmul.f32 %v350, %v672
  %v674 = vmul.f32 %v355, %v672
  %v675 = vmul.f32 %v360, %v672
  %v676 = vmul.f32 %v365, %v672
  %v677 = vmul.f32 %v370, %v672
  %v678 = vmul.f32 %v375, %v672
  %v679 = vmul.f32 %v380, %v672
  %v680 = vmul.f32 %v385, %v672
  %v681 = vmul.f32 %v390, %v672
  %v682 = vmul.f32 %v395, %v672
  %v683 = vmul.f32 %v400, %v672
  %v684 = vmul.f32 %v405, %v672
  %v685 = vmul.f32 %v410, %v672
  %v686 = vmul.f32 %v415, %v672
  %v687 = vmul.f32 %v420, %v672
  %v688 = vmul.f32 %v425, %v672
  %v689 = vmul.f32 %v430, %v672
  %v690 = vmul.f32 %v435, %v672
  %v691 = vmul.f32 %v440, %v672
  %v692 = vmul.f32 %v445, %v672
  %v693 = vmul.f32 %v450, %v672
  %v694 = vmul.f32 %v455, %v672
  %v695 = vmul.f32 %v460, %v672
  %v696 = vmul.f32 %v465, %v672
  %v697 = vmul.f32 %v470, %v672
  %v698 = vmul.f32 %v475, %v672
  %v699 = vmul.f32 %v480, %v672
  %v700 = vmul.f32 %v485, %v672
  %v701 = vmul.f32 %v490, %v672
  %v702 = vmul.f32 %v495, %v672
  %v703 = vmul.f32 %v500, %v672
  %v704 = vmul.f32 %v505, %v672
  %v705 = vmul.f32 %v510, %v672
  %v706 = vmul.f32 %v515, %v672
  %v707 = vmul.f32 %v520, %v672
  %v708 = vmul.f32 %v525, %v672
  %v709 = vmul.f32 %v530, %v672
  %v710 = vmul.f32 %v535, %v672
  %v711 = vmul.f32 %v540, %v672
  %v712 = vmul.f32 %v545, %v672
  %v713 = vmul.f32 %v550, %v672
  %v714 = vmul.f32 %v555, %v672
  %v715 = vmul.f32 %v560, %v672
  %v716 = vmul.f32 %v565, %v672
  %v717 = vmul.f32 %v570, %v672
  %v718 = vmul.f32 %v575, %v672
  %v719 = vmul.f32 %v580, %v672
  %v720 = vmul.f32 %v585, %v672
  %v721 = vmul.f32 %v590, %v672
  %v722 = vmul.f32 %v595, %v672
  %v723 = vmul.f32 %v600, %v672
  %v724 = vmul.f32 %v605, %v672
  %v725 = vmul.f32 %v610, %v672
  %v726 = vmul.f32 %v615, %v672
  %v727 = vmul.f32 %v620, %v672
  %v728 = vmul.f32 %v625, %v672
  %v729 = vmul.f32 %v630, %v672
  %v730 = vmul.f32 %v635, %v672
  %v731 = vmul.f32 %v640, %v672
  %v732 = vmul.f32 %v645, %v672
  %v733 = vmul.f32 %v650, %v672
  %v734 = vmul.f32 %v655, %v672
  %v735 = vmul.f32 %v660, %v672
  %v736 = vmul.f32 %v665, %v672
  %v737 = vlaneseq
  %v738 = vshrl.u32 %v737, 7
  %v739 = vsub.s32 1, %v738
  %v740 = vrot.slane %v668, %v739
  %v741 = vadd.f32 %v673, %v740
  %v742 = vadd.f32 %v674, %v740
  %v743 = vadd.f32 %v675, %v740
  %v744 = vadd.f32 %v676, %v740
  %v745 = vadd.f32 %v677, %v740
  %v746 = vadd.f32 %v678, %v740
  %v747 = vadd.f32 %v679, %v740
  %v748 = vadd.f32 %v680, %v740
  %v749 = vadd.f32 %v681, %v740
  %v750 = vadd.f32 %v682, %v740
  %v751 = vadd.f32 %v683, %v740
  %v752 = vadd.f32 %v684, %v740
  %v753 = vadd.f32 %v685, %v740
  %v754 = vadd.f32 %v686, %v740
  %v755 = vadd.f32 %v687, %v740
  %v756 = vadd.f32 %v688, %v740
  %v757 = vadd.f32 %v689, %v740
  %v758 = vadd.f32 %v690, %v740
  %v759 = vadd.f32 %v691, %v740
  %v760 = vadd.f32 %v692, %v740
  %v761 = vadd.f32 %v693, %v740
  %v762 = vadd.f32 %v694, %v740
  %v763 = vadd.f32 %v695, %v740
  %v764 = vadd.f32 %v696, %v740
  %v765 = vadd.f32 %v697, %v740
  %v766 = vadd.f32 %v698, %v740
  %v767 = vadd.f32 %v699, %v740
  %v768 = vadd.f32 %v700, %v740
  %v769 = vadd.f32 %v701, %v740
  %v770 = vadd.f32 %v702, %v740
  %v771 = vadd.f32 %v703, %v740
  %v772 = vadd.f32 %v704, %v740
  %v773 = vadd.f32 %v705, %v740
  %v774 = vadd.f32 %v706, %v740
  %v775 = vadd.f32 %v707, %v740
  %v776 = vadd.f32 %v708, %v740
  %v777 = vadd.f32 %v709, %v740
  %v778 = vadd.f32 %v710, %v740
  %v779 = vadd.f32 %v711, %v740
  %v780 = vadd.f32 %v712, %v740
  %v781 = vadd.f32 %v713, %v740
  %v782 = vadd.f32 %v714, %v740
  %v783 = vadd.f32 %v715, %v740
  %v784 = vadd.f32 %v716, %v740
  %v785 = vadd.f32 %v717, %v740
  %v786 = vadd.f32 %v718, %v740
  %v787 = vadd.f32 %v719, %v740
  %v788 = vadd.f32 %v720, %v740
  %v789 = vadd.f32 %v721, %v740
  %v790 = vadd.f32 %v722, %v740
  %v791 = vadd.f32 %v723, %v740
  %v792 = vadd.f32 %v724, %v740
  %v793 = vadd.f32 %v725, %v740
  %v794 = vadd.f32 %v726, %v740
  %v795 = vadd.f32 %v727, %v740
  %v796 = vadd.f32 %v728, %v740
  %v797 = vadd.f32 %v729, %v740
  %v798 = vadd.f32 %v730, %v740
  %v799 = vadd.f32 %v731, %v740
  %v800 = vadd.f32 %v732, %v740
  %v801 = vadd.f32 %v733, %v740
  %v802 = vadd.f32 %v734, %v740
  %v803 = vadd.f32 %v735, %v740
  %v804 = vadd.f32 %v736, %v740
  %v805 = vmax.f32 %v741, 0.0
  %v806 = vmax.f32 %v742, 0.0
  %v807 = vmax.f32 %v743, 0.0
  %v808 = vmax.f32 %v744, 0.0
  %v809 = vmax.f32 %v745, 0.0
  %v810 = vmax.f32 %v746, 0.0
  %v811 = vmax.f32 %v747, 0.0
  %v812 = vmax.f32 %v748, 0.0
  %v813 = vmax.f32 %v749, 0.0
  %v814 = vmax.f32 %v750, 0.0
  %v815 = vmax.f32 %v751, 0.0
  %v816 = vmax.f32 %v752, 0.0
  %v817 = vmax.f32 %v753, 0.0
  %v818 = vmax.f32 %v754, 0.0
  %v819 = vmax.f32 %v755, 0.0
  %v820 = vmax.f32 %v756, 0.0
  %v821 = vmax.f32 %v757, 0.0
  %v822 = vmax.f32 %v758, 0.0
  %v823 = vmax.f32 %v759, 0.0
  %v824 = vmax.f32 %v760, 0.0
  %v825 = vmax.f32 %v761, 0.0
  %v826 = vmax.f32 %v762, 0.0
  %v827 = vmax.f32 %v763, 0.0
  %v828 = vmax.f32 %v764, 0.0
  %v829 = vmax.f32 %v765, 0.0
  %v830 = vmax.f32 %v766, 0.0
  %v831 = vmax.f32 %v767, 0.0
  %v832 = vmax.f32 %v768, 0.0
  %v833 = vmax.f32 %v769, 0.0
  %v834 = vmax.f32 %v770, 0.0
  %v835 = vmax.f32 %v771, 0.0
  %v836 = vmax.f32 %v772, 0.0
  %v837 = vmax.f32 %v773, 0.0
  %v838 = vmax.f32 %v774, 0.0
  %v839 = vmax.f32 %v775, 0.0
  %v840 = vmax.f32 %v776, 0.0
  %v841 = vmax.f32 %v777, 0.0
  %v842 = vmax.f32 %v778, 0.0
  %v843 = vmax.f32 %v779, 0.0
  %v844 = vmax.f32 %v780, 0.0
  %v845 = vmax.f32 %v781, 0.0
  %v846 = vmax.f32 %v782, 0.0
  %v847 = vmax.f32 %v783, 0.0
  %v848 = vmax.f32 %v784, 0.0
  %v849 = vmax.f32 %v785, 0.0
  %v850 = vmax.f32 %v786, 0.0
  %v851 = vmax.f32 %v787, 0.0
  %v852 = vmax.f32 %v788, 0.0
  %v853 = vmax.f32 %v789, 0.0
  %v854 = vmax.f32 %v790, 0.0
  %v855 = vmax.f32 %v791, 0.0
  %v856 = vmax.f32 %v792, 0.0
  %v857 = vmax.f32 %v793, 0.0
  %v858 = vmax.f32 %v794, 0.0
  %v859 = vmax.f32 %v795, 0.0
  %v860 = vmax.f32 %v796, 0.0
  %v861 = vmax.f32 %v797, 0.0
  %v862 = vmax.f32 %v798, 0.0
  %v863 = vmax.f32 %v799, 0.0
  %v864 = vmax.f32 %v800, 0.0
  %v865 = vmax.f32 %v801, 0.0
  %v866 = vmax.f32 %v802, 0.0
  %v867 = vmax.f32 %v803, 0.0
  %v868 = vmax.f32 %v804, 0.0
  %v869 = vld [vmem:[%s3] sm:$0xff]
  %v870 = vld [vmem:[%s3 + $0x8] sm:$0xff]
  %v871 = vld [vmem:[%s3 + $0x10] sm:$0xff]
  %v872 = vld [vmem:[%s3 + $0x18] sm:$0xff]
  %v873 = vld [vmem:[%s3 + $0x20] sm:$0xff]
  %v874 = vld [vmem:[%s3 + $0x28] sm:$0xff]
  %v875 = vld [vmem:[%s3 + $0x30] sm:$0xff]
  %v876 = vld [vmem:[%s3 + $0x38] sm:$0xff]
  %v877 = vld [vmem:[%s3 + $0x40] sm:$0xff]
  %v878 = vld [vmem:[%s3 + $0x48] sm:$0xff]
  %v879 = vld [vmem:[%s3 + $0x50] sm:$0xff]
  %v880 = vld [vmem:[%s3 + $0x58] sm:$0xff]
  %v881 = vld [vmem:[%s3 + $0x60] sm:$0xff]
  %v882 = vld [vmem:[%s3 + $0x68] sm:$0xff]
  %v883 = vld [vmem:[%s3 + $0x70] sm:$0xff]
  %v884 = vld [vmem:[%s3 + $0x78] sm:$0xff]
  %885 = vmatprep.subr.mxu0 0.0
  %886 = vmatpush1.msra.mxu0 %v884
  %887 = vmatprep.subr.mxu0 0.0
  %888 = vmatpush1.msra.mxu0 %v883
  %889 = vmatprep.subr.mxu0 0.0
  %890 = vmatpush1.msra.mxu0 %v882
  %891 = vmatprep.subr.mxu0 0.0
  %892 = vmatpush1.msra.mxu0 %v881
  %893 = vmatprep.subr.mxu0 0.0
  %894 = vmatpush1.msra.mxu0 %v880
  %895 = vmatprep.subr.mxu0 0.0
  %896 = vmatpush1.msra.mxu0 %v879
  %897 = vmatprep.subr.mxu0 0.0
  %898 = vmatpush1.msra.mxu0 %v878
  %899 = vmatprep.subr.mxu0 0.0
  %900 = vmatpush1.msra.mxu0 %v877
  %901 = vmatprep.subr.mxu0 0.0
  %902 = vmatpush1.msra.mxu0 %v876
  %903 = vmatprep.subr.mxu0 0.0
  %904 = vmatpush1.msra.mxu0 %v875
  %905 = vmatprep.subr.mxu0 0.0
  %906 = vmatpush1.msra.mxu0 %v874
  %907 = vmatprep.subr.mxu0 0.0
  %908 = vmatpush1.msra.mxu0 %v873
  %909 = vmatprep.subr.mxu0 0.0
  %910 = vmatpush1.msra.mxu0 %v872
  %911 = vmatprep.subr.mxu0 0.0
  %912 = vmatpush1.msra.mxu0 %v871
  %913 = vmatprep.subr.mxu0 0.0
  %914 = vmatpush1.msra.mxu0 %v870
  %915 = vmatprep.subr.mxu0 0.0
  %916 = vmatpush1.msra.mxu0 %v869
  %917 = vmatprep.subr.mxu0 0.0
  %918 = vmatpush2.msra.mxu0 0.0
  %919 = vmatprep.subr.mxu0 0.0
  %920 = vmatpush2.msra.mxu0 0.0
  %921 = vmatprep.subr.mxu0 0.0
  %922 = vmatpush2.msra.mxu0 0.0
  %923 = vmatprep.subr.mxu0 0.0
  %924 = vmatpush2.msra.mxu0 0.0
  %925 = vmatprep.subr.mxu0 0.0
  %926 = vmatpush2.msra.mxu0 0.0
  %927 = vmatprep.subr.mxu0 0.0
  %928 = vmatpush2.msra.mxu0 0.0
  %929 = vmatprep.subr.mxu0 0.0
  %930 = vmatpush2.msra.mxu0 0.0
  %931 = vmatprep.subr.mxu0 0.0
  %932 = vmatpush2.msra.mxu0 0.0
  %933 = vmatprep.subr.mxu0 0.0
  %934 = vmatpush2.msra.mxu0 0.0
  %935 = vmatprep.subr.mxu0 0.0
  %936 = vmatpush2.msra.mxu0 0.0
  %937 = vmatprep.subr.mxu0 0.0
  %938 = vmatpush2.msra.mxu0 0.0
  %939 = vmatprep.subr.mxu0 0.0
  %940 = vmatpush2.msra.mxu0 0.0
  %941 = vmatprep.subr.mxu0 0.0
  %942 = vmatpush2.msra.mxu0 0.0
  %943 = vmatprep.subr.mxu0 0.0
  %944 = vmatpush2.msra.mxu0 0.0
  %945 = vmatprep.subr.mxu0 0.0
  %946 = vmatpush2.msra.mxu0 0.0
  %947 = vmatprep.subr.mxu0 0.0
  %948 = vmatpush2.msra.mxu0 0.0
  %949 = vmatprep.mubr.f32.mxu0 0.0
  %950 = vmatmul.mubr.f32.gmra.mxu0 %v805
  %v951 = vpop.f32.mrf.mxu0
  %v952 = vadd.f32 0.0, %v951
  %v953 = vpop.f32.mrf.mxu0
  %954 = vmatprep.mubr.f32.mxu0 0.0
  %955 = vmatmul.mubr.f32.gmra.mxu0 %v806
  %v956 = vpop.f32.mrf.mxu0
  %v957 = vadd.f32 0.0, %v956
  %v958 = vpop.f32.mrf.mxu0
  %959 = vmatprep.mubr.f32.mxu0 0.0
  %960 = vmatmul.mubr.f32.gmra.mxu0 %v807
  %v961 = vpop.f32.mrf.mxu0
  %v962 = vadd.f32 0.0, %v961
  %v963 = vpop.f32.mrf.mxu0
  %964 = vmatprep.mubr.f32.mxu0 0.0
  %965 = vmatmul.mubr.f32.gmra.mxu0 %v808
  %v966 = vpop.f32.mrf.mxu0
  %v967 = vadd.f32 0.0, %v966
  %v968 = vpop.f32.mrf.mxu0
  %969 = vmatprep.mubr.f32.mxu0 0.0
  %970 = vmatmul.mubr.f32.gmra.mxu0 %v809
  %v971 = vpop.f32.mrf.mxu0
  %v972 = vadd.f32 0.0, %v971
  %v973 = vpop.f32.mrf.mxu0
  %974 = vmatprep.mubr.f32.mxu0 0.0
  %975 = vmatmul.mubr.f32.gmra.mxu0 %v810
  %v976 = vpop.f32.mrf.mxu0
  %v977 = vadd.f32 0.0, %v976
  %v978 = vpop.f32.mrf.mxu0
  %979 = vmatprep.mubr.f32.mxu0 0.0
  %980 = vmatmul.mubr.f32.gmra.mxu0 %v811
  %v981 = vpop.f32.mrf.mxu0
  %v982 = vadd.f32 0.0, %v981
  %v983 = vpop.f32.mrf.mxu0
  %984 = vmatprep.mubr.f32.mxu0 0.0
  %985 = vmatmul.mubr.f32.gmra.mxu0 %v812
  %v986 = vpop.f32.mrf.mxu0
  %v987 = vadd.f32 0.0, %v986
  %v988 = vpop.f32.mrf.mxu0
  %989 = vmatprep.mubr.f32.mxu0 0.0
  %990 = vmatmul.mubr.f32.gmra.mxu0 %v813
  %v991 = vpop.f32.mrf.mxu0
  %v992 = vadd.f32 0.0, %v991
  %v993 = vpop.f32.mrf.mxu0
  %994 = vmatprep.mubr.f32.mxu0 0.0
  %995 = vmatmul.mubr.f32.gmra.mxu0 %v814
  %v996 = vpop.f32.mrf.mxu0
  %v997 = vadd.f32 0.0, %v996
  %v998 = vpop.f32.mrf.mxu0
  %999 = vmatprep.mubr.f32.mxu0 0.0
  %1000 = vmatmul.mubr.f32.gmra.mxu0 %v815
  %v1001 = vpop.f32.mrf.mxu0
  %v1002 = vadd.f32 0.0, %v1001
  %v1003 = vpop.f32.mrf.mxu0
  %1004 = vmatprep.mubr.f32.mxu0 0.0
  %1005 = vmatmul.mubr.f32.gmra.mxu0 %v816
  %v1006 = vpop.f32.mrf.mxu0
  %v1007 = vadd.f32 0.0, %v1006
  %v1008 = vpop.f32.mrf.mxu0
  %1009 = vmatprep.mubr.f32.mxu0 0.0
  %1010 = vmatmul.mubr.f32.gmra.mxu0 %v817
  %v1011 = vpop.f32.mrf.mxu0
  %v1012 = vadd.f32 0.0, %v1011
  %v1013 = vpop.f32.mrf.mxu0
  %1014 = vmatprep.mubr.f32.mxu0 0.0
  %1015 = vmatmul.mubr.f32.gmra.mxu0 %v818
  %v1016 = vpop.f32.mrf.mxu0
  %v1017 = vadd.f32 0.0, %v1016
  %v1018 = vpop.f32.mrf.mxu0
  %1019 = vmatprep.mubr.f32.mxu0 0.0
  %1020 = vmatmul.mubr.f32.gmra.mxu0 %v819
  %v1021 = vpop.f32.mrf.mxu0
  %v1022 = vadd.f32 0.0, %v1021
  %v1023 = vpop.f32.mrf.mxu0
  %1024 = vmatprep.mubr.f32.mxu0 0.0
  %1025 = vmatmul.mubr.f32.gmra.mxu0 %v820
  %v1026 = vpop.f32.mrf.mxu0
  %v1027 = vadd.f32 0.0, %v1026
  %v1028 = vpop.f32.mrf.mxu0
  %1029 = vmatprep.mubr.f32.mxu0 0.0
  %1030 = vmatmul.mubr.f32.gmra.mxu0 %v821
  %v1031 = vpop.f32.mrf.mxu0
  %v1032 = vadd.f32 0.0, %v1031
  %v1033 = vpop.f32.mrf.mxu0
  %1034 = vmatprep.mubr.f32.mxu0 0.0
  %1035 = vmatmul.mubr.f32.gmra.mxu0 %v822
  %v1036 = vpop.f32.mrf.mxu0
  %v1037 = vadd.f32 0.0, %v1036
  %v1038 = vpop.f32.mrf.mxu0
  %1039 = vmatprep.mubr.f32.mxu0 0.0
  %1040 = vmatmul.mubr.f32.gmra.mxu0 %v823
  %v1041 = vpop.f32.mrf.mxu0
  %v1042 = vadd.f32 0.0, %v1041
  %v1043 = vpop.f32.mrf.mxu0
  %1044 = vmatprep.mubr.f32.mxu0 0.0
  %1045 = vmatmul.mubr.f32.gmra.mxu0 %v824
  %v1046 = vpop.f32.mrf.mxu0
  %v1047 = vadd.f32 0.0, %v1046
  %v1048 = vpop.f32.mrf.mxu0
  %1049 = vmatprep.mubr.f32.mxu0 0.0
  %1050 = vmatmul.mubr.f32.gmra.mxu0 %v825
  %v1051 = vpop.f32.mrf.mxu0
  %v1052 = vadd.f32 0.0, %v1051
  %v1053 = vpop.f32.mrf.mxu0
  %1054 = vmatprep.mubr.f32.mxu0 0.0
  %1055 = vmatmul.mubr.f32.gmra.mxu0 %v826
  %v1056 = vpop.f32.mrf.mxu0
  %v1057 = vadd.f32 0.0, %v1056
  %v1058 = vpop.f32.mrf.mxu0
  %1059 = vmatprep.mubr.f32.mxu0 0.0
  %1060 = vmatmul.mubr.f32.gmra.mxu0 %v827
  %v1061 = vpop.f32.mrf.mxu0
  %v1062 = vadd.f32 0.0, %v1061
  %v1063 = vpop.f32.mrf.mxu0
  %1064 = vmatprep.mubr.f32.mxu0 0.0
  %1065 = vmatmul.mubr.f32.gmra.mxu0 %v828
  %v1066 = vpop.f32.mrf.mxu0
  %v1067 = vadd.f32 0.0, %v1066
  %v1068 = vpop.f32.mrf.mxu0
  %1069 = vmatprep.mubr.f32.mxu0 0.0
  %1070 = vmatmul.mubr.f32.gmra.mxu0 %v829
  %v1071 = vpop.f32.mrf.mxu0
  %v1072 = vadd.f32 0.0, %v1071
  %v1073 = vpop.f32.mrf.mxu0
  %1074 = vmatprep.mubr.f32.mxu0 0.0
  %1075 = vmatmul.mubr.f32.gmra.mxu0 %v830
  %v1076 = vpop.f32.mrf.mxu0
  %v1077 = vadd.f32 0.0, %v1076
  %v1078 = vpop.f32.mrf.mxu0
  %1079 = vmatprep.mubr.f32.mxu0 0.0
  %1080 = vmatmul.mubr.f32.gmra.mxu0 %v831
  %v1081 = vpop.f32.mrf.mxu0
  %v1082 = vadd.f32 0.0, %v1081
  %v1083 = vpop.f32.mrf.mxu0
  %1084 = vmatprep.mubr.f32.mxu0 0.0
  %1085 = vmatmul.mubr.f32.gmra.mxu0 %v832
  %v1086 = vpop.f32.mrf.mxu0
  %v1087 = vadd.f32 0.0, %v1086
  %v1088 = vpop.f32.mrf.mxu0
  %1089 = vmatprep.mubr.f32.mxu0 0.0
  %1090 = vmatmul.mubr.f32.gmra.mxu0 %v833
  %v1091 = vpop.f32.mrf.mxu0
  %v1092 = vadd.f32 0.0, %v1091
  %v1093 = vpop.f32.mrf.mxu0
  %1094 = vmatprep.mubr.f32.mxu0 0.0
  %1095 = vmatmul.mubr.f32.gmra.mxu0 %v834
  %v1096 = vpop.f32.mrf.mxu0
  %v1097 = vadd.f32 0.0, %v1096
  %v1098 = vpop.f32.mrf.mxu0
  %1099 = vmatprep.mubr.f32.mxu0 0.0
  %1100 = vmatmul.mubr.f32.gmra.mxu0 %v835
  %v1101 = vpop.f32.mrf.mxu0
  %v1102 = vadd.f32 0.0, %v1101
  %v1103 = vpop.f32.mrf.mxu0
  %1104 = vmatprep.mubr.f32.mxu0 0.0
  %1105 = vmatmul.mubr.f32.gmra.mxu0 %v836
  %v1106 = vpop.f32.mrf.mxu0
  %v1107 = vadd.f32 0.0, %v1106
  %v1108 = vpop.f32.mrf.mxu0
  %1109 = vmatprep.mubr.f32.mxu0 0.0
  %1110 = vmatmul.mubr.f32.gmra.mxu0 %v837
  %v1111 = vpop.f32.mrf.mxu0
  %v1112 = vadd.f32 0.0, %v1111
  %v1113 = vpop.f32.mrf.mxu0
  %1114 = vmatprep.mubr.f32.mxu0 0.0
  %1115 = vmatmul.mubr.f32.gmra.mxu0 %v838
  %v1116 = vpop.f32.mrf.mxu0
  %v1117 = vadd.f32 0.0, %v1116
  %v1118 = vpop.f32.mrf.mxu0
  %1119 = vmatprep.mubr.f32.mxu0 0.0
  %1120 = vmatmul.mubr.f32.gmra.mxu0 %v839
  %v1121 = vpop.f32.mrf.mxu0
  %v1122 = vadd.f32 0.0, %v1121
  %v1123 = vpop.f32.mrf.mxu0
  %1124 = vmatprep.mubr.f32.mxu0 0.0
  %1125 = vmatmul.mubr.f32.gmra.mxu0 %v840
  %v1126 = vpop.f32.mrf.mxu0
  %v1127 = vadd.f32 0.0, %v1126
  %v1128 = vpop.f32.mrf.mxu0
  %1129 = vmatprep.mubr.f32.mxu0 0.0
  %1130 = vmatmul.mubr.f32.gmra.mxu0 %v841
  %v1131 = vpop.f32.mrf.mxu0
  %v1132 = vadd.f32 0.0, %v1131
  %v1133 = vpop.f32.mrf.mxu0
  %1134 = vmatprep.mubr.f32.mxu0 0.0
  %1135 = vmatmul.mubr.f32.gmra.mxu0 %v842
  %v1136 = vpop.f32.mrf.mxu0
  %v1137 = vadd.f32 0.0, %v1136
  %v1138 = vpop.f32.mrf.mxu0
  %1139 = vmatprep.mubr.f32.mxu0 0.0
  %1140 = vmatmul.mubr.f32.gmra.mxu0 %v843
  %v1141 = vpop.f32.mrf.mxu0
  %v1142 = vadd.f32 0.0, %v1141
  %v1143 = vpop.f32.mrf.mxu0
  %1144 = vmatprep.mubr.f32.mxu0 0.0
  %1145 = vmatmul.mubr.f32.gmra.mxu0 %v844
  %v1146 = vpop.f32.mrf.mxu0
  %v1147 = vadd.f32 0.0, %v1146
  %v1148 = vpop.f32.mrf.mxu0
  %1149 = vmatprep.mubr.f32.mxu0 0.0
  %1150 = vmatmul.mubr.f32.gmra.mxu0 %v845
  %v1151 = vpop.f32.mrf.mxu0
  %v1152 = vadd.f32 0.0, %v1151
  %v1153 = vpop.f32.mrf.mxu0
  %1154 = vmatprep.mubr.f32.mxu0 0.0
  %1155 = vmatmul.mubr.f32.gmra.mxu0 %v846
  %v1156 = vpop.f32.mrf.mxu0
  %v1157 = vadd.f32 0.0, %v1156
  %v1158 = vpop.f32.mrf.mxu0
  %1159 = vmatprep.mubr.f32.mxu0 0.0
  %1160 = vmatmul.mubr.f32.gmra.mxu0 %v847
  %v1161 = vpop.f32.mrf.mxu0
  %v1162 = vadd.f32 0.0, %v1161
  %v1163 = vpop.f32.mrf.mxu0
  %1164 = vmatprep.mubr.f32.mxu0 0.0
  %1165 = vmatmul.mubr.f32.gmra.mxu0 %v848
  %v1166 = vpop.f32.mrf.mxu0
  %v1167 = vadd.f32 0.0, %v1166
  %v1168 = vpop.f32.mrf.mxu0
  %1169 = vmatprep.mubr.f32.mxu0 0.0
  %1170 = vmatmul.mubr.f32.gmra.mxu0 %v849
  %v1171 = vpop.f32.mrf.mxu0
  %v1172 = vadd.f32 0.0, %v1171
  %v1173 = vpop.f32.mrf.mxu0
  %1174 = vmatprep.mubr.f32.mxu0 0.0
  %1175 = vmatmul.mubr.f32.gmra.mxu0 %v850
  %v1176 = vpop.f32.mrf.mxu0
  %v1177 = vadd.f32 0.0, %v1176
  %v1178 = vpop.f32.mrf.mxu0
  %1179 = vmatprep.mubr.f32.mxu0 0.0
  %1180 = vmatmul.mubr.f32.gmra.mxu0 %v851
  %v1181 = vpop.f32.mrf.mxu0
  %v1182 = vadd.f32 0.0, %v1181
  %v1183 = vpop.f32.mrf.mxu0
  %1184 = vmatprep.mubr.f32.mxu0 0.0
  %1185 = vmatmul.mubr.f32.gmra.mxu0 %v852
  %v1186 = vpop.f32.mrf.mxu0
  %v1187 = vadd.f32 0.0, %v1186
  %v1188 = vpop.f32.mrf.mxu0
  %1189 = vmatprep.mubr.f32.mxu0 0.0
  %1190 = vmatmul.mubr.f32.gmra.mxu0 %v853
  %v1191 = vpop.f32.mrf.mxu0
  %v1192 = vadd.f32 0.0, %v1191
  %v1193 = vpop.f32.mrf.mxu0
  %1194 = vmatprep.mubr.f32.mxu0 0.0
  %1195 = vmatmul.mubr.f32.gmra.mxu0 %v854
  %v1196 = vpop.f32.mrf.mxu0
  %v1197 = vadd.f32 0.0, %v1196
  %v1198 = vpop.f32.mrf.mxu0
  %1199 = vmatprep.mubr.f32.mxu0 0.0
  %1200 = vmatmul.mubr.f32.gmra.mxu0 %v855
  %v1201 = vpop.f32.mrf.mxu0
  %v1202 = vadd.f32 0.0, %v1201
  %v1203 = vpop.f32.mrf.mxu0
  %1204 = vmatprep.mubr.f32.mxu0 0.0
  %1205 = vmatmul.mubr.f32.gmra.mxu0 %v856
  %v1206 = vpop.f32.mrf.mxu0
  %v1207 = vadd.f32 0.0, %v1206
  %v1208 = vpop.f32.mrf.mxu0
  %1209 = vmatprep.mubr.f32.mxu0 0.0
  %1210 = vmatmul.mubr.f32.gmra.mxu0 %v857
  %v1211 = vpop.f32.mrf.mxu0
  %v1212 = vadd.f32 0.0, %v1211
  %v1213 = vpop.f32.mrf.mxu0
  %1214 = vmatprep.mubr.f32.mxu0 0.0
  %1215 = vmatmul.mubr.f32.gmra.mxu0 %v858
  %v1216 = vpop.f32.mrf.mxu0
  %v1217 = vadd.f32 0.0, %v1216
  %v1218 = vpop.f32.mrf.mxu0
  %1219 = vmatprep.mubr.f32.mxu0 0.0
  %1220 = vmatmul.mubr.f32.gmra.mxu0 %v859
  %v1221 = vpop.f32.mrf.mxu0
  %v1222 = vadd.f32 0.0, %v1221
  %v1223 = vpop.f32.mrf.mxu0
  %1224 = vmatprep.mubr.f32.mxu0 0.0
  %1225 = vmatmul.mubr.f32.gmra.mxu0 %v860
  %v1226 = vpop.f32.mrf.mxu0
  %v1227 = vadd.f32 0.0, %v1226
  %v1228 = vpop.f32.mrf.mxu0
  %1229 = vmatprep.mubr.f32.mxu0 0.0
  %1230 = vmatmul.mubr.f32.gmra.mxu0 %v861
  %v1231 = vpop.f32.mrf.mxu0
  %v1232 = vadd.f32 0.0, %v1231
  %v1233 = vpop.f32.mrf.mxu0
  %1234 = vmatprep.mubr.f32.mxu0 0.0
  %1235 = vmatmul.mubr.f32.gmra.mxu0 %v862
  %v1236 = vpop.f32.mrf.mxu0
  %v1237 = vadd.f32 0.0, %v1236
  %v1238 = vpop.f32.mrf.mxu0
  %1239 = vmatprep.mubr.f32.mxu0 0.0
  %1240 = vmatmul.mubr.f32.gmra.mxu0 %v863
  %v1241 = vpop.f32.mrf.mxu0
  %v1242 = vadd.f32 0.0, %v1241
  %v1243 = vpop.f32.mrf.mxu0
  %1244 = vmatprep.mubr.f32.mxu0 0.0
  %1245 = vmatmul.mubr.f32.gmra.mxu0 %v864
  %v1246 = vpop.f32.mrf.mxu0
  %v1247 = vadd.f32 0.0, %v1246
  %v1248 = vpop.f32.mrf.mxu0
  %1249 = vmatprep.mubr.f32.mxu0 0.0
  %1250 = vmatmul.mubr.f32.gmra.mxu0 %v865
  %v1251 = vpop.f32.mrf.mxu0
  %v1252 = vadd.f32 0.0, %v1251
  %v1253 = vpop.f32.mrf.mxu0
  %1254 = vmatprep.mubr.f32.mxu0 0.0
  %1255 = vmatmul.mubr.f32.gmra.mxu0 %v866
  %v1256 = vpop.f32.mrf.mxu0
  %v1257 = vadd.f32 0.0, %v1256
  %v1258 = vpop.f32.mrf.mxu0
  %1259 = vmatprep.mubr.f32.mxu0 0.0
  %1260 = vmatmul.mubr.f32.gmra.mxu0 %v867
  %v1261 = vpop.f32.mrf.mxu0
  %v1262 = vadd.f32 0.0, %v1261
  %v1263 = vpop.f32.mrf.mxu0
  %1264 = vmatprep.mubr.f32.mxu0 0.0
  %1265 = vmatmul.mubr.f32.gmra.mxu0 %v868
  %v1266 = vpop.f32.mrf.mxu0
  %v1267 = vadd.f32 0.0, %v1266
  %v1268 = vpop.f32.mrf.mxu0
  %1269 = vdwg.mxu0
  %v1270 = vld [vmem:[%s2 + $0x2] sm:$0x1]
  %v1271 = vlaneseq
  %v1272 = vshrl.u32 %v1271, 7
  %v1273 = vsub.s32 0, %v1272
  %v1274 = vrot.slane %v1270, %v1273
  %v1275 = vmul.f32 %v952, %v1274
  %v1276 = vmul.f32 %v957, %v1274
  %v1277 = vmul.f32 %v962, %v1274
  %v1278 = vmul.f32 %v967, %v1274
  %v1279 = vmul.f32 %v972, %v1274
  %v1280 = vmul.f32 %v977, %v1274
  %v1281 = vmul.f32 %v982, %v1274
  %v1282 = vmul.f32 %v987, %v1274
  %v1283 = vmul.f32 %v992, %v1274
  %v1284 = vmul.f32 %v997, %v1274
  %v1285 = vmul.f32 %v1002, %v1274
  %v1286 = vmul.f32 %v1007, %v1274
  %v1287 = vmul.f32 %v1012, %v1274
  %v1288 = vmul.f32 %v1017, %v1274
  %v1289 = vmul.f32 %v1022, %v1274
  %v1290 = vmul.f32 %v1027, %v1274
  %v1291 = vmul.f32 %v1032, %v1274
  %v1292 = vmul.f32 %v1037, %v1274
  %v1293 = vmul.f32 %v1042, %v1274
  %v1294 = vmul.f32 %v1047, %v1274
  %v1295 = vmul.f32 %v1052, %v1274
  %v1296 = vmul.f32 %v1057, %v1274
  %v1297 = vmul.f32 %v1062, %v1274
  %v1298 = vmul.f32 %v1067, %v1274
  %v1299 = vmul.f32 %v1072, %v1274
  %v1300 = vmul.f32 %v1077, %v1274
  %v1301 = vmul.f32 %v1082, %v1274
  %v1302 = vmul.f32 %v1087, %v1274
  %v1303 = vmul.f32 %v1092, %v1274
  %v1304 = vmul.f32 %v1097, %v1274
  %v1305 = vmul.f32 %v1102, %v1274
  %v1306 = vmul.f32 %v1107, %v1274
  %v1307 = vmul.f32 %v1112, %v1274
  %v1308 = vmul.f32 %v1117, %v1274
  %v1309 = vmul.f32 %v1122, %v1274
  %v1310 = vmul.f32 %v1127, %v1274
  %v1311 = vmul.f32 %v1132, %v1274
  %v1312 = vmul.f32 %v1137, %v1274
  %v1313 = vmul.f32 %v1142, %v1274
  %v1314 = vmul.f32 %v1147, %v1274
  %v1315 = vmul.f32 %v1152, %v1274
  %v1316 = vmul.f32 %v1157, %v1274
  %v1317 = vmul.f32 %v1162, %v1274
  %v1318 = vmul.f32 %v1167, %v1274
  %v1319 = vmul.f32 %v1172, %v1274
  %v1320 = vmul.f32 %v1177, %v1274
  %v1321 = vmul.f32 %v1182, %v1274
  %v1322 = vmul.f32 %v1187, %v1274
  %v1323 = vmul.f32 %v1192, %v1274
  %v1324 = vmul.f32 %v1197, %v1274
  %v1325 = vmul.f32 %v1202, %v1274
  %v1326 = vmul.f32 %v1207, %v1274
  %v1327 = vmul.f32 %v1212, %v1274
  %v1328 = vmul.f32 %v1217, %v1274
  %v1329 = vmul.f32 %v1222, %v1274
  %v1330 = vmul.f32 %v1227, %v1274
  %v1331 = vmul.f32 %v1232, %v1274
  %v1332 = vmul.f32 %v1237, %v1274
  %v1333 = vmul.f32 %v1242, %v1274
  %v1334 = vmul.f32 %v1247, %v1274
  %v1335 = vmul.f32 %v1252, %v1274
  %v1336 = vmul.f32 %v1257, %v1274
  %v1337 = vmul.f32 %v1262, %v1274
  %v1338 = vmul.f32 %v1267, %v1274
  %v1339 = vld [vmem:[%s2 + $0x3] sm:$0x1]
  %v1340 = vlaneseq
  %v1341 = vshrl.u32 %v1340, 7
  %v1342 = vsub.s32 0, %v1341
  %v1343 = vrot.slane %v1339, %v1342
  %v1344 = vadd.f32 %v1275, %v1343
  %v1345 = vadd.f32 %v1276, %v1343
  %v1346 = vadd.f32 %v1277, %v1343
  %v1347 = vadd.f32 %v1278, %v1343
  %v1348 = vadd.f32 %v1279, %v1343
  %v1349 = vadd.f32 %v1280, %v1343
  %v1350 = vadd.f32 %v1281, %v1343
  %v1351 = vadd.f32 %v1282, %v1343
  %v1352 = vadd.f32 %v1283, %v1343
  %v1353 = vadd.f32 %v1284, %v1343
  %v1354 = vadd.f32 %v1285, %v1343
  %v1355 = vadd.f32 %v1286, %v1343
  %v1356 = vadd.f32 %v1287, %v1343
  %v1357 = vadd.f32 %v1288, %v1343
  %v1358 = vadd.f32 %v1289, %v1343
  %v1359 = vadd.f32 %v1290, %v1343
  %v1360 = vadd.f32 %v1291, %v1343
  %v1361 = vadd.f32 %v1292, %v1343
  %v1362 = vadd.f32 %v1293, %v1343
  %v1363 = vadd.f32 %v1294, %v1343
  %v1364 = vadd.f32 %v1295, %v1343
  %v1365 = vadd.f32 %v1296, %v1343
  %v1366 = vadd.f32 %v1297, %v1343
  %v1367 = vadd.f32 %v1298, %v1343
  %v1368 = vadd.f32 %v1299, %v1343
  %v1369 = vadd.f32 %v1300, %v1343
  %v1370 = vadd.f32 %v1301, %v1343
  %v1371 = vadd.f32 %v1302, %v1343
  %v1372 = vadd.f32 %v1303, %v1343
  %v1373 = vadd.f32 %v1304, %v1343
  %v1374 = vadd.f32 %v1305, %v1343
  %v1375 = vadd.f32 %v1306, %v1343
  %v1376 = vadd.f32 %v1307, %v1343
  %v1377 = vadd.f32 %v1308, %v1343
  %v1378 = vadd.f32 %v1309, %v1343
  %v1379 = vadd.f32 %v1310, %v1343
  %v1380 = vadd.f32 %v1311, %v1343
  %v1381 = vadd.f32 %v1312, %v1343
  %v1382 = vadd.f32 %v1313, %v1343
  %v1383 = vadd.f32 %v1314, %v1343
  %v1384 = vadd.f32 %v1315, %v1343
  %v1385 = vadd.f32 %v1316, %v1343
  %v1386 = vadd.f32 %v1317, %v1343
  %v1387 = vadd.f32 %v1318, %v1343
  %v1388 = vadd.f32 %v1319, %v1343
  %v1389 = vadd.f32 %v1320, %v1343
  %v1390 = vadd.f32 %v1321, %v1343
  %v1391 = vadd.f32 %v1322, %v1343
  %v1392 = vadd.f32 %v1323, %v1343
  %v1393 = vadd.f32 %v1324, %v1343
  %v1394 = vadd.f32 %v1325, %v1343
  %v1395 = vadd.f32 %v1326, %v1343
  %v1396 = vadd.f32 %v1327, %v1343
  %v1397 = vadd.f32 %v1328, %v1343
  %v1398 = vadd.f32 %v1329, %v1343
  %v1399 = vadd.f32 %v1330, %v1343
  %v1400 = vadd.f32 %v1331, %v1343
  %v1401 = vadd.f32 %v1332, %v1343
  %v1402 = vadd.f32 %v1333, %v1343
  %v1403 = vadd.f32 %v1334, %v1343
  %v1404 = vadd.f32 %v1335, %v1343
  %v1405 = vadd.f32 %v1336, %v1343
  %v1406 = vadd.f32 %v1337, %v1343
  %v1407 = vadd.f32 %v1338, %v1343
  %v1408 = vxor.u32 %v1344, 2147483648
  %v1409 = vxor.u32 %v1345, 2147483648
  %v1410 = vxor.u32 %v1346, 2147483648
  %v1411 = vxor.u32 %v1347, 2147483648
  %v1412 = vxor.u32 %v1348, 2147483648
  %v1413 = vxor.u32 %v1349, 2147483648
  %v1414 = vxor.u32 %v1350, 2147483648
  %v1415 = vxor.u32 %v1351, 2147483648
  %v1416 = vxor.u32 %v1352, 2147483648
  %v1417 = vxor.u32 %v1353, 2147483648
  %v1418 = vxor.u32 %v1354, 2147483648
  %v1419 = vxor.u32 %v1355, 2147483648
  %v1420 = vxor.u32 %v1356, 2147483648
  %v1421 = vxor.u32 %v1357, 2147483648
  %v1422 = vxor.u32 %v1358, 2147483648
  %v1423 = vxor.u32 %v1359, 2147483648
  %v1424 = vxor.u32 %v1360, 2147483648
  %v1425 = vxor.u32 %v1361, 2147483648
  %v1426 = vxor.u32 %v1362, 2147483648
  %v1427 = vxor.u32 %v1363, 2147483648
  %v1428 = vxor.u32 %v1364, 2147483648
  %v1429 = vxor.u32 %v1365, 2147483648
  %v1430 = vxor.u32 %v1366, 2147483648
  %v1431 = vxor.u32 %v1367, 2147483648
  %v1432 = vxor.u32 %v1368, 2147483648
  %v1433 = vxor.u32 %v1369, 2147483648
  %v1434 = vxor.u32 %v1370, 2147483648
  %v1435 = vxor.u32 %v1371, 2147483648
  %v1436 = vxor.u32 %v1372, 2147483648
  %v1437 = vxor.u32 %v1373, 2147483648
  %v1438 = vxor.u32 %v1374, 2147483648
  %v1439 = vxor.u32 %v1375, 2147483648
  %v1440 = vxor.u32 %v1376, 2147483648
  %v1441 = vxor.u32 %v1377, 2147483648
  %v1442 = vxor.u32 %v1378, 2147483648
  %v1443 = vxor.u32 %v1379, 2147483648
  %v1444 = vxor.u32 %v1380, 2147483648
  %v1445 = vxor.u32 %v1381, 2147483648
  %v1446 = vxor.u32 %v1382, 2147483648
  %v1447 = vxor.u32 %v1383, 2147483648
  %v1448 = vxor.u32 %v1384, 2147483648
  %v1449 = vxor.u32 %v1385, 2147483648
  %v1450 = vxor.u32 %v1386, 2147483648
  %v1451 = vxor.u32 %v1387, 2147483648
  %v1452 = vxor.u32 %v1388, 2147483648
  %v1453 = vxor.u32 %v1389, 2147483648
  %v1454 = vxor.u32 %v1390, 2147483648
  %v1455 = vxor.u32 %v1391, 2147483648
  %v1456 = vxor.u32 %v1392, 2147483648
  %v1457 = vxor.u32 %v1393, 2147483648
  %v1458 = vxor.u32 %v1394, 2147483648
  %v1459 = vxor.u32 %v1395, 2147483648
  %v1460 = vxor.u32 %v1396, 2147483648
  %v1461 = vxor.u32 %v1397, 2147483648
  %v1462 = vxor.u32 %v1398, 2147483648
  %v1463 = vxor.u32 %v1399, 2147483648
  %v1464 = vxor.u32 %v1400, 2147483648
  %v1465 = vxor.u32 %v1401, 2147483648
  %v1466 = vxor.u32 %v1402, 2147483648
  %v1467 = vxor.u32 %v1403, 2147483648
  %v1468 = vxor.u32 %v1404, 2147483648
  %v1469 = vxor.u32 %v1405, 2147483648
  %v1470 = vxor.u32 %v1406, 2147483648
  %v1471 = vxor.u32 %v1407, 2147483648
  %v1472 = vmul.f32 %v1408, 1.442695
  %v1473 = vpow.pop %v1472
  %v1474 = vmul.f32 %v1409, 1.442695
  %v1475 = vpow.pop %v1474
  %v1476 = vmul.f32 %v1410, 1.442695
  %v1477 = vpow.pop %v1476
  %v1478 = vmul.f32 %v1411, 1.442695
  %v1479 = vpow.pop %v1478
  %v1480 = vmul.f32 %v1412, 1.442695
  %v1481 = vpow.pop %v1480
  %v1482 = vmul.f32 %v1413, 1.442695
  %v1483 = vpow.pop %v1482
  %v1484 = vmul.f32 %v1414, 1.442695
  %v1485 = vpow.pop %v1484
  %v1486 = vmul.f32 %v1415, 1.442695
  %v1487 = vpow.pop %v1486
  %v1488 = vmul.f32 %v1416, 1.442695
  %v1489 = vpow.pop %v1488
  %v1490 = vmul.f32 %v1417, 1.442695
  %v1491 = vpow.pop %v1490
  %v1492 = vmul.f32 %v1418, 1.442695
  %v1493 = vpow.pop %v1492
  %v1494 = vmul.f32 %v1419, 1.442695
  %v1495 = vpow.pop %v1494
  %v1496 = vmul.f32 %v1420, 1.442695
  %v1497 = vpow.pop %v1496
  %v1498 = vmul.f32 %v1421, 1.442695
  %v1499 = vpow.pop %v1498
  %v1500 = vmul.f32 %v1422, 1.442695
  %v1501 = vpow.pop %v1500
  %v1502 = vmul.f32 %v1423, 1.442695
  %v1503 = vpow.pop %v1502
  %v1504 = vmul.f32 %v1424, 1.442695
  %v1505 = vpow.pop %v1504
  %v1506 = vmul.f32 %v1425, 1.442695
  %v1507 = vpow.pop %v1506
  %v1508 = vmul.f32 %v1426, 1.442695
  %v1509 = vpow.pop %v1508
  %v1510 = vmul.f32 %v1427, 1.442695
  %v1511 = vpow.pop %v1510
  %v1512 = vmul.f32 %v1428, 1.442695
  %v1513 = vpow.pop %v1512
  %v1514 = vmul.f32 %v1429, 1.442695
  %v1515 = vpow.pop %v1514
  %v1516 = vmul.f32 %v1430, 1.442695
  %v1517 = vpow.pop %v1516
  %v1518 = vmul.f32 %v1431, 1.442695
  %v1519 = vpow.pop %v1518
  %v1520 = vmul.f32 %v1432, 1.442695
  %v1521 = vpow.pop %v1520
  %v1522 = vmul.f32 %v1433, 1.442695
  %v1523 = vpow.pop %v1522
  %v1524 = vmul.f32 %v1434, 1.442695
  %v1525 = vpow.pop %v1524
  %v1526 = vmul.f32 %v1435, 1.442695
  %v1527 = vpow.pop %v1526
  %v1528 = vmul.f32 %v1436, 1.442695
  %v1529 = vpow.pop %v1528
  %v1530 = vmul.f32 %v1437, 1.442695
  %v1531 = vpow.pop %v1530
  %v1532 = vmul.f32 %v1438, 1.442695
  %v1533 = vpow.pop %v1532
  %v1534 = vmul.f32 %v1439, 1.442695
  %v1535 = vpow.pop %v1534
  %v1536 = vmul.f32 %v1440, 1.442695
  %v1537 = vpow.pop %v1536
  %v1538 = vmul.f32 %v1441, 1.442695
  %v1539 = vpow.pop %v1538
  %v1540 = vmul.f32 %v1442, 1.442695
  %v1541 = vpow.pop %v1540
  %v1542 = vmul.f32 %v1443, 1.442695
  %v1543 = vpow.pop %v1542
  %v1544 = vmul.f32 %v1444, 1.442695
  %v1545 = vpow.pop %v1544
  %v1546 = vmul.f32 %v1445, 1.442695
  %v1547 = vpow.pop %v1546
  %v1548 = vmul.f32 %v1446, 1.442695
  %v1549 = vpow.pop %v1548
  %v1550 = vmul.f32 %v1447, 1.442695
  %v1551 = vpow.pop %v1550
  %v1552 = vmul.f32 %v1448, 1.442695
  %v1553 = vpow.pop %v1552
  %v1554 = vmul.f32 %v1449, 1.442695
  %v1555 = vpow.pop %v1554
  %v1556 = vmul.f32 %v1450, 1.442695
  %v1557 = vpow.pop %v1556
  %v1558 = vmul.f32 %v1451, 1.442695
  %v1559 = vpow.pop %v1558
  %v1560 = vmul.f32 %v1452, 1.442695
  %v1561 = vpow.pop %v1560
  %v1562 = vmul.f32 %v1453, 1.442695
  %v1563 = vpow.pop %v1562
  %v1564 = vmul.f32 %v1454, 1.442695
  %v1565 = vpow.pop %v1564
  %v1566 = vmul.f32 %v1455, 1.442695
  %v1567 = vpow.pop %v1566
  %v1568 = vmul.f32 %v1456, 1.442695
  %v1569 = vpow.pop %v1568
  %v1570 = vmul.f32 %v1457, 1.442695
  %v1571 = vpow.pop %v1570
  %v1572 = vmul.f32 %v1458, 1.442695
  %v1573 = vpow.pop %v1572
  %v1574 = vmul.f32 %v1459, 1.442695
  %v1575 = vpow.pop %v1574
  %v1576 = vmul.f32 %v1460, 1.442695
  %v1577 = vpow.pop %v1576
  %v1578 = vmul.f32 %v1461, 1.442695
  %v1579 = vpow.pop %v1578
  %v1580 = vmul.f32 %v1462, 1.442695
  %v1581 = vpow.pop %v1580
  %v1582 = vmul.f32 %v1463, 1.442695
  %v1583 = vpow.pop %v1582
  %v1584 = vmul.f32 %v1464, 1.442695
  %v1585 = vpow.pop %v1584
  %v1586 = vmul.f32 %v1465, 1.442695
  %v1587 = vpow.pop %v1586
  %v1588 = vmul.f32 %v1466, 1.442695
  %v1589 = vpow.pop %v1588
  %v1590 = vmul.f32 %v1467, 1.442695
  %v1591 = vpow.pop %v1590
  %v1592 = vmul.f32 %v1468, 1.442695
  %v1593 = vpow.pop %v1592
  %v1594 = vmul.f32 %v1469, 1.442695
  %v1595 = vpow.pop %v1594
  %v1596 = vmul.f32 %v1470, 1.442695
  %v1597 = vpow.pop %v1596
  %v1598 = vmul.f32 %v1471, 1.442695
  %v1599 = vpow.pop %v1598
  %v1600 = vadd.f32 %v1473, 1.0
  %v1601 = vadd.f32 %v1475, 1.0
  %v1602 = vadd.f32 %v1477, 1.0
  %v1603 = vadd.f32 %v1479, 1.0
  %v1604 = vadd.f32 %v1481, 1.0
  %v1605 = vadd.f32 %v1483, 1.0
  %v1606 = vadd.f32 %v1485, 1.0
  %v1607 = vadd.f32 %v1487, 1.0
  %v1608 = vadd.f32 %v1489, 1.0
  %v1609 = vadd.f32 %v1491, 1.0
  %v1610 = vadd.f32 %v1493, 1.0
  %v1611 = vadd.f32 %v1495, 1.0
  %v1612 = vadd.f32 %v1497, 1.0
  %v1613 = vadd.f32 %v1499, 1.0
  %v1614 = vadd.f32 %v1501, 1.0
  %v1615 = vadd.f32 %v1503, 1.0
  %v1616 = vadd.f32 %v1505, 1.0
  %v1617 = vadd.f32 %v1507, 1.0
  %v1618 = vadd.f32 %v1509, 1.0
  %v1619 = vadd.f32 %v1511, 1.0
  %v1620 = vadd.f32 %v1513, 1.0
  %v1621 = vadd.f32 %v1515, 1.0
  %v1622 = vadd.f32 %v1517, 1.0
  %v1623 = vadd.f32 %v1519, 1.0
  %v1624 = vadd.f32 %v1521, 1.0
  %v1625 = vadd.f32 %v1523, 1.0
  %v1626 = vadd.f32 %v1525, 1.0
  %v1627 = vadd.f32 %v1527, 1.0
  %v1628 = vadd.f32 %v1529, 1.0
  %v1629 = vadd.f32 %v1531, 1.0
  %v1630 = vadd.f32 %v1533, 1.0
  %v1631 = vadd.f32 %v1535, 1.0
  %v1632 = vadd.f32 %v1537, 1.0
  %v1633 = vadd.f32 %v1539, 1.0
  %v1634 = vadd.f32 %v1541, 1.0
  %v1635 = vadd.f32 %v1543, 1.0
  %v1636 = vadd.f32 %v1545, 1.0
  %v1637 = vadd.f32 %v1547, 1.0
  %v1638 = vadd.f32 %v1549, 1.0
  %v1639 = vadd.f32 %v1551, 1.0
  %v1640 = vadd.f32 %v1553, 1.0
  %v1641 = vadd.f32 %v1555, 1.0
  %v1642 = vadd.f32 %v1557, 1.0
  %v1643 = vadd.f32 %v1559, 1.0
  %v1644 = vadd.f32 %v1561, 1.0
  %v1645 = vadd.f32 %v1563, 1.0
  %v1646 = vadd.f32 %v1565, 1.0
  %v1647 = vadd.f32 %v1567, 1.0
  %v1648 = vadd.f32 %v1569, 1.0
  %v1649 = vadd.f32 %v1571, 1.0
  %v1650 = vadd.f32 %v1573, 1.0
  %v1651 = vadd.f32 %v1575, 1.0
  %v1652 = vadd.f32 %v1577, 1.0
  %v1653 = vadd.f32 %v1579, 1.0
  %v1654 = vadd.f32 %v1581, 1.0
  %v1655 = vadd.f32 %v1583, 1.0
  %v1656 = vadd.f32 %v1585, 1.0
  %v1657 = vadd.f32 %v1587, 1.0
  %v1658 = vadd.f32 %v1589, 1.0
  %v1659 = vadd.f32 %v1591, 1.0
  %v1660 = vadd.f32 %v1593, 1.0
  %v1661 = vadd.f32 %v1595, 1.0
  %v1662 = vadd.f32 %v1597, 1.0
  %v1663 = vadd.f32 %v1599, 1.0
  %v1664 = vrcp.pop %v1600
  %v1665 = vmul.f32 1.0, %v1664
  %v1666 = vrcp.pop %v1601
  %v1667 = vmul.f32 1.0, %v1666
  %v1668 = vrcp.pop %v1602
  %v1669 = vmul.f32 1.0, %v1668
  %v1670 = vrcp.pop %v1603
  %v1671 = vmul.f32 1.0, %v1670
  %v1672 = vrcp.pop %v1604
  %v1673 = vmul.f32 1.0, %v1672
  %v1674 = vrcp.pop %v1605
  %v1675 = vmul.f32 1.0, %v1674
  %v1676 = vrcp.pop %v1606
  %v1677 = vmul.f32 1.0, %v1676
  %v1678 = vrcp.pop %v1607
  %v1679 = vmul.f32 1.0, %v1678
  %v1680 = vrcp.pop %v1608
  %v1681 = vmul.f32 1.0, %v1680
  %v1682 = vrcp.pop %v1609
  %v1683 = vmul.f32 1.0, %v1682
  %v1684 = vrcp.pop %v1610
  %v1685 = vmul.f32 1.0, %v1684
  %v1686 = vrcp.pop %v1611
  %v1687 = vmul.f32 1.0, %v1686
  %v1688 = vrcp.pop %v1612
  %v1689 = vmul.f32 1.0, %v1688
  %v1690 = vrcp.pop %v1613
  %v1691 = vmul.f32 1.0, %v1690
  %v1692 = vrcp.pop %v1614
  %v1693 = vmul.f32 1.0, %v1692
  %v1694 = vrcp.pop %v1615
  %v1695 = vmul.f32 1.0, %v1694
  %v1696 = vrcp.pop %v1616
  %v1697 = vmul.f32 1.0, %v1696
  %v1698 = vrcp.pop %v1617
  %v1699 = vmul.f32 1.0, %v1698
  %v1700 = vrcp.pop %v1618
  %v1701 = vmul.f32 1.0, %v1700
  %v1702 = vrcp.pop %v1619
  %v1703 = vmul.f32 1.0, %v1702
  %v1704 = vrcp.pop %v1620
  %v1705 = vmul.f32 1.0, %v1704
  %v1706 = vrcp.pop %v1621
  %v1707 = vmul.f32 1.0, %v1706
  %v1708 = vrcp.pop %v1622
  %v1709 = vmul.f32 1.0, %v1708
  %v1710 = vrcp.pop %v1623
  %v1711 = vmul.f32 1.0, %v1710
  %v1712 = vrcp.pop %v1624
  %v1713 = vmul.f32 1.0, %v1712
  %v1714 = vrcp.pop %v1625
  %v1715 = vmul.f32 1.0, %v1714
  %v1716 = vrcp.pop %v1626
  %v1717 = vmul.f32 1.0, %v1716
  %v1718 = vrcp.pop %v1627
  %v1719 = vmul.f32 1.0, %v1718
  %v1720 = vrcp.pop %v1628
  %v1721 = vmul.f32 1.0, %v1720
  %v1722 = vrcp.pop %v1629
  %v1723 = vmul.f32 1.0, %v1722
  %v1724 = vrcp.pop %v1630
  %v1725 = vmul.f32 1.0, %v1724
  %v1726 = vrcp.pop %v1631
  %v1727 = vmul.f32 1.0, %v1726
  %v1728 = vrcp.pop %v1632
  %v1729 = vmul.f32 1.0, %v1728
  %v1730 = vrcp.pop %v1633
  %v1731 = vmul.f32 1.0, %v1730
  %v1732 = vrcp.pop %v1634
  %v1733 = vmul.f32 1.0, %v1732
  %v1734 = vrcp.pop %v1635
  %v1735 = vmul.f32 1.0, %v1734
  %v1736 = vrcp.pop %v1636
  %v1737 = vmul.f32 1.0, %v1736
  %v1738 = vrcp.pop %v1637
  %v1739 = vmul.f32 1.0, %v1738
  %v1740 = vrcp.pop %v1638
  %v1741 = vmul.f32 1.0, %v1740
  %v1742 = vrcp.pop %v1639
  %v1743 = vmul.f32 1.0, %v1742
  %v1744 = vrcp.pop %v1640
  %v1745 = vmul.f32 1.0, %v1744
  %v1746 = vrcp.pop %v1641
  %v1747 = vmul.f32 1.0, %v1746
  %v1748 = vrcp.pop %v1642
  %v1749 = vmul.f32 1.0, %v1748
  %v1750 = vrcp.pop %v1643
  %v1751 = vmul.f32 1.0, %v1750
  %v1752 = vrcp.pop %v1644
  %v1753 = vmul.f32 1.0, %v1752
  %v1754 = vrcp.pop %v1645
  %v1755 = vmul.f32 1.0, %v1754
  %v1756 = vrcp.pop %v1646
  %v1757 = vmul.f32 1.0, %v1756
  %v1758 = vrcp.pop %v1647
  %v1759 = vmul.f32 1.0, %v1758
  %v1760 = vrcp.pop %v1648
  %v1761 = vmul.f32 1.0, %v1760
  %v1762 = vrcp.pop %v1649
  %v1763 = vmul.f32 1.0, %v1762
  %v1764 = vrcp.pop %v1650
  %v1765 = vmul.f32 1.0, %v1764
  %v1766 = vrcp.pop %v1651
  %v1767 = vmul.f32 1.0, %v1766
  %v1768 = vrcp.pop %v1652
  %v1769 = vmul.f32 1.0, %v1768
  %v1770 = vrcp.pop %v1653
  %v1771 = vmul.f32 1.0, %v1770
  %v1772 = vrcp.pop %v1654
  %v1773 = vmul.f32 1.0, %v1772
  %v1774 = vrcp.pop %v1655
  %v1775 = vmul.f32 1.0, %v1774
  %v1776 = vrcp.pop %v1656
  %v1777 = vmul.f32 1.0, %v1776
  %v1778 = vrcp.pop %v1657
  %v1779 = vmul.f32 1.0, %v1778
  %v1780 = vrcp.pop %v1658
  %v1781 = vmul.f32 1.0, %v1780
  %v1782 = vrcp.pop %v1659
  %v1783 = vmul.f32 1.0, %v1782
  %v1784 = vrcp.pop %v1660
  %v1785 = vmul.f32 1.0, %v1784
  %v1786 = vrcp.pop %v1661
  %v1787 = vmul.f32 1.0, %v1786
  %v1788 = vrcp.pop %v1662
  %v1789 = vmul.f32 1.0, %v1788
  %v1790 = vrcp.pop %v1663
  %v1791 = vmul.f32 1.0, %v1790
  %v1792 = vmul.f32 %v805, %v1665
  %v1793 = vmul.f32 %v806, %v1667
  %v1794 = vmul.f32 %v807, %v1669
  %v1795 = vmul.f32 %v808, %v1671
  %v1796 = vmul.f32 %v809, %v1673
  %v1797 = vmul.f32 %v810, %v1675
  %v1798 = vmul.f32 %v811, %v1677
  %v1799 = vmul.f32 %v812, %v1679
  %v1800 = vmul.f32 %v813, %v1681
  %v1801 = vmul.f32 %v814, %v1683
  %v1802 = vmul.f32 %v815, %v1685
  %v1803 = vmul.f32 %v816, %v1687
  %v1804 = vmul.f32 %v817, %v1689
  %v1805 = vmul.f32 %v818, %v1691
  %v1806 = vmul.f32 %v819, %v1693
  %v1807 = vmul.f32 %v820, %v1695
  %v1808 = vmul.f32 %v821, %v1697
  %v1809 = vmul.f32 %v822, %v1699
  %v1810 = vmul.f32 %v823, %v1701
  %v1811 = vmul.f32 %v824, %v1703
  %v1812 = vmul.f32 %v825, %v1705
  %v1813 = vmul.f32 %v826, %v1707
  %v1814 = vmul.f32 %v827, %v1709
  %v1815 = vmul.f32 %v828, %v1711
  %v1816 = vmul.f32 %v829, %v1713
  %v1817 = vmul.f32 %v830, %v1715
  %v1818 = vmul.f32 %v831, %v1717
  %v1819 = vmul.f32 %v832, %v1719
  %v1820 = vmul.f32 %v833, %v1721
  %v1821 = vmul.f32 %v834, %v1723
  %v1822 = vmul.f32 %v835, %v1725
  %v1823 = vmul.f32 %v836, %v1727
  %v1824 = vmul.f32 %v837, %v1729
  %v1825 = vmul.f32 %v838, %v1731
  %v1826 = vmul.f32 %v839, %v1733
  %v1827 = vmul.f32 %v840, %v1735
  %v1828 = vmul.f32 %v841, %v1737
  %v1829 = vmul.f32 %v842, %v1739
  %v1830 = vmul.f32 %v843, %v1741
  %v1831 = vmul.f32 %v844, %v1743
  %v1832 = vmul.f32 %v845, %v1745
  %v1833 = vmul.f32 %v846, %v1747
  %v1834 = vmul.f32 %v847, %v1749
  %v1835 = vmul.f32 %v848, %v1751
  %v1836 = vmul.f32 %v849, %v1753
  %v1837 = vmul.f32 %v850, %v1755
  %v1838 = vmul.f32 %v851, %v1757
  %v1839 = vmul.f32 %v852, %v1759
  %v1840 = vmul.f32 %v853, %v1761
  %v1841 = vmul.f32 %v854, %v1763
  %v1842 = vmul.f32 %v855, %v1765
  %v1843 = vmul.f32 %v856, %v1767
  %v1844 = vmul.f32 %v857, %v1769
  %v1845 = vmul.f32 %v858, %v1771
  %v1846 = vmul.f32 %v859, %v1773
  %v1847 = vmul.f32 %v860, %v1775
  %v1848 = vmul.f32 %v861, %v1777
  %v1849 = vmul.f32 %v862, %v1779
  %v1850 = vmul.f32 %v863, %v1781
  %v1851 = vmul.f32 %v864, %v1783
  %v1852 = vmul.f32 %v865, %v1785
  %v1853 = vmul.f32 %v866, %v1787
  %v1854 = vmul.f32 %v867, %v1789
  %v1855 = vmul.f32 %v868, %v1791
  %1856 = vst [vmem:[%s4] sm:$0xff] %v1792
  %1857 = vst [vmem:[%s4 + $0x8] sm:$0xff] %v1793
  %1858 = vst [vmem:[%s4 + $0x10] sm:$0xff] %v1794
  %1859 = vst [vmem:[%s4 + $0x18] sm:$0xff] %v1795
  %1860 = vst [vmem:[%s4 + $0x20] sm:$0xff] %v1796
  %1861 = vst [vmem:[%s4 + $0x28] sm:$0xff] %v1797
  %1862 = vst [vmem:[%s4 + $0x30] sm:$0xff] %v1798
  %1863 = vst [vmem:[%s4 + $0x38] sm:$0xff] %v1799
  %1864 = vst [vmem:[%s4 + $0x40] sm:$0xff] %v1800
  %1865 = vst [vmem:[%s4 + $0x48] sm:$0xff] %v1801
  %1866 = vst [vmem:[%s4 + $0x50] sm:$0xff] %v1802
  %1867 = vst [vmem:[%s4 + $0x58] sm:$0xff] %v1803
  %1868 = vst [vmem:[%s4 + $0x60] sm:$0xff] %v1804
  %1869 = vst [vmem:[%s4 + $0x68] sm:$0xff] %v1805
  %1870 = vst [vmem:[%s4 + $0x70] sm:$0xff] %v1806
  %1871 = vst [vmem:[%s4 + $0x78] sm:$0xff] %v1807
  %1872 = vst [vmem:[%s4 + $0x80] sm:$0xff] %v1808
  %1873 = vst [vmem:[%s4 + $0x88] sm:$0xff] %v1809
  %1874 = vst [vmem:[%s4 + $0x90] sm:$0xff] %v1810
  %1875 = vst [vmem:[%s4 + $0x98] sm:$0xff] %v1811
  %1876 = vst [vmem:[%s4 + $0xa0] sm:$0xff] %v1812
  %1877 = vst [vmem:[%s4 + $0xa8] sm:$0xff] %v1813
  %1878 = vst [vmem:[%s4 + $0xb0] sm:$0xff] %v1814
  %1879 = vst [vmem:[%s4 + $0xb8] sm:$0xff] %v1815
  %1880 = vst [vmem:[%s4 + $0xc0] sm:$0xff] %v1816
  %1881 = vst [vmem:[%s4 + $0xc8] sm:$0xff] %v1817
  %1882 = vst [vmem:[%s4 + $0xd0] sm:$0xff] %v1818
  %1883 = vst [vmem:[%s4 + $0xd8] sm:$0xff] %v1819
  %1884 = vst [vmem:[%s4 + $0xe0] sm:$0xff] %v1820
  %1885 = vst [vmem:[%s4 + $0xe8] sm:$0xff] %v1821
  %1886 = vst [vmem:[%s4 + $0xf0] sm:$0xff] %v1822
  %1887 = vst [vmem:[%s4 + $0xf8] sm:$0xff] %v1823
  %1888 = vst [vmem:[%s4 + $0x100] sm:$0xff] %v1824
  %1889 = vst [vmem:[%s4 + $0x108] sm:$0xff] %v1825
  %1890 = vst [vmem:[%s4 + $0x110] sm:$0xff] %v1826
  %1891 = vst [vmem:[%s4 + $0x118] sm:$0xff] %v1827
  %1892 = vst [vmem:[%s4 + $0x120] sm:$0xff] %v1828
  %1893 = vst [vmem:[%s4 + $0x128] sm:$0xff] %v1829
  %1894 = vst [vmem:[%s4 + $0x130] sm:$0xff] %v1830
  %1895 = vst [vmem:[%s4 + $0x138] sm:$0xff] %v1831
  %1896 = vst [vmem:[%s4 + $0x140] sm:$0xff] %v1832
  %1897 = vst [vmem:[%s4 + $0x148] sm:$0xff] %v1833
  %1898 = vst [vmem:[%s4 + $0x150] sm:$0xff] %v1834
  %1899 = vst [vmem:[%s4 + $0x158] sm:$0xff] %v1835
  %1900 = vst [vmem:[%s4 + $0x160] sm:$0xff] %v1836
  %1901 = vst [vmem:[%s4 + $0x168] sm:$0xff] %v1837
  %1902 = vst [vmem:[%s4 + $0x170] sm:$0xff] %v1838
  %1903 = vst [vmem:[%s4 + $0x178] sm:$0xff] %v1839
  %1904 = vst [vmem:[%s4 + $0x180] sm:$0xff] %v1840
  %1905 = vst [vmem:[%s4 + $0x188] sm:$0xff] %v1841
  %1906 = vst [vmem:[%s4 + $0x190] sm:$0xff] %v1842
  %1907 = vst [vmem:[%s4 + $0x198] sm:$0xff] %v1843
  %1908 = vst [vmem:[%s4 + $0x1a0] sm:$0xff] %v1844
  %1909 = vst [vmem:[%s4 + $0x1a8] sm:$0xff] %v1845
  %1910 = vst [vmem:[%s4 + $0x1b0] sm:$0xff] %v1846
  %1911 = vst [vmem:[%s4 + $0x1b8] sm:$0xff] %v1847
  %1912 = vst [vmem:[%s4 + $0x1c0] sm:$0xff] %v1848
  %1913 = vst [vmem:[%s4 + $0x1c8] sm:$0xff] %v1849
  %1914 = vst [vmem:[%s4 + $0x1d0] sm:$0xff] %v1850
  %1915 = vst [vmem:[%s4 + $0x1d8] sm:$0xff] %v1851
  %1916 = vst [vmem:[%s4 + $0x1e0] sm:$0xff] %v1852
  %1917 = vst [vmem:[%s4 + $0x1e8] sm:$0xff] %v1853
  %1918 = vst [vmem:[%s4 + $0x1f0] sm:$0xff] %v1854
  %1919 = vst [vmem:[%s4 + $0x1f8] sm:$0xff] %v1855
  // Predicated region
  $region18: #{conv2d_attn.5} parent=0 // pred_check
    _
  $region19: #{conv2d_attn.5} parent=0 // pred_check_branch
    %1921 = sbr.rel (0) target = $region21
  $region20: #{conv2d_attn.5} parent=0 // pred_region
    _
  $region21: #{conv2d_attn.5} parent=0 // pred_fallthru
    _
  // Predicated region
  $region22: #{conv2d_attn.5} parent=0 // pred_check
    _
  $region23: #{conv2d_attn.5} parent=0 // pred_check_branch
    %1923 = sbr.rel (0) target = $region25
  $region24: #{conv2d_attn.5} parent=0 // pred_region
    _
  $region25: #{conv2d_attn.5} parent=0 // pred_fallthru
    _

</llo_original>
